<compile_context>
chip_gen: v7x
topology: tpu7x:2x2x1
jax: 0.10.0
libtpu: 0.0.40
codegen_flags: <defaults>
</compile_context>

<pallas_src>
import functools

import jax
import jax.numpy as jnp
from jax import lax
from jax.experimental import pallas as pl
from jax.experimental.pallas import tpu as pltpu


# ----------------------------------------------------------------------------
# Fused kernel: full MAML inner loop (support updates + query meta-grad).
#   inputs : xs [Bs, D], ys [Bs, 1] int32, xq [Bq, D], yq [Bq, 1] int32,
#            w [D, KP], b [1, KP]                (KP = classes padded to 128)
#   outputs: gw [D, KP], gb [1, KP]              (meta-grads, already /meta_bs)
#   scratch: fw_w [D, KP], fw_b [1, KP]          (VMEM-resident fast weights)
# ----------------------------------------------------------------------------
def _maml_inner_loop_kernel(xs_ref, ys_ref, xq_ref, yq_ref, w_ref, b_ref,
                            gw_ref, gb_ref, fw_w, fw_b,
                            *, num_updates, step_size, meta_batch_size,
                            num_classes):
    KP = gw_ref.shape[1]
    bs = xs_ref.shape[0]
    bq = xq_ref.shape[0]

    # Fast weights live in VMEM for the whole inner loop.
    fw_w[...] = w_ref[...]
    fw_b[...] = b_ref[...]

    xs = xs_ref[...]                                   # [Bs, D] f32
    xq = xq_ref[...]                                   # [Bq, D] f32

    # Hoisted (built once): class iota, padded-class mask, one-hot targets.
    cls = lax.broadcasted_iota(jnp.int32, (1, KP), 1)  # [1, KP]
    valid = cls < num_classes                          # [1, KP] bool
    ys_1h = (cls == ys_ref[...]).astype(jnp.float32)   # [Bs, KP]
    yq_1h = (cls == yq_ref[...]).astype(jnp.float32)   # [Bq, KP]
    neg_big = jnp.float32(-1e30)
    step = jnp.float32(step_size)

    def ce_grads(x, y1h, scale):
        # logits = x @ W + b   (MXU, f32 accumulate)
        logits = jnp.dot(x, fw_w[...],
                         preferred_element_type=jnp.float32) + fw_b[...]
        # Mask padded classes so they contribute exactly zero probability.
        logits = jnp.where(valid, logits, neg_big)
        m = jnp.max(logits, axis=-1, keepdims=True)
        e = jnp.exp(logits - m)
        s = jnp.sum(e, axis=-1, keepdims=True)
        # d(mean CE)/dlogits = (softmax - one_hot) * scale
        dlogits = (e / s - y1h) * jnp.float32(scale)    # [B, KP]
        # dW = x^T @ dlogits  (contract batch dim, MXU)
        dw = lax.dot_general(x, dlogits,
                             dimension_numbers=(((0,), (0,)), ((), ())),
                             preferred_element_type=jnp.float32)  # [D, KP]
        db = jnp.sum(dlogits, axis=0, keepdims=True)    # [1, KP]
        return dw, db

    # Support-set SGD steps on the VMEM-resident fast weights.
    def body(i, carry):
        dw, db = ce_grads(xs, ys_1h, 1.0 / bs)
        fw_w[...] = fw_w[...] - step * dw
        fw_b[...] = fw_b[...] - step * db
        return carry

    lax.fori_loop(0, num_updates, body, 0)

    # Query meta-gradient (loss / meta_batch_size folded into the scale).
    dw, db = ce_grads(xq, yq_1h, 1.0 / (bq * meta_batch_size))
    gw_ref[...] = dw
    gb_ref[...] = db


# ----------------------------------------------------------------------------
# InnerLoop.forward equivalent
# ----------------------------------------------------------------------------
def inner_loop_forward(params, in_support, in_query, target_support, target_query,
                       *, num_updates, step_size, meta_batch_size, num_classes):
    """Returns meta_grads dict {'w': [D,K], 'b': [K]} — same semantics as the
    PyTorch InnerLoop.forward (first-order, since create_graph=False)."""
    w = params["w"].astype(jnp.float32)                 # [D, K]
    b = params["b"].astype(jnp.float32).reshape(1, -1)  # [1, K]
    D, K = w.shape
    KP = 128 * pl.cdiv(K, 128)                          # lane-dense class dim

    def flatten(x):  # NCHW -> [B, C*H*W], row-major like torch .view
        return x.reshape(x.shape[0], -1).astype(jnp.float32)

    xs, xq = flatten(in_support), flatten(in_query)
    Bs, Bq = xs.shape[0], xq.shape[0]
    ys = target_support.astype(jnp.int32).reshape(Bs, 1)
    yq = target_query.astype(jnp.int32).reshape(Bq, 1)

    # Zero-pad weights/bias on the class axis (padded classes are masked
    # in-kernel, so their gradients are exactly zero).
    w_p = jnp.zeros((D, KP), jnp.float32).at[:, :K].set(w)
    b_p = jnp.zeros((1, KP), jnp.float32).at[:, :K].set(b)

    kernel = functools.partial(
        _maml_inner_loop_kernel,
        num_updates=int(num_updates), step_size=float(step_size),
        meta_batch_size=float(meta_batch_size), num_classes=int(num_classes))

    gw, gb = pl.pallas_call(
        kernel,
        grid=(1,),
        in_specs=[
            pl.BlockSpec((Bs, D), lambda i: (0, 0)),    # xs
            pl.BlockSpec((Bs, 1), lambda i: (0, 0)),    # ys (int labels)
            pl.BlockSpec((Bq, D), lambda i: (0, 0)),    # xq
            pl.BlockSpec((Bq, 1), lambda i: (0, 0)),    # yq (int labels)
            pl.BlockSpec((D, KP), lambda i: (0, 0)),    # W  (lane-dense)
            pl.BlockSpec((1, KP), lambda i: (0, 0)),    # b
        ],
        out_specs=[
            pl.BlockSpec((D, KP), lambda i: (0, 0)),    # meta dW (lane-dense)
            pl.BlockSpec((1, KP), lambda i: (0, 0)),    # meta db
        ],
        out_shape=[
            jax.ShapeDtypeStruct((D, KP), jnp.float32),
            jax.ShapeDtypeStruct((1, KP), jnp.float32),
        ],
        scratch_shapes=[
            pltpu.VMEM((D, KP), jnp.float32),           # fast W
            pltpu.VMEM((1, KP), jnp.float32),           # fast b
        ],
        compiler_params=pltpu.CompilerParams(
            dimension_semantics=("arbitrary",)),
    )(xs, ys, xq, yq, w_p, b_p)

    # Strip class padding; squeeze bias to PyTorch shape [K].
    return {"w": gw[:, :K], "b": gb[0, :K]}


# ----------------------------------------------------------------------------
# Pure-JAX reference (for validation only)
# ----------------------------------------------------------------------------
def _ref_loss(w, b, x, y1h):
    logits = x @ w + b
    logp = jax.nn.log_softmax(logits, axis=-1)
    return -jnp.mean(jnp.sum(y1h * logp, axis=-1))


def _ref_inner_loop(params, in_s, in_q, t_s, t_q, *, num_updates, step_size,
                    meta_batch_size, num_classes):
    w, b = params["w"], params["b"]
    xs = in_s.reshape(in_s.shape[0], -1).astype(jnp.float32)
    xq = in_q.reshape(in_q.shape[0], -1).astype(jnp.float32)
    ys = jax.nn.one_hot(t_s, num_classes, dtype=jnp.float32)
    yq = jax.nn.one_hot(t_q, num_classes, dtype=jnp.float32)
    fw_w, fw_b = w, b
    for _ in range(num_updates):
        gw, gb = jax.grad(_ref_loss, argnums=(0, 1))(fw_w, fw_b, xs, ys)
        fw_w = fw_w - step_size * gw
        fw_b = fw_b - step_size * gb
    gw, gb = jax.grad(_ref_loss, argnums=(0, 1))(fw_w, fw_b, xq, yq)
    return {"w": gw / meta_batch_size, "b": (gb / meta_batch_size)[0]}


# ----------------------------------------------------------------------------
if __name__ == "__main__":
    # small shapes implied by the forward: NCHW image batches + int targets
    B_SUPPORT, B_QUERY = 8, 8
    C, H, W = 4, 16, 16
    D = C * H * W                   # 1024
    NUM_CLASSES = 16
    NUM_UPDATES = 3
    STEP_SIZE = 0.1
    META_BATCH_SIZE = 4

    key = jax.random.PRNGKey(0)
    k1, k2, k3, k4, k5 = jax.random.split(key, 5)

    # deterministic parameter init (shapes of the flatten+linear network)
    params = {
        "w": (jax.random.normal(k1, (D, NUM_CLASSES), jnp.float32) * 0.02),
        "b": jnp.zeros((1, NUM_CLASSES), jnp.float32),
    }

    in_support = jax.random.normal(k2, (B_SUPPORT, C, H, W), jnp.float32)
    in_query = jax.random.normal(k3, (B_QUERY, C, H, W), jnp.float32)
    target_support = jax.random.randint(k4, (B_SUPPORT,), 0, NUM_CLASSES)
    target_query = jax.random.randint(k5, (B_QUERY,), 0, NUM_CLASSES)

    run = functools.partial(
        inner_loop_forward,
        num_updates=NUM_UPDATES, step_size=STEP_SIZE,
        meta_batch_size=META_BATCH_SIZE, num_classes=NUM_CLASSES)

    meta_grads = run(params, in_support, in_query, target_support, target_query)
    meta_grads = jax.block_until_ready(meta_grads)

    # validate against pure-JAX reference
    ref = _ref_inner_loop(
        params, in_support, in_query, target_support, target_query,
        num_updates=NUM_UPDATES, step_size=STEP_SIZE,
        meta_batch_size=META_BATCH_SIZE, num_classes=NUM_CLASSES)
    ref = jax.block_until_ready(ref)

    assert jnp.allclose(meta_grads["w"], ref["w"], atol=1e-5, rtol=1e-5)
    assert jnp.allclose(meta_grads["b"], ref["b"], atol=1e-5, rtol=1e-5)

    print("KERNEL_OK")
</pallas_src>

<mosaic_0001>
module attributes {stable_mosaic.version = 11 : i64} {
  func.func @_maml_inner_loop_kernel(%arg0: i32, %arg1: memref<8x1024xf32, #tpu.memory_space<vmem>>, %arg2: memref<8x1xi32, #tpu.memory_space<vmem>>, %arg3: memref<8x1024xf32, #tpu.memory_space<vmem>>, %arg4: memref<8x1xi32, #tpu.memory_space<vmem>>, %arg5: memref<1024x128xf32, #tpu.memory_space<vmem>>, %arg6: memref<1x128xf32, #tpu.memory_space<vmem>>, %arg7: memref<1024x128xf32, #tpu.memory_space<vmem>>, %arg8: memref<1x128xf32, #tpu.memory_space<vmem>>, %arg9: memref<1024x128xf32, #tpu.memory_space<vmem>>, %arg10: memref<1x128xf32, #tpu.memory_space<vmem>>) attributes {dimension_semantics = [#tpu.dimension_semantics<arbitrary>], iteration_bounds = array<i64: 1>, scalar_prefetch = 0 : i64, scratch_operands = 2 : i64, tpu.core_type = #tpu.core_type<tc>, window_params = [{pipeline_mode = #tpu.pipeline_mode<synchronous>, transform_indices = @transform_0, window_bounds = array<i64: 8, 1024>}, {pipeline_mode = #tpu.pipeline_mode<synchronous>, transform_indices = @transform_1, window_bounds = array<i64: 8, 1>}, {pipeline_mode = #tpu.pipeline_mode<synchronous>, transform_indices = @transform_2, window_bounds = array<i64: 8, 1024>}, {pipeline_mode = #tpu.pipeline_mode<synchronous>, transform_indices = @transform_3, window_bounds = array<i64: 8, 1>}, {pipeline_mode = #tpu.pipeline_mode<synchronous>, transform_indices = @transform_4, window_bounds = array<i64: 1024, 128>}, {pipeline_mode = #tpu.pipeline_mode<synchronous>, transform_indices = @transform_5, window_bounds = array<i64: 1, 128>}, {pipeline_mode = #tpu.pipeline_mode<synchronous>, transform_indices = @transform_6, window_bounds = array<i64: 1024, 128>}, {pipeline_mode = #tpu.pipeline_mode<synchronous>, transform_indices = @transform_7, window_bounds = array<i64: 1, 128>}]} {
    %c0 = arith.constant 0 : index
    %c0_0 = arith.constant 0 : index
    %0 = vector.load %arg5[%c0, %c0_0] : memref<1024x128xf32, #tpu.memory_space<vmem>>, vector<1024x128xf32>
    %c0_1 = arith.constant 0 : index
    %c0_2 = arith.constant 0 : index
    %1 = vector.load %arg9[%c0_1, %c0_2] : memref<1024x128xf32, #tpu.memory_space<vmem>>, vector<1024x128xf32>
    tpu.vector_store %arg9[%c0_1, %c0_2], %0 {strides = array<i32>} : memref<1024x128xf32, #tpu.memory_space<vmem>>, vector<1024x128xf32>,
    %c0_3 = arith.constant 0 : index
    %c0_4 = arith.constant 0 : index
    %2 = vector.load %arg6[%c0_3, %c0_4] : memref<1x128xf32, #tpu.memory_space<vmem>>, vector<1x128xf32>
    %c0_5 = arith.constant 0 : index
    %c0_6 = arith.constant 0 : index
    %3 = vector.load %arg10[%c0_5, %c0_6] : memref<1x128xf32, #tpu.memory_space<vmem>>, vector<1x128xf32>
    tpu.vector_store %arg10[%c0_5, %c0_6], %2 {strides = array<i32>} : memref<1x128xf32, #tpu.memory_space<vmem>>, vector<1x128xf32>,
    %c0_7 = arith.constant 0 : index
    %c0_8 = arith.constant 0 : index
    %4 = vector.load %arg1[%c0_7, %c0_8] : memref<8x1024xf32, #tpu.memory_space<vmem>>, vector<8x1024xf32>
    %c0_9 = arith.constant 0 : index
    %c0_10 = arith.constant 0 : index
    %5 = vector.load %arg3[%c0_9, %c0_10] : memref<8x1024xf32, #tpu.memory_space<vmem>>, vector<8x1024xf32>
    %6 = tpu.iota {dimensions = array<i32: 1>} : vector<1x128xi32>
    %c16_i32 = arith.constant 16 : i32
    %7 = vector.broadcast %c16_i32 : i32 to vector<1x128xi32>
    %8 = arith.cmpi slt, %6, %7 : vector<1x128xi32>
    %c0_11 = arith.constant 0 : index
    %c0_12 = arith.constant 0 : index
    %9 = vector.load %arg2[%c0_11, %c0_12] : memref<8x1xi32, #tpu.memory_space<vmem>>, vector<8x1xi32>
    %10 = vector.broadcast %6 : vector<1x128xi32> to vector<8x128xi32>
    %11 = vector.broadcast %9 : vector<8x1xi32> to vector<8x128xi32>
    %12 = arith.cmpi eq, %10, %11 : vector<8x128xi32>
    %13 = arith.extui %12 : vector<8x128xi1> to vector<8x128xi32>
    %14 = arith.sitofp %13 : vector<8x128xi32> to vector<8x128xf32>
    %c0_13 = arith.constant 0 : index
    %c0_14 = arith.constant 0 : index
    %15 = vector.load %arg4[%c0_13, %c0_14] : memref<8x1xi32, #tpu.memory_space<vmem>>, vector<8x1xi32>
    %16 = vector.broadcast %6 : vector<1x128xi32> to vector<8x128xi32>
    %17 = vector.broadcast %15 : vector<8x1xi32> to vector<8x128xi32>
    %18 = arith.cmpi eq, %16, %17 : vector<8x128xi32>
    %19 = arith.extui %18 : vector<8x128xi1> to vector<8x128xi32>
    %20 = arith.sitofp %19 : vector<8x128xi32> to vector<8x128xf32>
    %cst = arith.constant -1.000000e+30 : f32
    %cst_15 = arith.constant 1.000000e-01 : f32
    %c0_i32 = arith.constant 0 : i32
    %c3_i32 = arith.constant 3 : i32
    %21 = arith.addi %c0_i32, %c3_i32 : i32
    %c1_i32 = arith.constant 1 : i32
    scf.for %arg11 = %c0_i32 to %21 step %c1_i32  : i32 {
      %c0_31 = arith.constant 0 : index
      %c0_32 = arith.constant 0 : index
      %48 = vector.load %arg9[%c0_31, %c0_32] : memref<1024x128xf32, #tpu.memory_space<vmem>>, vector<1024x128xf32>
      %cst_33 = arith.constant dense<0.000000e+00> : vector<8x128xf32>
      %49 = tpu.matmul %4, %48, %cst_33 {dimension_numbers = #tpu.dot_dimension_numbers<[1], [0], [0], [1], [0, 0, 1, 1], [], []>} : vector<8x1024xf32>, vector<1024x128xf32>, vector<8x128xf32> -> vector<8x128xf32>
      %c0_34 = arith.constant 0 : index
      %c0_35 = arith.constant 0 : index
      %50 = vector.load %arg10[%c0_34, %c0_35] : memref<1x128xf32, #tpu.memory_space<vmem>>, vector<1x128xf32>
      %51 = vector.broadcast %50 : vector<1x128xf32> to vector<8x128xf32>
      %52 = arith.addf %49, %51 : vector<8x128xf32>
      %53 = vector.shape_cast %8 : vector<1x128xi1> to vector<1x128xi1>
      %54 = vector.broadcast %53 : vector<1x128xi1> to vector<8x128xi1>
      %55 = vector.broadcast %cst : f32 to vector<8x128xf32>
      %56 = arith.select %54, %52, %55 : vector<8x128xi1>, vector<8x128xf32>
      %cst_36 = arith.constant dense<0xFF800000> : vector<8xf32>
      %57 = vector.multi_reduction <maximumf>, %56, %cst_36 [1] : vector<8x128xf32> to vector<8xf32>
      %58 = vector.shape_cast %57 : vector<8xf32> to vector<8x1xf32>
      %59 = vector.broadcast %58 : vector<8x1xf32> to vector<8x128xf32>
      %60 = arith.subf %56, %59 : vector<8x128xf32>
      %61 = math.exp %60 : vector<8x128xf32>
      %cst_37 = arith.constant dense<0.000000e+00> : vector<8xf32>
      %62 = vector.multi_reduction <add>, %61, %cst_37 [1] : vector<8x128xf32> to vector<8xf32>
      %63 = vector.shape_cast %62 : vector<8xf32> to vector<8x1xf32>
      %64 = vector.broadcast %63 : vector<8x1xf32> to vector<8x128xf32>
      %65 = arith.divf %61, %64 : vector<8x128xf32>
      %66 = arith.subf %65, %14 : vector<8x128xf32>
      %cst_38 = arith.constant 1.250000e-01 : f32
      %67 = vector.broadcast %cst_38 : f32 to vector<8x128xf32>
      %68 = arith.mulf %66, %67 : vector<8x128xf32>
      %cst_39 = arith.constant dense<0.000000e+00> : vector<1024x128xf32>
      %69 = tpu.matmul %4, %68, %cst_39 {dimension_numbers = #tpu.dot_dimension_numbers<[0], [0], [1], [1], [0, 1, 1, 1], [], []>} : vector<8x1024xf32>, vector<8x128xf32>, vector<1024x128xf32> -> vector<1024x128xf32>
      %cst_40 = arith.constant dense<0.000000e+00> : vector<128xf32>
      %70 = vector.multi_reduction <add>, %68, %cst_40 [0] : vector<8x128xf32> to vector<128xf32>
      %71 = vector.shape_cast %70 : vector<128xf32> to vector<1x128xf32>
      %c0_41 = arith.constant 0 : index
      %c0_42 = arith.constant 0 : index
      %72 = vector.load %arg9[%c0_41, %c0_42] : memref<1024x128xf32, #tpu.memory_space<vmem>>, vector<1024x128xf32>
      %73 = vector.broadcast %cst_15 : f32 to vector<1024x128xf32>
      %74 = arith.mulf %73, %69 : vector<1024x128xf32>
      %75 = arith.subf %72, %74 : vector<1024x128xf32>
      %c0_43 = arith.constant 0 : index
      %c0_44 = arith.constant 0 : index
      %76 = vector.load %arg9[%c0_43, %c0_44] : memref<1024x128xf32, #tpu.memory_space<vmem>>, vector<1024x128xf32>
      tpu.vector_store %arg9[%c0_43, %c0_44], %75 {strides = array<i32>} : memref<1024x128xf32, #tpu.memory_space<vmem>>, vector<1024x128xf32>,
      %c0_45 = arith.constant 0 : index
      %c0_46 = arith.constant 0 : index
      %77 = vector.load %arg10[%c0_45, %c0_46] : memref<1x128xf32, #tpu.memory_space<vmem>>, vector<1x128xf32>
      %78 = vector.broadcast %cst_15 : f32 to vector<1x128xf32>
      %79 = arith.mulf %78, %71 : vector<1x128xf32>
      %80 = arith.subf %77, %79 : vector<1x128xf32>
      %c0_47 = arith.constant 0 : index
      %c0_48 = arith.constant 0 : index
      %81 = vector.load %arg10[%c0_47, %c0_48] : memref<1x128xf32, #tpu.memory_space<vmem>>, vector<1x128xf32>
      tpu.vector_store %arg10[%c0_47, %c0_48], %80 {strides = array<i32>} : memref<1x128xf32, #tpu.memory_space<vmem>>, vector<1x128xf32>,
    }
    %c0_16 = arith.constant 0 : index
    %c0_17 = arith.constant 0 : index
    %22 = vector.load %arg9[%c0_16, %c0_17] : memref<1024x128xf32, #tpu.memory_space<vmem>>, vector<1024x128xf32>
    %cst_18 = arith.constant dense<0.000000e+00> : vector<8x128xf32>
    %23 = tpu.matmul %5, %22, %cst_18 {dimension_numbers = #tpu.dot_dimension_numbers<[1], [0], [0], [1], [0, 0, 1, 1], [], []>} : vector<8x1024xf32>, vector<1024x128xf32>, vector<8x128xf32> -> vector<8x128xf32>
    %c0_19 = arith.constant 0 : index
    %c0_20 = arith.constant 0 : index
    %24 = vector.load %arg10[%c0_19, %c0_20] : memref<1x128xf32, #tpu.memory_space<vmem>>, vector<1x128xf32>
    %25 = vector.broadcast %24 : vector<1x128xf32> to vector<8x128xf32>
    %26 = arith.addf %23, %25 : vector<8x128xf32>
    %cst_21 = arith.constant -1.000000e+30 : f32
    %27 = vector.shape_cast %8 : vector<1x128xi1> to vector<1x128xi1>
    %28 = vector.broadcast %27 : vector<1x128xi1> to vector<8x128xi1>
    %29 = vector.broadcast %cst_21 : f32 to vector<8x128xf32>
    %30 = arith.select %28, %26, %29 : vector<8x128xi1>, vector<8x128xf32>
    %cst_22 = arith.constant dense<0xFF800000> : vector<8xf32>
    %31 = vector.multi_reduction <maximumf>, %30, %cst_22 [1] : vector<8x128xf32> to vector<8xf32>
    %32 = vector.shape_cast %31 : vector<8xf32> to vector<8x1xf32>
    %33 = vector.broadcast %32 : vector<8x1xf32> to vector<8x128xf32>
    %34 = arith.subf %30, %33 : vector<8x128xf32>
    %35 = math.exp %34 : vector<8x128xf32>
    %cst_23 = arith.constant dense<0.000000e+00> : vector<8xf32>
    %36 = vector.multi_reduction <add>, %35, %cst_23 [1] : vector<8x128xf32> to vector<8xf32>
    %37 = vector.shape_cast %36 : vector<8xf32> to vector<8x1xf32>
    %38 = vector.broadcast %37 : vector<8x1xf32> to vector<8x128xf32>
    %39 = arith.divf %35, %38 : vector<8x128xf32>
    %40 = arith.subf %39, %20 : vector<8x128xf32>
    %cst_24 = arith.constant 3.125000e-02 : f32
    %41 = vector.broadcast %cst_24 : f32 to vector<8x128xf32>
    %42 = arith.mulf %40, %41 : vector<8x128xf32>
    %cst_25 = arith.constant dense<0.000000e+00> : vector<1024x128xf32>
    %43 = tpu.matmul %5, %42, %cst_25 {dimension_numbers = #tpu.dot_dimension_numbers<[0], [0], [1], [1], [0, 1, 1, 1], [], []>} : vector<8x1024xf32>, vector<8x128xf32>, vector<1024x128xf32> -> vector<1024x128xf32>
    %cst_26 = arith.constant dense<0.000000e+00> : vector<128xf32>
    %44 = vector.multi_reduction <add>, %42, %cst_26 [0] : vector<8x128xf32> to vector<128xf32>
    %45 = vector.shape_cast %44 : vector<128xf32> to vector<1x128xf32>
    %c0_27 = arith.constant 0 : index
    %c0_28 = arith.constant 0 : index
    %46 = vector.load %arg7[%c0_27, %c0_28] : memref<1024x128xf32, #tpu.memory_space<vmem>>, vector<1024x128xf32>
    tpu.vector_store %arg7[%c0_27, %c0_28], %43 {strides = array<i32>} : memref<1024x128xf32, #tpu.memory_space<vmem>>, vector<1024x128xf32>,
    %c0_29 = arith.constant 0 : index
    %c0_30 = arith.constant 0 : index
    %47 = vector.load %arg8[%c0_29, %c0_30] : memref<1x128xf32, #tpu.memory_space<vmem>>, vector<1x128xf32>
    tpu.vector_store %arg8[%c0_29, %c0_30], %45 {strides = array<i32>} : memref<1x128xf32, #tpu.memory_space<vmem>>, vector<1x128xf32>,
    return
  }
  func.func @transform_0(%arg0: i32) -> (i32, i32) {
    %c0_i32 = arith.constant 0 : i32
    %c0_i32_0 = arith.constant 0 : i32
    %c0_i32_1 = arith.constant 0 : i32
    return %c0_i32, %c0_i32_0 : i32, i32
  }
  func.func @transform_1(%arg0: i32) -> (i32, i32) {
    %c0_i32 = arith.constant 0 : i32
    %c0_i32_0 = arith.constant 0 : i32
    %c0_i32_1 = arith.constant 0 : i32
    return %c0_i32, %c0_i32_0 : i32, i32
  }
  func.func @transform_2(%arg0: i32) -> (i32, i32) {
    %c0_i32 = arith.constant 0 : i32
    %c0_i32_0 = arith.constant 0 : i32
    %c0_i32_1 = arith.constant 0 : i32
    return %c0_i32, %c0_i32_0 : i32, i32
  }
  func.func @transform_3(%arg0: i32) -> (i32, i32) {
    %c0_i32 = arith.constant 0 : i32
    %c0_i32_0 = arith.constant 0 : i32
    %c0_i32_1 = arith.constant 0 : i32
    return %c0_i32, %c0_i32_0 : i32, i32
  }
  func.func @transform_4(%arg0: i32) -> (i32, i32) {
    %c0_i32 = arith.constant 0 : i32
    %c0_i32_0 = arith.constant 0 : i32
    %c0_i32_1 = arith.constant 0 : i32
    return %c0_i32, %c0_i32_0 : i32, i32
  }
  func.func @transform_5(%arg0: i32) -> (i32, i32) {
    %c0_i32 = arith.constant 0 : i32
    %c0_i32_0 = arith.constant 0 : i32
    %c0_i32_1 = arith.constant 0 : i32
    return %c0_i32, %c0_i32_0 : i32, i32
  }
  func.func @transform_6(%arg0: i32) -> (i32, i32) {
    %c0_i32 = arith.constant 0 : i32
    %c0_i32_0 = arith.constant 0 : i32
    %c0_i32_1 = arith.constant 0 : i32
    return %c0_i32, %c0_i32_0 : i32, i32
  }
  func.func @transform_7(%arg0: i32) -> (i32, i32) {
    %c0_i32 = arith.constant 0 : i32
    %c0_i32_0 = arith.constant 0 : i32
    %c0_i32_1 = arith.constant 0 : i32
    return %c0_i32, %c0_i32_0 : i32, i32
  }
}

</mosaic_0001>

<llo_original>
// kernel: tpu_custom_call.1
$region0: #{tpu_custom_call.1}
  #allocation0 [shape = 'u32[]', space=smem, size = 0x4, offset = 0x4, fixed_abs, tag = 'smem constant byte address 0x4 - core index']
  #allocation1 [shape = 'u32[144,128]{1,0:T(1,128)}', space=vmem, size = 0x12000, scoped, tag = 'internal scratch']
  #allocation2 [shape = 'f32[1024,128]{1,0:T(8,128)}', space=vmem, size = 0x80000, scoped, tag = 'scratch operand']
  #allocation3 [shape = 'f32[1,128]{1,0:T(1,128)}', space=vmem, size = 0x200, scoped, tag = 'scratch operand']
  %s0 = inlined_call_operand.hbm [shape: f32[8,1024], index: 0, kind: input, shape index: {}]
  %s1 = inlined_call_operand.vmem [shape: s32[8,1], index: 1, kind: input, shape index: {}]
  %s2 = inlined_call_operand.hbm [shape: f32[8,1024], index: 2, kind: input, shape index: {}]
  %s3 = inlined_call_operand.vmem [shape: s32[8,1], index: 3, kind: input, shape index: {}]
  %s4 = inlined_call_operand.hbm [shape: f32[1024,128], index: 4, kind: input, shape index: {}]
  %s5 = inlined_call_operand.vmem [shape: f32[1,128], index: 5, kind: input, shape index: {}]
  %s6 = inlined_call_operand.hbm [shape: f32[1024,128], index: 6, kind: output, shape index: {0}]
  %s7 = inlined_call_operand.hbm [shape: f32[1,128], index: 7, kind: output, shape index: {1}]
  %8 = xla_tuple %s6, %s7
  %s9 = sld [smem:[#allocation0]]
  $region61: #{tpu_custom_call.1} parent=0
    _
  %s11 = ssub.s32 1, %s9
  %s12 = scalar_select 0, %s11, %s9
  $region1: #{tpu_custom_call.1} parent=0
    #allocation4 [shape = 'u8[32768]{0}', space=vmem, size = 0x8000, scoped, tag = 'input window, operand 0, single buffered']
    #allocation5 [shape = 's32[1]{0}', space=sflag, size = 0x4, scoped, tag = 'scoped memory for tpu_custom_call.1']
    #allocation6 [shape = 's32[1]{0}', space=sflag, size = 0x4, scoped, tag = 'scoped memory for tpu_custom_call.1']
    #allocation7 [shape = 'u8[32768]{0}', space=vmem, size = 0x8000, scoped, tag = 'input window, operand 2, single buffered']
    #allocation8 [shape = 's32[1]{0}', space=sflag, size = 0x4, scoped, tag = 'scoped memory for tpu_custom_call.1']
    #allocation9 [shape = 'u8[524288]{0}', space=vmem, size = 0x80000, scoped, tag = 'input window, operand 4, single buffered']
    #allocation10 [shape = 'u8[524288]{0}', space=vmem, size = 0x80000, scoped, tag = 'output window, operand 0, single buffered']
    #allocation11 [shape = 'u8[512]{0}', space=vmem, size = 0x400, scoped, tag = 'output window, operand 1, single buffered']
    #allocation12 [shape = 's32[1]{0}', space=sflag, size = 0x4, scoped, tag = 'scoped memory for tpu_custom_call.1']
    %13 = vsyncpa [#allocation5], 0
    %14 = vsyncpa [#allocation8], 0
    %15 = vsyncpa [#allocation6], 0
    %16 = vsyncpa [#allocation12], 0
    // Predicated region
    $region2: #{tpu_custom_call.1} parent=1 // pred_check
      _
    $region3: #{tpu_custom_call.1} parent=1 // pred_check_branch
      %18 = sbr.rel (0) target = $region5
    $region4: #{tpu_custom_call.1} parent=1 // pred_region
      %s20 = ssub.s32 1024, 1024
      %21 = vsyncadd [#allocation5], %s20
      %s23 = sshll.u32 [#allocation4], 4
      %s24 = int_to_ptr.vmem [resolvable:$true] %s23
      %26 = dma.hbm_to_vmem [thread:$0]  %s0, 1024, %s24, [#allocation5]
    $region5: #{tpu_custom_call.1} parent=1 // pred_fallthru
      _
    // Predicated region
    $region6: #{tpu_custom_call.1} parent=1 // pred_check
      _
    $region7: #{tpu_custom_call.1} parent=1 // pred_check_branch
      %28 = sbr.rel (0) target = $region9
    $region8: #{tpu_custom_call.1} parent=1 // pred_region
      _
    $region9: #{tpu_custom_call.1} parent=1 // pred_fallthru
      _
    // Predicated region
    $region10: #{tpu_custom_call.1} parent=1 // pred_check
      _
    $region11: #{tpu_custom_call.1} parent=1 // pred_check_branch
      %30 = sbr.rel (0) target = $region13
    $region12: #{tpu_custom_call.1} parent=1 // pred_region
      %s32 = ssub.s32 1024, 1024
      %33 = vsyncadd [#allocation8], %s32
      %s35 = sshll.u32 [#allocation7], 4
      %s36 = int_to_ptr.vmem [resolvable:$true] %s35
      %38 = dma.hbm_to_vmem [thread:$0]  %s2, 1024, %s36, [#allocation8]
    $region13: #{tpu_custom_call.1} parent=1 // pred_fallthru
      _
    // Predicated region
    $region14: #{tpu_custom_call.1} parent=1 // pred_check
      _
    $region15: #{tpu_custom_call.1} parent=1 // pred_check_branch
      %40 = sbr.rel (0) target = $region17
    $region16: #{tpu_custom_call.1} parent=1 // pred_region
      _
    $region17: #{tpu_custom_call.1} parent=1 // pred_fallthru
      _
    // Predicated region
    $region18: #{tpu_custom_call.1} parent=1 // pred_check
      _
    $region19: #{tpu_custom_call.1} parent=1 // pred_check_branch
      %42 = sbr.rel (0) target = $region21
    $region20: #{tpu_custom_call.1} parent=1 // pred_region
      %s44 = ssub.s32 16384, 16384
      %45 = vsyncadd [#allocation8], %s44
      %s46 = sshll.u32 [#allocation9], 4
      %s47 = int_to_ptr.vmem [resolvable:$true] %s46
      %52 = dma.hbm_to_vmem [thread:$0]  %s4, 16384, %s47, [#allocation8], 128, 128, 8
    $region21: #{tpu_custom_call.1} parent=1 // pred_fallthru
      _
    // Predicated region
    $region22: #{tpu_custom_call.1} parent=1 // pred_check
      _
    $region23: #{tpu_custom_call.1} parent=1 // pred_check_branch
      %54 = sbr.rel (0) target = $region25
    $region24: #{tpu_custom_call.1} parent=1 // pred_region
      _
    $region25: #{tpu_custom_call.1} parent=1 // pred_fallthru
      _
    // Predicated region
    $region26: #{tpu_custom_call.1} parent=1 // pred_check
      _
    $region27: #{tpu_custom_call.1} parent=1 // pred_check_branch
      %56 = sbr.rel (0) target = $region29
    $region28: #{tpu_custom_call.1} parent=1 // pred_region
      %57 = dma.done [#allocation5], 1024
    $region29: #{tpu_custom_call.1} parent=1 // pred_fallthru
      _
    // Predicated region
    $region30: #{tpu_custom_call.1} parent=1 // pred_check
      _
    $region31: #{tpu_custom_call.1} parent=1 // pred_check_branch
      %59 = sbr.rel (0) target = $region33
    $region32: #{tpu_custom_call.1} parent=1 // pred_region
      %60 = dma.done [#allocation8], 1024
    $region33: #{tpu_custom_call.1} parent=1 // pred_fallthru
      _
    // Predicated region
    $region34: #{tpu_custom_call.1} parent=1 // pred_check
      _
    $region35: #{tpu_custom_call.1} parent=1 // pred_check_branch
      %62 = sbr.rel (0) target = $region37
    $region36: #{tpu_custom_call.1} parent=1 // pred_region
      %63 = dma.done [#allocation8], 16384
    $region37: #{tpu_custom_call.1} parent=1 // pred_fallthru
      _
    %v64 = vld [vmem:[#allocation9] sm:$0xff]
    %v65 = vld [vmem:[#allocation9 + $0x8] sm:$0xff]
    %v66 = vld [vmem:[#allocation9 + $0x10] sm:$0xff]
    %v67 = vld [vmem:[#allocation9 + $0x18] sm:$0xff]
    %v68 = vld [vmem:[#allocation9 + $0x20] sm:$0xff]
    %v69 = vld [vmem:[#allocation9 + $0x28] sm:$0xff]
    %v70 = vld [vmem:[#allocation9 + $0x30] sm:$0xff]
    %v71 = vld [vmem:[#allocation9 + $0x38] sm:$0xff]
    %v72 = vld [vmem:[#allocation9 + $0x40] sm:$0xff]
    %v73 = vld [vmem:[#allocation9 + $0x48] sm:$0xff]
    %v74 = vld [vmem:[#allocation9 + $0x50] sm:$0xff]
    %v75 = vld [vmem:[#allocation9 + $0x58] sm:$0xff]
    %v76 = vld [vmem:[#allocation9 + $0x60] sm:$0xff]
    %v77 = vld [vmem:[#allocation9 + $0x68] sm:$0xff]
    %v78 = vld [vmem:[#allocation9 + $0x70] sm:$0xff]
    %v79 = vld [vmem:[#allocation9 + $0x78] sm:$0xff]
    %v80 = vld [vmem:[#allocation9 + $0x80] sm:$0xff]
    %v81 = vld [vmem:[#allocation9 + $0x88] sm:$0xff]
    %v82 = vld [vmem:[#allocation9 + $0x90] sm:$0xff]
    %v83 = vld [vmem:[#allocation9 + $0x98] sm:$0xff]
    %v84 = vld [vmem:[#allocation9 + $0xa0] sm:$0xff]
    %v85 = vld [vmem:[#allocation9 + $0xa8] sm:$0xff]
    %v86 = vld [vmem:[#allocation9 + $0xb0] sm:$0xff]
    %v87 = vld [vmem:[#allocation9 + $0xb8] sm:$0xff]
    %v88 = vld [vmem:[#allocation9 + $0xc0] sm:$0xff]
    %v89 = vld [vmem:[#allocation9 + $0xc8] sm:$0xff]
    %v90 = vld [vmem:[#allocation9 + $0xd0] sm:$0xff]
    %v91 = vld [vmem:[#allocation9 + $0xd8] sm:$0xff]
    %v92 = vld [vmem:[#allocation9 + $0xe0] sm:$0xff]
    %v93 = vld [vmem:[#allocation9 + $0xe8] sm:$0xff]
    %v94 = vld [vmem:[#allocation9 + $0xf0] sm:$0xff]
    %v95 = vld [vmem:[#allocation9 + $0xf8] sm:$0xff]
    %v96 = vld [vmem:[#allocation9 + $0x100] sm:$0xff]
    %v97 = vld [vmem:[#allocation9 + $0x108] sm:$0xff]
    %v98 = vld [vmem:[#allocation9 + $0x110] sm:$0xff]
    %v99 = vld [vmem:[#allocation9 + $0x118] sm:$0xff]
    %v100 = vld [vmem:[#allocation9 + $0x120] sm:$0xff]
    %v101 = vld [vmem:[#allocation9 + $0x128] sm:$0xff]
    %v102 = vld [vmem:[#allocation9 + $0x130] sm:$0xff]
    %v103 = vld [vmem:[#allocation9 + $0x138] sm:$0xff]
    %v104 = vld [vmem:[#allocation9 + $0x140] sm:$0xff]
    %v105 = vld [vmem:[#allocation9 + $0x148] sm:$0xff]
    %v106 = vld [vmem:[#allocation9 + $0x150] sm:$0xff]
    %v107 = vld [vmem:[#allocation9 + $0x158] sm:$0xff]
    %v108 = vld [vmem:[#allocation9 + $0x160] sm:$0xff]
    %v109 = vld [vmem:[#allocation9 + $0x168] sm:$0xff]
    %v110 = vld [vmem:[#allocation9 + $0x170] sm:$0xff]
    %v111 = vld [vmem:[#allocation9 + $0x178] sm:$0xff]
    %v112 = vld [vmem:[#allocation9 + $0x180] sm:$0xff]
    %v113 = vld [vmem:[#allocation9 + $0x188] sm:$0xff]
    %v114 = vld [vmem:[#allocation9 + $0x190] sm:$0xff]
    %v115 = vld [vmem:[#allocation9 + $0x198] sm:$0xff]
    %v116 = vld [vmem:[#allocation9 + $0x1a0] sm:$0xff]
    %v117 = vld [vmem:[#allocation9 + $0x1a8] sm:$0xff]
    %v118 = vld [vmem:[#allocation9 + $0x1b0] sm:$0xff]
    %v119 = vld [vmem:[#allocation9 + $0x1b8] sm:$0xff]
    %v120 = vld [vmem:[#allocation9 + $0x1c0] sm:$0xff]
    %v121 = vld [vmem:[#allocation9 + $0x1c8] sm:$0xff]
    %v122 = vld [vmem:[#allocation9 + $0x1d0] sm:$0xff]
    %v123 = vld [vmem:[#allocation9 + $0x1d8] sm:$0xff]
    %v124 = vld [vmem:[#allocation9 + $0x1e0] sm:$0xff]
    %v125 = vld [vmem:[#allocation9 + $0x1e8] sm:$0xff]
    %v126 = vld [vmem:[#allocation9 + $0x1f0] sm:$0xff]
    %v127 = vld [vmem:[#allocation9 + $0x1f8] sm:$0xff]
    %v128 = vld [vmem:[#allocation9 + $0x200] sm:$0xff]
    %v129 = vld [vmem:[#allocation9 + $0x208] sm:$0xff]
    %v130 = vld [vmem:[#allocation9 + $0x210] sm:$0xff]
    %v131 = vld [vmem:[#allocation9 + $0x218] sm:$0xff]
    %v132 = vld [vmem:[#allocation9 + $0x220] sm:$0xff]
    %v133 = vld [vmem:[#allocation9 + $0x228] sm:$0xff]
    %v134 = vld [vmem:[#allocation9 + $0x230] sm:$0xff]
    %v135 = vld [vmem:[#allocation9 + $0x238] sm:$0xff]
    %v136 = vld [vmem:[#allocation9 + $0x240] sm:$0xff]
    %v137 = vld [vmem:[#allocation9 + $0x248] sm:$0xff]
    %v138 = vld [vmem:[#allocation9 + $0x250] sm:$0xff]
    %v139 = vld [vmem:[#allocation9 + $0x258] sm:$0xff]
    %v140 = vld [vmem:[#allocation9 + $0x260] sm:$0xff]
    %v141 = vld [vmem:[#allocation9 + $0x268] sm:$0xff]
    %v142 = vld [vmem:[#allocation9 + $0x270] sm:$0xff]
    %v143 = vld [vmem:[#allocation9 + $0x278] sm:$0xff]
    %v144 = vld [vmem:[#allocation9 + $0x280] sm:$0xff]
    %v145 = vld [vmem:[#allocation9 + $0x288] sm:$0xff]
    %v146 = vld [vmem:[#allocation9 + $0x290] sm:$0xff]
    %v147 = vld [vmem:[#allocation9 + $0x298] sm:$0xff]
    %v148 = vld [vmem:[#allocation9 + $0x2a0] sm:$0xff]
    %v149 = vld [vmem:[#allocation9 + $0x2a8] sm:$0xff]
    %v150 = vld [vmem:[#allocation9 + $0x2b0] sm:$0xff]
    %v151 = vld [vmem:[#allocation9 + $0x2b8] sm:$0xff]
    %v152 = vld [vmem:[#allocation9 + $0x2c0] sm:$0xff]
    %v153 = vld [vmem:[#allocation9 + $0x2c8] sm:$0xff]
    %v154 = vld [vmem:[#allocation9 + $0x2d0] sm:$0xff]
    %v155 = vld [vmem:[#allocation9 + $0x2d8] sm:$0xff]
    %v156 = vld [vmem:[#allocation9 + $0x2e0] sm:$0xff]
    %v157 = vld [vmem:[#allocation9 + $0x2e8] sm:$0xff]
    %v158 = vld [vmem:[#allocation9 + $0x2f0] sm:$0xff]
    %v159 = vld [vmem:[#allocation9 + $0x2f8] sm:$0xff]
    %v160 = vld [vmem:[#allocation9 + $0x300] sm:$0xff]
    %v161 = vld [vmem:[#allocation9 + $0x308] sm:$0xff]
    %v162 = vld [vmem:[#allocation9 + $0x310] sm:$0xff]
    %v163 = vld [vmem:[#allocation9 + $0x318] sm:$0xff]
    %v164 = vld [vmem:[#allocation9 + $0x320] sm:$0xff]
    %v165 = vld [vmem:[#allocation9 + $0x328] sm:$0xff]
    %v166 = vld [vmem:[#allocation9 + $0x330] sm:$0xff]
    %v167 = vld [vmem:[#allocation9 + $0x338] sm:$0xff]
    %v168 = vld [vmem:[#allocation9 + $0x340] sm:$0xff]
    %v169 = vld [vmem:[#allocation9 + $0x348] sm:$0xff]
    %v170 = vld [vmem:[#allocation9 + $0x350] sm:$0xff]
    %v171 = vld [vmem:[#allocation9 + $0x358] sm:$0xff]
    %v172 = vld [vmem:[#allocation9 + $0x360] sm:$0xff]
    %v173 = vld [vmem:[#allocation9 + $0x368] sm:$0xff]
    %v174 = vld [vmem:[#allocation9 + $0x370] sm:$0xff]
    %v175 = vld [vmem:[#allocation9 + $0x378] sm:$0xff]
    %v176 = vld [vmem:[#allocation9 + $0x380] sm:$0xff]
    %v177 = vld [vmem:[#allocation9 + $0x388] sm:$0xff]
    %v178 = vld [vmem:[#allocation9 + $0x390] sm:$0xff]
    %v179 = vld [vmem:[#allocation9 + $0x398] sm:$0xff]
    %v180 = vld [vmem:[#allocation9 + $0x3a0] sm:$0xff]
    %v181 = vld [vmem:[#allocation9 + $0x3a8] sm:$0xff]
    %v182 = vld [vmem:[#allocation9 + $0x3b0] sm:$0xff]
    %v183 = vld [vmem:[#allocation9 + $0x3b8] sm:$0xff]
    %v184 = vld [vmem:[#allocation9 + $0x3c0] sm:$0xff]
    %v185 = vld [vmem:[#allocation9 + $0x3c8] sm:$0xff]
    %v186 = vld [vmem:[#allocation9 + $0x3d0] sm:$0xff]
    %v187 = vld [vmem:[#allocation9 + $0x3d8] sm:$0xff]
    %v188 = vld [vmem:[#allocation9 + $0x3e0] sm:$0xff]
    %v189 = vld [vmem:[#allocation9 + $0x3e8] sm:$0xff]
    %v190 = vld [vmem:[#allocation9 + $0x3f0] sm:$0xff]
    %v191 = vld [vmem:[#allocation9 + $0x3f8] sm:$0xff]
    %192 = vst [vmem:[#allocation2] sm:$0xff] %v64
    %193 = vst [vmem:[#allocation2 + $0x8] sm:$0xff] %v65
    %194 = vst [vmem:[#allocation2 + $0x10] sm:$0xff] %v66
    %195 = vst [vmem:[#allocation2 + $0x18] sm:$0xff] %v67
    %196 = vst [vmem:[#allocation2 + $0x20] sm:$0xff] %v68
    %197 = vst [vmem:[#allocation2 + $0x28] sm:$0xff] %v69
    %198 = vst [vmem:[#allocation2 + $0x30] sm:$0xff] %v70
    %199 = vst [vmem:[#allocation2 + $0x38] sm:$0xff] %v71
    %200 = vst [vmem:[#allocation2 + $0x40] sm:$0xff] %v72
    %201 = vst [vmem:[#allocation2 + $0x48] sm:$0xff] %v73
    %202 = vst [vmem:[#allocation2 + $0x50] sm:$0xff] %v74
    %203 = vst [vmem:[#allocation2 + $0x58] sm:$0xff] %v75
    %204 = vst [vmem:[#allocation2 + $0x60] sm:$0xff] %v76
    %205 = vst [vmem:[#allocation2 + $0x68] sm:$0xff] %v77
    %206 = vst [vmem:[#allocation2 + $0x70] sm:$0xff] %v78
    %207 = vst [vmem:[#allocation2 + $0x78] sm:$0xff] %v79
    %208 = vst [vmem:[#allocation2 + $0x80] sm:$0xff] %v80
    %209 = vst [vmem:[#allocation2 + $0x88] sm:$0xff] %v81
    %210 = vst [vmem:[#allocation2 + $0x90] sm:$0xff] %v82
    %211 = vst [vmem:[#allocation2 + $0x98] sm:$0xff] %v83
    %212 = vst [vmem:[#allocation2 + $0xa0] sm:$0xff] %v84
    %213 = vst [vmem:[#allocation2 + $0xa8] sm:$0xff] %v85
    %214 = vst [vmem:[#allocation2 + $0xb0] sm:$0xff] %v86
    %215 = vst [vmem:[#allocation2 + $0xb8] sm:$0xff] %v87
    %216 = vst [vmem:[#allocation2 + $0xc0] sm:$0xff] %v88
    %217 = vst [vmem:[#allocation2 + $0xc8] sm:$0xff] %v89
    %218 = vst [vmem:[#allocation2 + $0xd0] sm:$0xff] %v90
    %219 = vst [vmem:[#allocation2 + $0xd8] sm:$0xff] %v91
    %220 = vst [vmem:[#allocation2 + $0xe0] sm:$0xff] %v92
    %221 = vst [vmem:[#allocation2 + $0xe8] sm:$0xff] %v93
    %222 = vst [vmem:[#allocation2 + $0xf0] sm:$0xff] %v94
    %223 = vst [vmem:[#allocation2 + $0xf8] sm:$0xff] %v95
    %224 = vst [vmem:[#allocation2 + $0x100] sm:$0xff] %v96
    %225 = vst [vmem:[#allocation2 + $0x108] sm:$0xff] %v97
    %226 = vst [vmem:[#allocation2 + $0x110] sm:$0xff] %v98
    %227 = vst [vmem:[#allocation2 + $0x118] sm:$0xff] %v99
    %228 = vst [vmem:[#allocation2 + $0x120] sm:$0xff] %v100
    %229 = vst [vmem:[#allocation2 + $0x128] sm:$0xff] %v101
    %230 = vst [vmem:[#allocation2 + $0x130] sm:$0xff] %v102
    %231 = vst [vmem:[#allocation2 + $0x138] sm:$0xff] %v103
    %232 = vst [vmem:[#allocation2 + $0x140] sm:$0xff] %v104
    %233 = vst [vmem:[#allocation2 + $0x148] sm:$0xff] %v105
    %234 = vst [vmem:[#allocation2 + $0x150] sm:$0xff] %v106
    %235 = vst [vmem:[#allocation2 + $0x158] sm:$0xff] %v107
    %236 = vst [vmem:[#allocation2 + $0x160] sm:$0xff] %v108
    %237 = vst [vmem:[#allocation2 + $0x168] sm:$0xff] %v109
    %238 = vst [vmem:[#allocation2 + $0x170] sm:$0xff] %v110
    %239 = vst [vmem:[#allocation2 + $0x178] sm:$0xff] %v111
    %240 = vst [vmem:[#allocation2 + $0x180] sm:$0xff] %v112
    %241 = vst [vmem:[#allocation2 + $0x188] sm:$0xff] %v113
    %242 = vst [vmem:[#allocation2 + $0x190] sm:$0xff] %v114
    %243 = vst [vmem:[#allocation2 + $0x198] sm:$0xff] %v115
    %244 = vst [vmem:[#allocation2 + $0x1a0] sm:$0xff] %v116
    %245 = vst [vmem:[#allocation2 + $0x1a8] sm:$0xff] %v117
    %246 = vst [vmem:[#allocation2 + $0x1b0] sm:$0xff] %v118
    %247 = vst [vmem:[#allocation2 + $0x1b8] sm:$0xff] %v119
    %248 = vst [vmem:[#allocation2 + $0x1c0] sm:$0xff] %v120
    %249 = vst [vmem:[#allocation2 + $0x1c8] sm:$0xff] %v121
    %250 = vst [vmem:[#allocation2 + $0x1d0] sm:$0xff] %v122
    %251 = vst [vmem:[#allocation2 + $0x1d8] sm:$0xff] %v123
    %252 = vst [vmem:[#allocation2 + $0x1e0] sm:$0xff] %v124
    %253 = vst [vmem:[#allocation2 + $0x1e8] sm:$0xff] %v125
    %254 = vst [vmem:[#allocation2 + $0x1f0] sm:$0xff] %v126
    %255 = vst [vmem:[#allocation2 + $0x1f8] sm:$0xff] %v127
    %256 = vst [vmem:[#allocation2 + $0x200] sm:$0xff] %v128
    %257 = vst [vmem:[#allocation2 + $0x208] sm:$0xff] %v129
    %258 = vst [vmem:[#allocation2 + $0x210] sm:$0xff] %v130
    %259 = vst [vmem:[#allocation2 + $0x218] sm:$0xff] %v131
    %260 = vst [vmem:[#allocation2 + $0x220] sm:$0xff] %v132
    %261 = vst [vmem:[#allocation2 + $0x228] sm:$0xff] %v133
    %262 = vst [vmem:[#allocation2 + $0x230] sm:$0xff] %v134
    %263 = vst [vmem:[#allocation2 + $0x238] sm:$0xff] %v135
    %264 = vst [vmem:[#allocation2 + $0x240] sm:$0xff] %v136
    %265 = vst [vmem:[#allocation2 + $0x248] sm:$0xff] %v137
    %266 = vst [vmem:[#allocation2 + $0x250] sm:$0xff] %v138
    %267 = vst [vmem:[#allocation2 + $0x258] sm:$0xff] %v139
    %268 = vst [vmem:[#allocation2 + $0x260] sm:$0xff] %v140
    %269 = vst [vmem:[#allocation2 + $0x268] sm:$0xff] %v141
    %270 = vst [vmem:[#allocation2 + $0x270] sm:$0xff] %v142
    %271 = vst [vmem:[#allocation2 + $0x278] sm:$0xff] %v143
    %272 = vst [vmem:[#allocation2 + $0x280] sm:$0xff] %v144
    %273 = vst [vmem:[#allocation2 + $0x288] sm:$0xff] %v145
    %274 = vst [vmem:[#allocation2 + $0x290] sm:$0xff] %v146
    %275 = vst [vmem:[#allocation2 + $0x298] sm:$0xff] %v147
    %276 = vst [vmem:[#allocation2 + $0x2a0] sm:$0xff] %v148
    %277 = vst [vmem:[#allocation2 + $0x2a8] sm:$0xff] %v149
    %278 = vst [vmem:[#allocation2 + $0x2b0] sm:$0xff] %v150
    %279 = vst [vmem:[#allocation2 + $0x2b8] sm:$0xff] %v151
    %280 = vst [vmem:[#allocation2 + $0x2c0] sm:$0xff] %v152
    %281 = vst [vmem:[#allocation2 + $0x2c8] sm:$0xff] %v153
    %282 = vst [vmem:[#allocation2 + $0x2d0] sm:$0xff] %v154
    %283 = vst [vmem:[#allocation2 + $0x2d8] sm:$0xff] %v155
    %284 = vst [vmem:[#allocation2 + $0x2e0] sm:$0xff] %v156
    %285 = vst [vmem:[#allocation2 + $0x2e8] sm:$0xff] %v157
    %286 = vst [vmem:[#allocation2 + $0x2f0] sm:$0xff] %v158
    %287 = vst [vmem:[#allocation2 + $0x2f8] sm:$0xff] %v159
    %288 = vst [vmem:[#allocation2 + $0x300] sm:$0xff] %v160
    %289 = vst [vmem:[#allocation2 + $0x308] sm:$0xff] %v161
    %290 = vst [vmem:[#allocation2 + $0x310] sm:$0xff] %v162
    %291 = vst [vmem:[#allocation2 + $0x318] sm:$0xff] %v163
    %292 = vst [vmem:[#allocation2 + $0x320] sm:$0xff] %v164
    %293 = vst [vmem:[#allocation2 + $0x328] sm:$0xff] %v165
    %294 = vst [vmem:[#allocation2 + $0x330] sm:$0xff] %v166
    %295 = vst [vmem:[#allocation2 + $0x338] sm:$0xff] %v167
    %296 = vst [vmem:[#allocation2 + $0x340] sm:$0xff] %v168
    %297 = vst [vmem:[#allocation2 + $0x348] sm:$0xff] %v169
    %298 = vst [vmem:[#allocation2 + $0x350] sm:$0xff] %v170
    %299 = vst [vmem:[#allocation2 + $0x358] sm:$0xff] %v171
    %300 = vst [vmem:[#allocation2 + $0x360] sm:$0xff] %v172
    %301 = vst [vmem:[#allocation2 + $0x368] sm:$0xff] %v173
    %302 = vst [vmem:[#allocation2 + $0x370] sm:$0xff] %v174
    %303 = vst [vmem:[#allocation2 + $0x378] sm:$0xff] %v175
    %304 = vst [vmem:[#allocation2 + $0x380] sm:$0xff] %v176
    %305 = vst [vmem:[#allocation2 + $0x388] sm:$0xff] %v177
    %306 = vst [vmem:[#allocation2 + $0x390] sm:$0xff] %v178
    %307 = vst [vmem:[#allocation2 + $0x398] sm:$0xff] %v179
    %308 = vst [vmem:[#allocation2 + $0x3a0] sm:$0xff] %v180
    %309 = vst [vmem:[#allocation2 + $0x3a8] sm:$0xff] %v181
    %310 = vst [vmem:[#allocation2 + $0x3b0] sm:$0xff] %v182
    %311 = vst [vmem:[#allocation2 + $0x3b8] sm:$0xff] %v183
    %312 = vst [vmem:[#allocation2 + $0x3c0] sm:$0xff] %v184
    %313 = vst [vmem:[#allocation2 + $0x3c8] sm:$0xff] %v185
    %314 = vst [vmem:[#allocation2 + $0x3d0] sm:$0xff] %v186
    %315 = vst [vmem:[#allocation2 + $0x3d8] sm:$0xff] %v187
    %316 = vst [vmem:[#allocation2 + $0x3e0] sm:$0xff] %v188
    %317 = vst [vmem:[#allocation2 + $0x3e8] sm:$0xff] %v189
    %318 = vst [vmem:[#allocation2 + $0x3f0] sm:$0xff] %v190
    %319 = vst [vmem:[#allocation2 + $0x3f8] sm:$0xff] %v191
    %v320 = vld [vmem:[%s5] sm:$0x1]
    %321 = vst [vmem:[#allocation3] sm:$0x1] %v320
    %v322 = vld [vmem:[#allocation4] sm:$0xff]
    %v323 = vld [vmem:[#allocation4 + $0x8] sm:$0xff]
    %v324 = vld [vmem:[#allocation4 + $0x10] sm:$0xff]
    %v325 = vld [vmem:[#allocation4 + $0x18] sm:$0xff]
    %v326 = vld [vmem:[#allocation4 + $0x20] sm:$0xff]
    %v327 = vld [vmem:[#allocation4 + $0x28] sm:$0xff]
    %v328 = vld [vmem:[#allocation4 + $0x30] sm:$0xff]
    %v329 = vld [vmem:[#allocation4 + $0x38] sm:$0xff]
    %v330 = vld [vmem:[#allocation7] sm:$0xff]
    %v331 = vld [vmem:[#allocation7 + $0x8] sm:$0xff]
    %v332 = vld [vmem:[#allocation7 + $0x10] sm:$0xff]
    %v333 = vld [vmem:[#allocation7 + $0x18] sm:$0xff]
    %v334 = vld [vmem:[#allocation7 + $0x20] sm:$0xff]
    %v335 = vld [vmem:[#allocation7 + $0x28] sm:$0xff]
    %v336 = vld [vmem:[#allocation7 + $0x30] sm:$0xff]
    %v337 = vld [vmem:[#allocation7 + $0x38] sm:$0xff]
    %v338 = vlaneseq
    %v339 = vand.u32 %v338, 127
    %vm340 = vcmp.lt.s32.totalorder %v339, 16
    %v341 = vld [vmem:[%s1] sm:$0xff]
    %342 = vset.pattern.permute.xlu0 0
    %343 = vperm.xlu0 %342, %v341
    %v344 = vpop.permute.xlu0 %343
    %vm345 = vcmp.eq.s32.totalorder %v339, %v344
    %v346 = vsel %vm345, 1, 0
    %v347 = vcvt.s32.f32 %v346
    %v348 = vld [vmem:[%s3] sm:$0xff]
    %349 = vset.pattern.permute.xlu0 0
    %350 = vperm.xlu0 %349, %v348
    %v351 = vpop.permute.xlu0 %350
    %vm352 = vcmp.eq.s32.totalorder %v339, %v351
    %v353 = vsel %vm352, 1, 0
    %v354 = vcvt.s32.f32 %v353
    loop: start=0, step=1, limit=3
    $region38: #{tpu_custom_call.1} parent=1 // loop_pre_header
      _
    $region39: #{tpu_custom_call.1} parent=1 // loop_header
      %s356 = sphi 0, %s360
      %p357 = scmp.ge.s32.totalorder %s356, 3
    $region40: #{tpu_custom_call.1} parent=1 // loop_header_branch
      %359 = sbr.rel (%p357) target = $region44
    $region41: #{tpu_custom_call.1} parent=1 // loop_body
      %v361 = vld [vmem:[#allocation2] sm:$0xff]
      %v362 = vld [vmem:[#allocation2 + $0x8] sm:$0xff]
      %v363 = vld [vmem:[#allocation2 + $0x10] sm:$0xff]
      %v364 = vld [vmem:[#allocation2 + $0x18] sm:$0xff]
      %v365 = vld [vmem:[#allocation2 + $0x20] sm:$0xff]
      %v366 = vld [vmem:[#allocation2 + $0x28] sm:$0xff]
      %v367 = vld [vmem:[#allocation2 + $0x30] sm:$0xff]
      %v368 = vld [vmem:[#allocation2 + $0x38] sm:$0xff]
      %v369 = vld [vmem:[#allocation2 + $0x40] sm:$0xff]
      %v370 = vld [vmem:[#allocation2 + $0x48] sm:$0xff]
      %v371 = vld [vmem:[#allocation2 + $0x50] sm:$0xff]
      %v372 = vld [vmem:[#allocation2 + $0x58] sm:$0xff]
      %v373 = vld [vmem:[#allocation2 + $0x60] sm:$0xff]
      %v374 = vld [vmem:[#allocation2 + $0x68] sm:$0xff]
      %v375 = vld [vmem:[#allocation2 + $0x70] sm:$0xff]
      %v376 = vld [vmem:[#allocation2 + $0x78] sm:$0xff]
      %v377 = vld [vmem:[#allocation2 + $0x80] sm:$0xff]
      %v378 = vld [vmem:[#allocation2 + $0x88] sm:$0xff]
      %v379 = vld [vmem:[#allocation2 + $0x90] sm:$0xff]
      %v380 = vld [vmem:[#allocation2 + $0x98] sm:$0xff]
      %v381 = vld [vmem:[#allocation2 + $0xa0] sm:$0xff]
      %v382 = vld [vmem:[#allocation2 + $0xa8] sm:$0xff]
      %v383 = vld [vmem:[#allocation2 + $0xb0] sm:$0xff]
      %v384 = vld [vmem:[#allocation2 + $0xb8] sm:$0xff]
      %v385 = vld [vmem:[#allocation2 + $0xc0] sm:$0xff]
      %v386 = vld [vmem:[#allocation2 + $0xc8] sm:$0xff]
      %v387 = vld [vmem:[#allocation2 + $0xd0] sm:$0xff]
      %v388 = vld [vmem:[#allocation2 + $0xd8] sm:$0xff]
      %v389 = vld [vmem:[#allocation2 + $0xe0] sm:$0xff]
      %v390 = vld [vmem:[#allocation2 + $0xe8] sm:$0xff]
      %v391 = vld [vmem:[#allocation2 + $0xf0] sm:$0xff]
      %v392 = vld [vmem:[#allocation2 + $0xf8] sm:$0xff]
      %v393 = vld [vmem:[#allocation2 + $0x100] sm:$0xff]
      %v394 = vld [vmem:[#allocation2 + $0x108] sm:$0xff]
      %v395 = vld [vmem:[#allocation2 + $0x110] sm:$0xff]
      %v396 = vld [vmem:[#allocation2 + $0x118] sm:$0xff]
      %v397 = vld [vmem:[#allocation2 + $0x120] sm:$0xff]
      %v398 = vld [vmem:[#allocation2 + $0x128] sm:$0xff]
      %v399 = vld [vmem:[#allocation2 + $0x130] sm:$0xff]
      %v400 = vld [vmem:[#allocation2 + $0x138] sm:$0xff]
      %v401 = vld [vmem:[#allocation2 + $0x140] sm:$0xff]
      %v402 = vld [vmem:[#allocation2 + $0x148] sm:$0xff]
      %v403 = vld [vmem:[#allocation2 + $0x150] sm:$0xff]
      %v404 = vld [vmem:[#allocation2 + $0x158] sm:$0xff]
      %v405 = vld [vmem:[#allocation2 + $0x160] sm:$0xff]
      %v406 = vld [vmem:[#allocation2 + $0x168] sm:$0xff]
      %v407 = vld [vmem:[#allocation2 + $0x170] sm:$0xff]
      %v408 = vld [vmem:[#allocation2 + $0x178] sm:$0xff]
      %v409 = vld [vmem:[#allocation2 + $0x180] sm:$0xff]
      %v410 = vld [vmem:[#allocation2 + $0x188] sm:$0xff]
      %v411 = vld [vmem:[#allocation2 + $0x190] sm:$0xff]
      %v412 = vld [vmem:[#allocation2 + $0x198] sm:$0xff]
      %v413 = vld [vmem:[#allocation2 + $0x1a0] sm:$0xff]
      %v414 = vld [vmem:[#allocation2 + $0x1a8] sm:$0xff]
      %v415 = vld [vmem:[#allocation2 + $0x1b0] sm:$0xff]
      %v416 = vld [vmem:[#allocation2 + $0x1b8] sm:$0xff]
      %v417 = vld [vmem:[#allocation2 + $0x1c0] sm:$0xff]
      %v418 = vld [vmem:[#allocation2 + $0x1c8] sm:$0xff]
      %v419 = vld [vmem:[#allocation2 + $0x1d0] sm:$0xff]
      %v420 = vld [vmem:[#allocation2 + $0x1d8] sm:$0xff]
      %v421 = vld [vmem:[#allocation2 + $0x1e0] sm:$0xff]
      %v422 = vld [vmem:[#allocation2 + $0x1e8] sm:$0xff]
      %v423 = vld [vmem:[#allocation2 + $0x1f0] sm:$0xff]
      %v424 = vld [vmem:[#allocation2 + $0x1f8] sm:$0xff]
      %v425 = vld [vmem:[#allocation2 + $0x200] sm:$0xff]
      %v426 = vld [vmem:[#allocation2 + $0x208] sm:$0xff]
      %v427 = vld [vmem:[#allocation2 + $0x210] sm:$0xff]
      %v428 = vld [vmem:[#allocation2 + $0x218] sm:$0xff]
      %v429 = vld [vmem:[#allocation2 + $0x220] sm:$0xff]
      %v430 = vld [vmem:[#allocation2 + $0x228] sm:$0xff]
      %v431 = vld [vmem:[#allocation2 + $0x230] sm:$0xff]
      %v432 = vld [vmem:[#allocation2 + $0x238] sm:$0xff]
      %v433 = vld [vmem:[#allocation2 + $0x240] sm:$0xff]
      %v434 = vld [vmem:[#allocation2 + $0x248] sm:$0xff]
      %v435 = vld [vmem:[#allocation2 + $0x250] sm:$0xff]
      %v436 = vld [vmem:[#allocation2 + $0x258] sm:$0xff]
      %v437 = vld [vmem:[#allocation2 + $0x260] sm:$0xff]
      %v438 = vld [vmem:[#allocation2 + $0x268] sm:$0xff]
      %v439 = vld [vmem:[#allocation2 + $0x270] sm:$0xff]
      %v440 = vld [vmem:[#allocation2 + $0x278] sm:$0xff]
      %v441 = vld [vmem:[#allocation2 + $0x280] sm:$0xff]
      %v442 = vld [vmem:[#allocation2 + $0x288] sm:$0xff]
      %v443 = vld [vmem:[#allocation2 + $0x290] sm:$0xff]
      %v444 = vld [vmem:[#allocation2 + $0x298] sm:$0xff]
      %v445 = vld [vmem:[#allocation2 + $0x2a0] sm:$0xff]
      %v446 = vld [vmem:[#allocation2 + $0x2a8] sm:$0xff]
      %v447 = vld [vmem:[#allocation2 + $0x2b0] sm:$0xff]
      %v448 = vld [vmem:[#allocation2 + $0x2b8] sm:$0xff]
      %v449 = vld [vmem:[#allocation2 + $0x2c0] sm:$0xff]
      %v450 = vld [vmem:[#allocation2 + $0x2c8] sm:$0xff]
      %v451 = vld [vmem:[#allocation2 + $0x2d0] sm:$0xff]
      %v452 = vld [vmem:[#allocation2 + $0x2d8] sm:$0xff]
      %v453 = vld [vmem:[#allocation2 + $0x2e0] sm:$0xff]
      %v454 = vld [vmem:[#allocation2 + $0x2e8] sm:$0xff]
      %v455 = vld [vmem:[#allocation2 + $0x2f0] sm:$0xff]
      %v456 = vld [vmem:[#allocation2 + $0x2f8] sm:$0xff]
      %v457 = vld [vmem:[#allocation2 + $0x300] sm:$0xff]
      %v458 = vld [vmem:[#allocation2 + $0x308] sm:$0xff]
      %v459 = vld [vmem:[#allocation2 + $0x310] sm:$0xff]
      %v460 = vld [vmem:[#allocation2 + $0x318] sm:$0xff]
      %v461 = vld [vmem:[#allocation2 + $0x320] sm:$0xff]
      %v462 = vld [vmem:[#allocation2 + $0x328] sm:$0xff]
      %v463 = vld [vmem:[#allocation2 + $0x330] sm:$0xff]
      %v464 = vld [vmem:[#allocation2 + $0x338] sm:$0xff]
      %v465 = vld [vmem:[#allocation2 + $0x340] sm:$0xff]
      %v466 = vld [vmem:[#allocation2 + $0x348] sm:$0xff]
      %v467 = vld [vmem:[#allocation2 + $0x350] sm:$0xff]
      %v468 = vld [vmem:[#allocation2 + $0x358] sm:$0xff]
      %v469 = vld [vmem:[#allocation2 + $0x360] sm:$0xff]
      %v470 = vld [vmem:[#allocation2 + $0x368] sm:$0xff]
      %v471 = vld [vmem:[#allocation2 + $0x370] sm:$0xff]
      %v472 = vld [vmem:[#allocation2 + $0x378] sm:$0xff]
      %v473 = vld [vmem:[#allocation2 + $0x380] sm:$0xff]
      %v474 = vld [vmem:[#allocation2 + $0x388] sm:$0xff]
      %v475 = vld [vmem:[#allocation2 + $0x390] sm:$0xff]
      %v476 = vld [vmem:[#allocation2 + $0x398] sm:$0xff]
      %v477 = vld [vmem:[#allocation2 + $0x3a0] sm:$0xff]
      %v478 = vld [vmem:[#allocation2 + $0x3a8] sm:$0xff]
      %v479 = vld [vmem:[#allocation2 + $0x3b0] sm:$0xff]
      %v480 = vld [vmem:[#allocation2 + $0x3b8] sm:$0xff]
      %v481 = vld [vmem:[#allocation2 + $0x3c0] sm:$0xff]
      %v482 = vld [vmem:[#allocation2 + $0x3c8] sm:$0xff]
      %v483 = vld [vmem:[#allocation2 + $0x3d0] sm:$0xff]
      %v484 = vld [vmem:[#allocation2 + $0x3d8] sm:$0xff]
      %v485 = vld [vmem:[#allocation2 + $0x3e0] sm:$0xff]
      %v486 = vld [vmem:[#allocation2 + $0x3e8] sm:$0xff]
      %v487 = vld [vmem:[#allocation2 + $0x3f0] sm:$0xff]
      %v488 = vld [vmem:[#allocation2 + $0x3f8] sm:$0xff]
      %v489 = vld [vmem:[#allocation3] sm:$0x1]
      %v491 = vlaneseq
      %v492 = vshrl.u32 %v491, 7
      %v493 = vsub.s32 0, %v492
      %v494 = vrot.slane %v489, %v493
      %496 = vmatprep.subr.mxu0 0.0
      %497 = vmatpush1.msra.mxu0 %v361
      %498 = vmatprep.subr.mxu0 0.0
      %499 = vmatpush1.msra.mxu0 %v362
      %500 = vmatprep.subr.mxu0 0.0
      %501 = vmatpush1.msra.mxu0 %v363
      %502 = vmatprep.subr.mxu0 0.0
      %503 = vmatpush1.msra.mxu0 %v364
      %504 = vmatprep.subr.mxu0 0.0
      %505 = vmatpush1.msra.mxu0 %v365
      %506 = vmatprep.subr.mxu0 0.0
      %507 = vmatpush1.msra.mxu0 %v366
      %508 = vmatprep.subr.mxu0 0.0
      %509 = vmatpush1.msra.mxu0 %v367
      %510 = vmatprep.subr.mxu0 0.0
      %511 = vmatpush1.msra.mxu0 %v368
      %512 = vmatprep.subr.mxu0 0.0
      %513 = vmatpush1.msra.mxu0 %v369
      %514 = vmatprep.subr.mxu0 0.0
      %515 = vmatpush1.msra.mxu0 %v370
      %516 = vmatprep.subr.mxu0 0.0
      %517 = vmatpush1.msra.mxu0 %v371
      %518 = vmatprep.subr.mxu0 0.0
      %519 = vmatpush1.msra.mxu0 %v372
      %520 = vmatprep.subr.mxu0 0.0
      %521 = vmatpush1.msra.mxu0 %v373
      %522 = vmatprep.subr.mxu0 0.0
      %523 = vmatpush1.msra.mxu0 %v374
      %524 = vmatprep.subr.mxu0 0.0
      %525 = vmatpush1.msra.mxu0 %v375
      %526 = vmatprep.subr.mxu0 0.0
      %527 = vmatpush1.msra.mxu0 %v376
      %528 = vmatprep.subr.mxu0 0.0
      %529 = vmatpush1.msra.mxu0 %v377
      %530 = vmatprep.subr.mxu0 0.0
      %531 = vmatpush1.msra.mxu0 %v378
      %532 = vmatprep.subr.mxu0 0.0
      %533 = vmatpush1.msra.mxu0 %v379
      %534 = vmatprep.subr.mxu0 0.0
      %535 = vmatpush1.msra.mxu0 %v380
      %536 = vmatprep.subr.mxu0 0.0
      %537 = vmatpush1.msra.mxu0 %v381
      %538 = vmatprep.subr.mxu0 0.0
      %539 = vmatpush1.msra.mxu0 %v382
      %540 = vmatprep.subr.mxu0 0.0
      %541 = vmatpush1.msra.mxu0 %v383
      %542 = vmatprep.subr.mxu0 0.0
      %543 = vmatpush1.msra.mxu0 %v384
      %544 = vmatprep.subr.mxu0 0.0
      %545 = vmatpush1.msra.mxu0 %v385
      %546 = vmatprep.subr.mxu0 0.0
      %547 = vmatpush1.msra.mxu0 %v386
      %548 = vmatprep.subr.mxu0 0.0
      %549 = vmatpush1.msra.mxu0 %v387
      %550 = vmatprep.subr.mxu0 0.0
      %551 = vmatpush1.msra.mxu0 %v388
      %552 = vmatprep.subr.mxu0 0.0
      %553 = vmatpush1.msra.mxu0 %v389
      %554 = vmatprep.subr.mxu0 0.0
      %555 = vmatpush1.msra.mxu0 %v390
      %556 = vmatprep.subr.mxu0 0.0
      %557 = vmatpush1.msra.mxu0 %v391
      %558 = vmatprep.subr.mxu0 0.0
      %559 = vmatpush1.msra.mxu0 %v392
      %560 = vmatprep.mubr.f32.mxu0 %v323
      %561 = vmatmul.mubr.f32.gmra.mrb[0].mxu0 %v322
      %v562 = vpop.f32.mrb[0].mxu0
      %v563 = vadd.f32 %v494, %v562
      %v564 = vpop.f32.mrb[0].mxu0
      %565 = vdwg.mxu0
      %566 = vmatprep.subr.mxu0 0.0
      %567 = vmatpush1.msra.mxu0 %v393
      %568 = vmatprep.subr.mxu0 0.0
      %569 = vmatpush1.msra.mxu0 %v394
      %570 = vmatprep.subr.mxu0 0.0
      %571 = vmatpush1.msra.mxu0 %v395
      %572 = vmatprep.subr.mxu0 0.0
      %573 = vmatpush1.msra.mxu0 %v396
      %574 = vmatprep.subr.mxu0 0.0
      %575 = vmatpush1.msra.mxu0 %v397
      %576 = vmatprep.subr.mxu0 0.0
      %577 = vmatpush1.msra.mxu0 %v398
      %578 = vmatprep.subr.mxu0 0.0
      %579 = vmatpush1.msra.mxu0 %v399
      %580 = vmatprep.subr.mxu0 0.0
      %581 = vmatpush1.msra.mxu0 %v400
      %582 = vmatprep.subr.mxu0 0.0
      %583 = vmatpush1.msra.mxu0 %v401
      %584 = vmatprep.subr.mxu0 0.0
      %585 = vmatpush1.msra.mxu0 %v402
      %586 = vmatprep.subr.mxu0 0.0
      %587 = vmatpush1.msra.mxu0 %v403
      %588 = vmatprep.subr.mxu0 0.0
      %589 = vmatpush1.msra.mxu0 %v404
      %590 = vmatprep.subr.mxu0 0.0
      %591 = vmatpush1.msra.mxu0 %v405
      %592 = vmatprep.subr.mxu0 0.0
      %593 = vmatpush1.msra.mxu0 %v406
      %594 = vmatprep.subr.mxu0 0.0
      %595 = vmatpush1.msra.mxu0 %v407
      %596 = vmatprep.subr.mxu0 0.0
      %597 = vmatpush1.msra.mxu0 %v408
      %598 = vmatprep.subr.mxu0 0.0
      %599 = vmatpush1.msra.mxu0 %v409
      %600 = vmatprep.subr.mxu0 0.0
      %601 = vmatpush1.msra.mxu0 %v410
      %602 = vmatprep.subr.mxu0 0.0
      %603 = vmatpush1.msra.mxu0 %v411
      %604 = vmatprep.subr.mxu0 0.0
      %605 = vmatpush1.msra.mxu0 %v412
      %606 = vmatprep.subr.mxu0 0.0
      %607 = vmatpush1.msra.mxu0 %v413
      %608 = vmatprep.subr.mxu0 0.0
      %609 = vmatpush1.msra.mxu0 %v414
      %610 = vmatprep.subr.mxu0 0.0
      %611 = vmatpush1.msra.mxu0 %v415
      %612 = vmatprep.subr.mxu0 0.0
      %613 = vmatpush1.msra.mxu0 %v416
      %614 = vmatprep.subr.mxu0 0.0
      %615 = vmatpush1.msra.mxu0 %v417
      %616 = vmatprep.subr.mxu0 0.0
      %617 = vmatpush1.msra.mxu0 %v418
      %618 = vmatprep.subr.mxu0 0.0
      %619 = vmatpush1.msra.mxu0 %v419
      %620 = vmatprep.subr.mxu0 0.0
      %621 = vmatpush1.msra.mxu0 %v420
      %622 = vmatprep.subr.mxu0 0.0
      %623 = vmatpush1.msra.mxu0 %v421
      %624 = vmatprep.subr.mxu0 0.0
      %625 = vmatpush1.msra.mxu0 %v422
      %626 = vmatprep.subr.mxu0 0.0
      %627 = vmatpush1.msra.mxu0 %v423
      %628 = vmatprep.subr.mxu0 0.0
      %629 = vmatpush1.msra.mxu0 %v424
      %630 = vmatprep.mubr.f32.mxu0 %v325
      %631 = vmatmul.mubr.f32.gmra.mrb[0].mxu0 %v324
      %v632 = vpop.f32.mrb[0].mxu0
      %v633 = vadd.f32 %v563, %v632
      %v634 = vpop.f32.mrb[0].mxu0
      %635 = vdwg.mxu0
      %636 = vmatprep.subr.mxu0 0.0
      %637 = vmatpush1.msra.mxu0 %v425
      %638 = vmatprep.subr.mxu0 0.0
      %639 = vmatpush1.msra.mxu0 %v426
      %640 = vmatprep.subr.mxu0 0.0
      %641 = vmatpush1.msra.mxu0 %v427
      %642 = vmatprep.subr.mxu0 0.0
      %643 = vmatpush1.msra.mxu0 %v428
      %644 = vmatprep.subr.mxu0 0.0
      %645 = vmatpush1.msra.mxu0 %v429
      %646 = vmatprep.subr.mxu0 0.0
      %647 = vmatpush1.msra.mxu0 %v430
      %648 = vmatprep.subr.mxu0 0.0
      %649 = vmatpush1.msra.mxu0 %v431
      %650 = vmatprep.subr.mxu0 0.0
      %651 = vmatpush1.msra.mxu0 %v432
      %652 = vmatprep.subr.mxu0 0.0
      %653 = vmatpush1.msra.mxu0 %v433
      %654 = vmatprep.subr.mxu0 0.0
      %655 = vmatpush1.msra.mxu0 %v434
      %656 = vmatprep.subr.mxu0 0.0
      %657 = vmatpush1.msra.mxu0 %v435
      %658 = vmatprep.subr.mxu0 0.0
      %659 = vmatpush1.msra.mxu0 %v436
      %660 = vmatprep.subr.mxu0 0.0
      %661 = vmatpush1.msra.mxu0 %v437
      %662 = vmatprep.subr.mxu0 0.0
      %663 = vmatpush1.msra.mxu0 %v438
      %664 = vmatprep.subr.mxu0 0.0
      %665 = vmatpush1.msra.mxu0 %v439
      %666 = vmatprep.subr.mxu0 0.0
      %667 = vmatpush1.msra.mxu0 %v440
      %668 = vmatprep.subr.mxu0 0.0
      %669 = vmatpush1.msra.mxu0 %v441
      %670 = vmatprep.subr.mxu0 0.0
      %671 = vmatpush1.msra.mxu0 %v442
      %672 = vmatprep.subr.mxu0 0.0
      %673 = vmatpush1.msra.mxu0 %v443
      %674 = vmatprep.subr.mxu0 0.0
      %675 = vmatpush1.msra.mxu0 %v444
      %676 = vmatprep.subr.mxu0 0.0
      %677 = vmatpush1.msra.mxu0 %v445
      %678 = vmatprep.subr.mxu0 0.0
      %679 = vmatpush1.msra.mxu0 %v446
      %680 = vmatprep.subr.mxu0 0.0
      %681 = vmatpush1.msra.mxu0 %v447
      %682 = vmatprep.subr.mxu0 0.0
      %683 = vmatpush1.msra.mxu0 %v448
      %684 = vmatprep.subr.mxu0 0.0
      %685 = vmatpush1.msra.mxu0 %v449
      %686 = vmatprep.subr.mxu0 0.0
      %687 = vmatpush1.msra.mxu0 %v450
      %688 = vmatprep.subr.mxu0 0.0
      %689 = vmatpush1.msra.mxu0 %v451
      %690 = vmatprep.subr.mxu0 0.0
      %691 = vmatpush1.msra.mxu0 %v452
      %692 = vmatprep.subr.mxu0 0.0
      %693 = vmatpush1.msra.mxu0 %v453
      %694 = vmatprep.subr.mxu0 0.0
      %695 = vmatpush1.msra.mxu0 %v454
      %696 = vmatprep.subr.mxu0 0.0
      %697 = vmatpush1.msra.mxu0 %v455
      %698 = vmatprep.subr.mxu0 0.0
      %699 = vmatpush1.msra.mxu0 %v456
      %700 = vmatprep.mubr.f32.mxu0 %v327
      %701 = vmatmul.mubr.f32.gmra.mrb[0].mxu0 %v326
      %v702 = vpop.f32.mrb[0].mxu0
      %v703 = vadd.f32 %v633, %v702
      %v704 = vpop.f32.mrb[0].mxu0
      %705 = vdwg.mxu0
      %706 = vmatprep.subr.mxu0 0.0
      %707 = vmatpush1.msra.mxu0 %v457
      %708 = vmatprep.subr.mxu0 0.0
      %709 = vmatpush1.msra.mxu0 %v458
      %710 = vmatprep.subr.mxu0 0.0
      %711 = vmatpush1.msra.mxu0 %v459
      %712 = vmatprep.subr.mxu0 0.0
      %713 = vmatpush1.msra.mxu0 %v460
      %714 = vmatprep.subr.mxu0 0.0
      %715 = vmatpush1.msra.mxu0 %v461
      %716 = vmatprep.subr.mxu0 0.0
      %717 = vmatpush1.msra.mxu0 %v462
      %718 = vmatprep.subr.mxu0 0.0
      %719 = vmatpush1.msra.mxu0 %v463
      %720 = vmatprep.subr.mxu0 0.0
      %721 = vmatpush1.msra.mxu0 %v464
      %722 = vmatprep.subr.mxu0 0.0
      %723 = vmatpush1.msra.mxu0 %v465
      %724 = vmatprep.subr.mxu0 0.0
      %725 = vmatpush1.msra.mxu0 %v466
      %726 = vmatprep.subr.mxu0 0.0
      %727 = vmatpush1.msra.mxu0 %v467
      %728 = vmatprep.subr.mxu0 0.0
      %729 = vmatpush1.msra.mxu0 %v468
      %730 = vmatprep.subr.mxu0 0.0
      %731 = vmatpush1.msra.mxu0 %v469
      %732 = vmatprep.subr.mxu0 0.0
      %733 = vmatpush1.msra.mxu0 %v470
      %734 = vmatprep.subr.mxu0 0.0
      %735 = vmatpush1.msra.mxu0 %v471
      %736 = vmatprep.subr.mxu0 0.0
      %737 = vmatpush1.msra.mxu0 %v472
      %738 = vmatprep.subr.mxu0 0.0
      %739 = vmatpush1.msra.mxu0 %v473
      %740 = vmatprep.subr.mxu0 0.0
      %741 = vmatpush1.msra.mxu0 %v474
      %742 = vmatprep.subr.mxu0 0.0
      %743 = vmatpush1.msra.mxu0 %v475
      %744 = vmatprep.subr.mxu0 0.0
      %745 = vmatpush1.msra.mxu0 %v476
      %746 = vmatprep.subr.mxu0 0.0
      %747 = vmatpush1.msra.mxu0 %v477
      %748 = vmatprep.subr.mxu0 0.0
      %749 = vmatpush1.msra.mxu0 %v478
      %750 = vmatprep.subr.mxu0 0.0
      %751 = vmatpush1.msra.mxu0 %v479
      %752 = vmatprep.subr.mxu0 0.0
      %753 = vmatpush1.msra.mxu0 %v480
      %754 = vmatprep.subr.mxu0 0.0
      %755 = vmatpush1.msra.mxu0 %v481
      %756 = vmatprep.subr.mxu0 0.0
      %757 = vmatpush1.msra.mxu0 %v482
      %758 = vmatprep.subr.mxu0 0.0
      %759 = vmatpush1.msra.mxu0 %v483
      %760 = vmatprep.subr.mxu0 0.0
      %761 = vmatpush1.msra.mxu0 %v484
      %762 = vmatprep.subr.mxu0 0.0
      %763 = vmatpush1.msra.mxu0 %v485
      %764 = vmatprep.subr.mxu0 0.0
      %765 = vmatpush1.msra.mxu0 %v486
      %766 = vmatprep.subr.mxu0 0.0
      %767 = vmatpush1.msra.mxu0 %v487
      %768 = vmatprep.subr.mxu0 0.0
      %769 = vmatpush1.msra.mxu0 %v488
      %770 = vmatprep.mubr.f32.mxu0 %v329
      %771 = vmatmul.mubr.f32.gmra.mrb[0].mxu0 %v328
      %v772 = vpop.f32.mrb[0].mxu0
      %v773 = vadd.f32 %v703, %v772
      %v774 = vpop.f32.mrb[0].mxu0
      %775 = vdwg.mxu0
      %v776 = vsel %vm340, 1, 0
      %vm777 = vcmp.eq.s32.totalorder %v776, 1
      %v778 = vsel %vm777, %v773, -1e+30
      %779 = vmax.xlane.f32.xlu0 %v778
      %v780 = vpop.xlane.xlu0 %779
      %v781 = vsub.f32 %v778, %v780
      %v782 = vmul.f32 %v781, 1.442695
      %v783 = vpow.pop %v782
      %784 = vadd.xlane.f32.xlu0 %v783
      %v785 = vpop.xlane.xlu0 %784
      %v786 = vrcp.pop %v785
      %v787 = vmul.f32 %v783, %v786
      %v788 = vsub.f32 %v787, %v347
      %v789 = vmul.f32 %v788, 0.125
      %790 = vxpose.xlu0.b32.start [1/16] %v322, 128
      %791 = vxpose.xlu0.b32.cont [2/16] 0.0, 128
      %792 = vxpose.xlu0.b32.cont [3/16] 0.0, 128
      %793 = vxpose.xlu0.b32.cont [4/16] 0.0, 128
      %794 = vxpose.xlu0.b32.cont [5/16] 0.0, 128
      %795 = vxpose.xlu0.b32.cont [6/16] 0.0, 128
      %796 = vxpose.xlu0.b32.cont [7/16] 0.0, 128
      %797 = vxpose.xlu0.b32.cont [8/16] 0.0, 128
      %798 = vxpose.xlu0.b32.cont [9/16] 0.0, 128
      %799 = vxpose.xlu0.b32.cont [10/16] 0.0, 128
      %800 = vxpose.xlu0.b32.cont [11/16] 0.0, 128
      %801 = vxpose.xlu0.b32.cont [12/16] 0.0, 128
      %802 = vxpose.xlu0.b32.cont [13/16] 0.0, 128
      %803 = vxpose.xlu0.b32.cont [14/16] 0.0, 128
      %804 = vxpose.xlu0.b32.cont [15/16] 0.0, 128
      %805 = vxpose.xlu0.b32.end [16/16] 0.0, 128
      %v806 = vpop.trf.xlu0
      %v807 = vpop.trf.xlu0
      %v808 = vpop.trf.xlu0
      %v809 = vpop.trf.xlu0
      %v810 = vpop.trf.xlu0
      %v811 = vpop.trf.xlu0
      %v812 = vpop.trf.xlu0
      %v813 = vpop.trf.xlu0
      %v814 = vpop.trf.xlu0
      %v815 = vpop.trf.xlu0
      %v816 = vpop.trf.xlu0
      %v817 = vpop.trf.xlu0
      %v818 = vpop.trf.xlu0
      %v819 = vpop.trf.xlu0
      %v820 = vpop.trf.xlu0
      %v821 = vpop.trf.xlu0
      %822 = vxpose.xlu0.b32.start [1/16] %v323, 128
      %823 = vxpose.xlu0.b32.cont [2/16] 0.0, 128
      %824 = vxpose.xlu0.b32.cont [3/16] 0.0, 128
      %825 = vxpose.xlu0.b32.cont [4/16] 0.0, 128
      %826 = vxpose.xlu0.b32.cont [5/16] 0.0, 128
      %827 = vxpose.xlu0.b32.cont [6/16] 0.0, 128
      %828 = vxpose.xlu0.b32.cont [7/16] 0.0, 128
      %829 = vxpose.xlu0.b32.cont [8/16] 0.0, 128
      %830 = vxpose.xlu0.b32.cont [9/16] 0.0, 128
      %831 = vxpose.xlu0.b32.cont [10/16] 0.0, 128
      %832 = vxpose.xlu0.b32.cont [11/16] 0.0, 128
      %833 = vxpose.xlu0.b32.cont [12/16] 0.0, 128
      %834 = vxpose.xlu0.b32.cont [13/16] 0.0, 128
      %835 = vxpose.xlu0.b32.cont [14/16] 0.0, 128
      %836 = vxpose.xlu0.b32.cont [15/16] 0.0, 128
      %837 = vxpose.xlu0.b32.end [16/16] 0.0, 128
      %v838 = vpop.trf.xlu0
      %v839 = vpop.trf.xlu0
      %v840 = vpop.trf.xlu0
      %v841 = vpop.trf.xlu0
      %v842 = vpop.trf.xlu0
      %v843 = vpop.trf.xlu0
      %v844 = vpop.trf.xlu0
      %v845 = vpop.trf.xlu0
      %v846 = vpop.trf.xlu0
      %v847 = vpop.trf.xlu0
      %v848 = vpop.trf.xlu0
      %v849 = vpop.trf.xlu0
      %v850 = vpop.trf.xlu0
      %v851 = vpop.trf.xlu0
      %v852 = vpop.trf.xlu0
      %v853 = vpop.trf.xlu0
      %854 = vxpose.xlu0.b32.start [1/16] %v324, 128
      %855 = vxpose.xlu0.b32.cont [2/16] 0.0, 128
      %856 = vxpose.xlu0.b32.cont [3/16] 0.0, 128
      %857 = vxpose.xlu0.b32.cont [4/16] 0.0, 128
      %858 = vxpose.xlu0.b32.cont [5/16] 0.0, 128
      %859 = vxpose.xlu0.b32.cont [6/16] 0.0, 128
      %860 = vxpose.xlu0.b32.cont [7/16] 0.0, 128
      %861 = vxpose.xlu0.b32.cont [8/16] 0.0, 128
      %862 = vxpose.xlu0.b32.cont [9/16] 0.0, 128
      %863 = vxpose.xlu0.b32.cont [10/16] 0.0, 128
      %864 = vxpose.xlu0.b32.cont [11/16] 0.0, 128
      %865 = vxpose.xlu0.b32.cont [12/16] 0.0, 128
      %866 = vxpose.xlu0.b32.cont [13/16] 0.0, 128
      %867 = vxpose.xlu0.b32.cont [14/16] 0.0, 128
      %868 = vxpose.xlu0.b32.cont [15/16] 0.0, 128
      %869 = vxpose.xlu0.b32.end [16/16] 0.0, 128
      %v870 = vpop.trf.xlu0
      %v871 = vpop.trf.xlu0
      %v872 = vpop.trf.xlu0
      %v873 = vpop.trf.xlu0
      %v874 = vpop.trf.xlu0
      %v875 = vpop.trf.xlu0
      %v876 = vpop.trf.xlu0
      %v877 = vpop.trf.xlu0
      %v878 = vpop.trf.xlu0
      %v879 = vpop.trf.xlu0
      %v880 = vpop.trf.xlu0
      %v881 = vpop.trf.xlu0
      %v882 = vpop.trf.xlu0
      %v883 = vpop.trf.xlu0
      %v884 = vpop.trf.xlu0
      %v885 = vpop.trf.xlu0
      %886 = vxpose.xlu0.b32.start [1/16] %v325, 128
      %887 = vxpose.xlu0.b32.cont [2/16] 0.0, 128
      %888 = vxpose.xlu0.b32.cont [3/16] 0.0, 128
      %889 = vxpose.xlu0.b32.cont [4/16] 0.0, 128
      %890 = vxpose.xlu0.b32.cont [5/16] 0.0, 128
      %891 = vxpose.xlu0.b32.cont [6/16] 0.0, 128
      %892 = vxpose.xlu0.b32.cont [7/16] 0.0, 128
      %893 = vxpose.xlu0.b32.cont [8/16] 0.0, 128
      %894 = vxpose.xlu0.b32.cont [9/16] 0.0, 128
      %895 = vxpose.xlu0.b32.cont [10/16] 0.0, 128
      %896 = vxpose.xlu0.b32.cont [11/16] 0.0, 128
      %897 = vxpose.xlu0.b32.cont [12/16] 0.0, 128
      %898 = vxpose.xlu0.b32.cont [13/16] 0.0, 128
      %899 = vxpose.xlu0.b32.cont [14/16] 0.0, 128
      %900 = vxpose.xlu0.b32.cont [15/16] 0.0, 128
      %901 = vxpose.xlu0.b32.end [16/16] 0.0, 128
      %v902 = vpop.trf.xlu0
      %v903 = vpop.trf.xlu0
      %v904 = vpop.trf.xlu0
      %v905 = vpop.trf.xlu0
      %v906 = vpop.trf.xlu0
      %v907 = vpop.trf.xlu0
      %v908 = vpop.trf.xlu0
      %v909 = vpop.trf.xlu0
      %v910 = vpop.trf.xlu0
      %v911 = vpop.trf.xlu0
      %v912 = vpop.trf.xlu0
      %v913 = vpop.trf.xlu0
      %v914 = vpop.trf.xlu0
      %v915 = vpop.trf.xlu0
      %v916 = vpop.trf.xlu0
      %v917 = vpop.trf.xlu0
      %918 = vxpose.xlu0.b32.start [1/16] %v326, 128
      %919 = vxpose.xlu0.b32.cont [2/16] 0.0, 128
      %920 = vxpose.xlu0.b32.cont [3/16] 0.0, 128
      %921 = vxpose.xlu0.b32.cont [4/16] 0.0, 128
      %922 = vxpose.xlu0.b32.cont [5/16] 0.0, 128
      %923 = vxpose.xlu0.b32.cont [6/16] 0.0, 128
      %924 = vxpose.xlu0.b32.cont [7/16] 0.0, 128
      %925 = vxpose.xlu0.b32.cont [8/16] 0.0, 128
      %926 = vxpose.xlu0.b32.cont [9/16] 0.0, 128
      %927 = vxpose.xlu0.b32.cont [10/16] 0.0, 128
      %928 = vxpose.xlu0.b32.cont [11/16] 0.0, 128
      %929 = vxpose.xlu0.b32.cont [12/16] 0.0, 128
      %930 = vxpose.xlu0.b32.cont [13/16] 0.0, 128
      %931 = vxpose.xlu0.b32.cont [14/16] 0.0, 128
      %932 = vxpose.xlu0.b32.cont [15/16] 0.0, 128
      %933 = vxpose.xlu0.b32.end [16/16] 0.0, 128
      %v934 = vpop.trf.xlu0
      %v935 = vpop.trf.xlu0
      %v936 = vpop.trf.xlu0
      %v937 = vpop.trf.xlu0
      %v938 = vpop.trf.xlu0
      %v939 = vpop.trf.xlu0
      %v940 = vpop.trf.xlu0
      %v941 = vpop.trf.xlu0
      %v942 = vpop.trf.xlu0
      %v943 = vpop.trf.xlu0
      %v944 = vpop.trf.xlu0
      %v945 = vpop.trf.xlu0
      %v946 = vpop.trf.xlu0
      %v947 = vpop.trf.xlu0
      %v948 = vpop.trf.xlu0
      %v949 = vpop.trf.xlu0
      %950 = vxpose.xlu0.b32.start [1/16] %v327, 128
      %951 = vxpose.xlu0.b32.cont [2/16] 0.0, 128
      %952 = vxpose.xlu0.b32.cont [3/16] 0.0, 128
      %953 = vxpose.xlu0.b32.cont [4/16] 0.0, 128
      %954 = vxpose.xlu0.b32.cont [5/16] 0.0, 128
      %955 = vxpose.xlu0.b32.cont [6/16] 0.0, 128
      %956 = vxpose.xlu0.b32.cont [7/16] 0.0, 128
      %957 = vxpose.xlu0.b32.cont [8/16] 0.0, 128
      %958 = vxpose.xlu0.b32.cont [9/16] 0.0, 128
      %959 = vxpose.xlu0.b32.cont [10/16] 0.0, 128
      %960 = vxpose.xlu0.b32.cont [11/16] 0.0, 128
      %961 = vxpose.xlu0.b32.cont [12/16] 0.0, 128
      %962 = vxpose.xlu0.b32.cont [13/16] 0.0, 128
      %963 = vxpose.xlu0.b32.cont [14/16] 0.0, 128
      %964 = vxpose.xlu0.b32.cont [15/16] 0.0, 128
      %965 = vxpose.xlu0.b32.end [16/16] 0.0, 128
      %v966 = vpop.trf.xlu0
      %v967 = vpop.trf.xlu0
      %v968 = vpop.trf.xlu0
      %v969 = vpop.trf.xlu0
      %v970 = vpop.trf.xlu0
      %v971 = vpop.trf.xlu0
      %v972 = vpop.trf.xlu0
      %v973 = vpop.trf.xlu0
      %v974 = vpop.trf.xlu0
      %v975 = vpop.trf.xlu0
      %v976 = vpop.trf.xlu0
      %v977 = vpop.trf.xlu0
      %v978 = vpop.trf.xlu0
      %v979 = vpop.trf.xlu0
      %v980 = vpop.trf.xlu0
      %v981 = vpop.trf.xlu0
      %982 = vxpose.xlu0.b32.start [1/16] %v328, 128
      %983 = vxpose.xlu0.b32.cont [2/16] 0.0, 128
      %984 = vxpose.xlu0.b32.cont [3/16] 0.0, 128
      %985 = vxpose.xlu0.b32.cont [4/16] 0.0, 128
      %986 = vxpose.xlu0.b32.cont [5/16] 0.0, 128
      %987 = vxpose.xlu0.b32.cont [6/16] 0.0, 128
      %988 = vxpose.xlu0.b32.cont [7/16] 0.0, 128
      %989 = vxpose.xlu0.b32.cont [8/16] 0.0, 128
      %990 = vxpose.xlu0.b32.cont [9/16] 0.0, 128
      %991 = vxpose.xlu0.b32.cont [10/16] 0.0, 128
      %992 = vxpose.xlu0.b32.cont [11/16] 0.0, 128
      %993 = vxpose.xlu0.b32.cont [12/16] 0.0, 128
      %994 = vxpose.xlu0.b32.cont [13/16] 0.0, 128
      %995 = vxpose.xlu0.b32.cont [14/16] 0.0, 128
      %996 = vxpose.xlu0.b32.cont [15/16] 0.0, 128
      %997 = vxpose.xlu0.b32.end [16/16] 0.0, 128
      %v998 = vpop.trf.xlu0
      %v999 = vpop.trf.xlu0
      %v1000 = vpop.trf.xlu0
      %v1001 = vpop.trf.xlu0
      %v1002 = vpop.trf.xlu0
      %v1003 = vpop.trf.xlu0
      %v1004 = vpop.trf.xlu0
      %v1005 = vpop.trf.xlu0
      %v1006 = vpop.trf.xlu0
      %v1007 = vpop.trf.xlu0
      %v1008 = vpop.trf.xlu0
      %v1009 = vpop.trf.xlu0
      %v1010 = vpop.trf.xlu0
      %v1011 = vpop.trf.xlu0
      %v1012 = vpop.trf.xlu0
      %v1013 = vpop.trf.xlu0
      %1014 = vxpose.xlu0.b32.start [1/16] %v329, 128
      %1015 = vxpose.xlu0.b32.cont [2/16] 0.0, 128
      %1016 = vxpose.xlu0.b32.cont [3/16] 0.0, 128
      %1017 = vxpose.xlu0.b32.cont [4/16] 0.0, 128
      %1018 = vxpose.xlu0.b32.cont [5/16] 0.0, 128
      %1019 = vxpose.xlu0.b32.cont [6/16] 0.0, 128
      %1020 = vxpose.xlu0.b32.cont [7/16] 0.0, 128
      %1021 = vxpose.xlu0.b32.cont [8/16] 0.0, 128
      %1022 = vxpose.xlu0.b32.cont [9/16] 0.0, 128
      %1023 = vxpose.xlu0.b32.cont [10/16] 0.0, 128
      %1024 = vxpose.xlu0.b32.cont [11/16] 0.0, 128
      %1025 = vxpose.xlu0.b32.cont [12/16] 0.0, 128
      %1026 = vxpose.xlu0.b32.cont [13/16] 0.0, 128
      %1027 = vxpose.xlu0.b32.cont [14/16] 0.0, 128
      %1028 = vxpose.xlu0.b32.cont [15/16] 0.0, 128
      %1029 = vxpose.xlu0.b32.end [16/16] 0.0, 128
      %v1030 = vpop.trf.xlu0
      %v1031 = vpop.trf.xlu0
      %v1032 = vpop.trf.xlu0
      %v1033 = vpop.trf.xlu0
      %v1034 = vpop.trf.xlu0
      %v1035 = vpop.trf.xlu0
      %v1036 = vpop.trf.xlu0
      %v1037 = vpop.trf.xlu0
      %v1038 = vpop.trf.xlu0
      %v1039 = vpop.trf.xlu0
      %v1040 = vpop.trf.xlu0
      %v1041 = vpop.trf.xlu0
      %v1042 = vpop.trf.xlu0
      %v1043 = vpop.trf.xlu0
      %v1044 = vpop.trf.xlu0
      %v1045 = vpop.trf.xlu0
      %vm1046 = vcmask 64512
      %v1048 = vsel %vm1046, %v806, 0
      %v1051 = vsel %vm1046, %v807, 0
      %v1054 = vsel %vm1046, %v808, 0
      %v1057 = vsel %vm1046, %v809, 0
      %v1060 = vsel %vm1046, %v810, 0
      %v1063 = vsel %vm1046, %v811, 0
      %v1066 = vsel %vm1046, %v812, 0
      %v1069 = vsel %vm1046, %v813, 0
      %v1072 = vsel %vm1046, %v814, 0
      %v1075 = vsel %vm1046, %v815, 0
      %v1078 = vsel %vm1046, %v816, 0
      %v1081 = vsel %vm1046, %v817, 0
      %v1084 = vsel %vm1046, %v818, 0
      %v1087 = vsel %vm1046, %v819, 0
      %v1090 = vsel %vm1046, %v820, 0
      %v1093 = vsel %vm1046, %v821, 0
      %v1096 = vsel %vm1046, %v838, 0
      %v1099 = vsel %vm1046, %v839, 0
      %v1102 = vsel %vm1046, %v840, 0
      %v1105 = vsel %vm1046, %v841, 0
      %v1108 = vsel %vm1046, %v842, 0
      %v1111 = vsel %vm1046, %v843, 0
      %v1114 = vsel %vm1046, %v844, 0
      %v1117 = vsel %vm1046, %v845, 0
      %v1120 = vsel %vm1046, %v846, 0
      %v1123 = vsel %vm1046, %v847, 0
      %v1126 = vsel %vm1046, %v848, 0
      %v1129 = vsel %vm1046, %v849, 0
      %v1132 = vsel %vm1046, %v850, 0
      %v1135 = vsel %vm1046, %v851, 0
      %v1138 = vsel %vm1046, %v852, 0
      %v1141 = vsel %vm1046, %v853, 0
      %v1144 = vsel %vm1046, %v870, 0
      %v1147 = vsel %vm1046, %v871, 0
      %v1150 = vsel %vm1046, %v872, 0
      %v1153 = vsel %vm1046, %v873, 0
      %v1156 = vsel %vm1046, %v874, 0
      %v1159 = vsel %vm1046, %v875, 0
      %v1162 = vsel %vm1046, %v876, 0
      %v1165 = vsel %vm1046, %v877, 0
      %v1168 = vsel %vm1046, %v878, 0
      %v1171 = vsel %vm1046, %v879, 0
      %v1174 = vsel %vm1046, %v880, 0
      %v1177 = vsel %vm1046, %v881, 0
      %v1180 = vsel %vm1046, %v882, 0
      %v1183 = vsel %vm1046, %v883, 0
      %v1186 = vsel %vm1046, %v884, 0
      %v1189 = vsel %vm1046, %v885, 0
      %v1192 = vsel %vm1046, %v902, 0
      %v1195 = vsel %vm1046, %v903, 0
      %v1198 = vsel %vm1046, %v904, 0
      %v1201 = vsel %vm1046, %v905, 0
      %v1204 = vsel %vm1046, %v906, 0
      %v1207 = vsel %vm1046, %v907, 0
      %v1210 = vsel %vm1046, %v908, 0
      %v1213 = vsel %vm1046, %v909, 0
      %v1216 = vsel %vm1046, %v910, 0
      %v1219 = vsel %vm1046, %v911, 0
      %v1222 = vsel %vm1046, %v912, 0
      %v1225 = vsel %vm1046, %v913, 0
      %v1228 = vsel %vm1046, %v914, 0
      %v1231 = vsel %vm1046, %v915, 0
      %v1234 = vsel %vm1046, %v916, 0
      %v1237 = vsel %vm1046, %v917, 0
      %v1240 = vsel %vm1046, %v934, 0
      %v1243 = vsel %vm1046, %v935, 0
      %v1246 = vsel %vm1046, %v936, 0
      %v1249 = vsel %vm1046, %v937, 0
      %v1252 = vsel %vm1046, %v938, 0
      %v1255 = vsel %vm1046, %v939, 0
      %v1258 = vsel %vm1046, %v940, 0
      %v1261 = vsel %vm1046, %v941, 0
      %v1264 = vsel %vm1046, %v942, 0
      %v1267 = vsel %vm1046, %v943, 0
      %v1270 = vsel %vm1046, %v944, 0
      %v1273 = vsel %vm1046, %v945, 0
      %v1276 = vsel %vm1046, %v946, 0
      %v1279 = vsel %vm1046, %v947, 0
      %v1282 = vsel %vm1046, %v948, 0
      %v1285 = vsel %vm1046, %v949, 0
      %v1288 = vsel %vm1046, %v966, 0
      %v1291 = vsel %vm1046, %v967, 0
      %v1294 = vsel %vm1046, %v968, 0
      %v1297 = vsel %vm1046, %v969, 0
      %v1300 = vsel %vm1046, %v970, 0
      %v1303 = vsel %vm1046, %v971, 0
      %v1306 = vsel %vm1046, %v972, 0
      %v1309 = vsel %vm1046, %v973, 0
      %v1312 = vsel %vm1046, %v974, 0
      %v1315 = vsel %vm1046, %v975, 0
      %v1318 = vsel %vm1046, %v976, 0
      %v1321 = vsel %vm1046, %v977, 0
      %v1324 = vsel %vm1046, %v978, 0
      %v1327 = vsel %vm1046, %v979, 0
      %v1330 = vsel %vm1046, %v980, 0
      %v1333 = vsel %vm1046, %v981, 0
      %v1336 = vsel %vm1046, %v998, 0
      %v1339 = vsel %vm1046, %v999, 0
      %v1342 = vsel %vm1046, %v1000, 0
      %v1345 = vsel %vm1046, %v1001, 0
      %v1348 = vsel %vm1046, %v1002, 0
      %v1351 = vsel %vm1046, %v1003, 0
      %v1354 = vsel %vm1046, %v1004, 0
      %v1357 = vsel %vm1046, %v1005, 0
      %v1360 = vsel %vm1046, %v1006, 0
      %v1363 = vsel %vm1046, %v1007, 0
      %v1366 = vsel %vm1046, %v1008, 0
      %v1369 = vsel %vm1046, %v1009, 0
      %v1372 = vsel %vm1046, %v1010, 0
      %v1375 = vsel %vm1046, %v1011, 0
      %v1378 = vsel %vm1046, %v1012, 0
      %v1381 = vsel %vm1046, %v1013, 0
      %v1384 = vsel %vm1046, %v1030, 0
      %v1387 = vsel %vm1046, %v1031, 0
      %v1390 = vsel %vm1046, %v1032, 0
      %v1393 = vsel %vm1046, %v1033, 0
      %v1396 = vsel %vm1046, %v1034, 0
      %v1399 = vsel %vm1046, %v1035, 0
      %v1402 = vsel %vm1046, %v1036, 0
      %v1405 = vsel %vm1046, %v1037, 0
      %v1408 = vsel %vm1046, %v1038, 0
      %v1411 = vsel %vm1046, %v1039, 0
      %v1414 = vsel %vm1046, %v1040, 0
      %v1417 = vsel %vm1046, %v1041, 0
      %v1420 = vsel %vm1046, %v1042, 0
      %v1423 = vsel %vm1046, %v1043, 0
      %v1426 = vsel %vm1046, %v1044, 0
      %v1429 = vsel %vm1046, %v1045, 0
      %1431 = vmatprep.subr.mxu0 0.0
      %1432 = vmatpush1.msra.mxu0 %v789
      %1433 = vmatprep.subr.mxu0 0.0
      %1434 = vmatpush1.msra.mxu0 0.0
      %1435 = vmatprep.subr.mxu0 0.0
      %1436 = vmatpush1.msra.mxu0 0.0
      %1437 = vmatprep.subr.mxu0 0.0
      %1438 = vmatpush1.msra.mxu0 0.0
      %1439 = vmatprep.subr.mxu0 0.0
      %1440 = vmatpush1.msra.mxu0 0.0
      %1441 = vmatprep.subr.mxu0 0.0
      %1442 = vmatpush1.msra.mxu0 0.0
      %1443 = vmatprep.subr.mxu0 0.0
      %1444 = vmatpush1.msra.mxu0 0.0
      %1445 = vmatprep.subr.mxu0 0.0
      %1446 = vmatpush1.msra.mxu0 0.0
      %1447 = vmatprep.subr.mxu0 0.0
      %1448 = vmatpush1.msra.mxu0 0.0
      %1449 = vmatprep.subr.mxu0 0.0
      %1450 = vmatpush1.msra.mxu0 0.0
      %1451 = vmatprep.subr.mxu0 0.0
      %1452 = vmatpush1.msra.mxu0 0.0
      %1453 = vmatprep.subr.mxu0 0.0
      %1454 = vmatpush1.msra.mxu0 0.0
      %1455 = vmatprep.subr.mxu0 0.0
      %1456 = vmatpush1.msra.mxu0 0.0
      %1457 = vmatprep.subr.mxu0 0.0
      %1458 = vmatpush1.msra.mxu0 0.0
      %1459 = vmatprep.subr.mxu0 0.0
      %1460 = vmatpush1.msra.mxu0 0.0
      %1461 = vmatprep.subr.mxu0 0.0
      %1462 = vmatpush1.msra.mxu0 0.0
      %1463 = vmatprep.subr.mxu0 0.0
      %1464 = vmatpush1.msra.mxu0 0.0
      %1465 = vmatprep.subr.mxu0 0.0
      %1466 = vmatpush1.msra.mxu0 0.0
      %1467 = vmatprep.subr.mxu0 0.0
      %1468 = vmatpush1.msra.mxu0 0.0
      %1469 = vmatprep.subr.mxu0 0.0
      %1470 = vmatpush1.msra.mxu0 0.0
      %1471 = vmatprep.subr.mxu0 0.0
      %1472 = vmatpush1.msra.mxu0 0.0
      %1473 = vmatprep.subr.mxu0 0.0
      %1474 = vmatpush1.msra.mxu0 0.0
      %1475 = vmatprep.subr.mxu0 0.0
      %1476 = vmatpush1.msra.mxu0 0.0
      %1477 = vmatprep.subr.mxu0 0.0
      %1478 = vmatpush1.msra.mxu0 0.0
      %1479 = vmatprep.subr.mxu0 0.0
      %1480 = vmatpush1.msra.mxu0 0.0
      %1481 = vmatprep.subr.mxu0 0.0
      %1482 = vmatpush1.msra.mxu0 0.0
      %1483 = vmatprep.subr.mxu0 0.0
      %1484 = vmatpush1.msra.mxu0 0.0
      %1485 = vmatprep.subr.mxu0 0.0
      %1486 = vmatpush1.msra.mxu0 0.0
      %1487 = vmatprep.subr.mxu0 0.0
      %1488 = vmatpush1.msra.mxu0 0.0
      %1489 = vmatprep.subr.mxu0 0.0
      %1490 = vmatpush1.msra.mxu0 0.0
      %1491 = vmatprep.subr.mxu0 0.0
      %1492 = vmatpush1.msra.mxu0 0.0
      %1493 = vmatprep.subr.mxu0 0.0
      %1494 = vmatpush1.msra.mxu0 0.0
      %1495 = vmatprep.mubr.f32.mxu0 0.0
      %1496 = vmatmul.mubr.f32.gmra.mrb[0].mxu0 %v1048
      %v1497 = vpop.f32.mrb[0].mxu0
      %v1498 = vadd.f32 0.0, %v1497
      %v1499 = vpop.f32.mrb[0].mxu0
      %1500 = vmatprep.mubr.f32.mxu0 0.0
      %1501 = vmatmul.mubr.f32.gmra.mrb[0].mxu0 %v1051
      %v1502 = vpop.f32.mrb[0].mxu0
      %v1503 = vadd.f32 0.0, %v1502
      %v1504 = vpop.f32.mrb[0].mxu0
      %1505 = vmatprep.mubr.f32.mxu0 0.0
      %1506 = vmatmul.mubr.f32.gmra.mrb[0].mxu0 %v1054
      %v1507 = vpop.f32.mrb[0].mxu0
      %v1508 = vadd.f32 0.0, %v1507
      %v1509 = vpop.f32.mrb[0].mxu0
      %1510 = vmatprep.mubr.f32.mxu0 0.0
      %1511 = vmatmul.mubr.f32.gmra.mrb[0].mxu0 %v1057
      %v1512 = vpop.f32.mrb[0].mxu0
      %v1513 = vadd.f32 0.0, %v1512
      %v1514 = vpop.f32.mrb[0].mxu0
      %1515 = vmatprep.mubr.f32.mxu0 0.0
      %1516 = vmatmul.mubr.f32.gmra.mrb[0].mxu0 %v1060
      %v1517 = vpop.f32.mrb[0].mxu0
      %v1518 = vadd.f32 0.0, %v1517
      %v1519 = vpop.f32.mrb[0].mxu0
      %1520 = vmatprep.mubr.f32.mxu0 0.0
      %1521 = vmatmul.mubr.f32.gmra.mrb[0].mxu0 %v1063
      %v1522 = vpop.f32.mrb[0].mxu0
      %v1523 = vadd.f32 0.0, %v1522
      %v1524 = vpop.f32.mrb[0].mxu0
      %1525 = vmatprep.mubr.f32.mxu0 0.0
      %1526 = vmatmul.mubr.f32.gmra.mrb[0].mxu0 %v1066
      %v1527 = vpop.f32.mrb[0].mxu0
      %v1528 = vadd.f32 0.0, %v1527
      %v1529 = vpop.f32.mrb[0].mxu0
      %1530 = vmatprep.mubr.f32.mxu0 0.0
      %1531 = vmatmul.mubr.f32.gmra.mrb[0].mxu0 %v1069
      %v1532 = vpop.f32.mrb[0].mxu0
      %v1533 = vadd.f32 0.0, %v1532
      %v1534 = vpop.f32.mrb[0].mxu0
      %1535 = vmatprep.mubr.f32.mxu0 0.0
      %1536 = vmatmul.mubr.f32.gmra.mrb[0].mxu0 %v1072
      %v1537 = vpop.f32.mrb[0].mxu0
      %v1538 = vadd.f32 0.0, %v1537
      %v1539 = vpop.f32.mrb[0].mxu0
      %1540 = vmatprep.mubr.f32.mxu0 0.0
      %1541 = vmatmul.mubr.f32.gmra.mrb[0].mxu0 %v1075
      %v1542 = vpop.f32.mrb[0].mxu0
      %v1543 = vadd.f32 0.0, %v1542
      %v1544 = vpop.f32.mrb[0].mxu0
      %1545 = vmatprep.mubr.f32.mxu0 0.0
      %1546 = vmatmul.mubr.f32.gmra.mrb[0].mxu0 %v1078
      %v1547 = vpop.f32.mrb[0].mxu0
      %v1548 = vadd.f32 0.0, %v1547
      %v1549 = vpop.f32.mrb[0].mxu0
      %1550 = vmatprep.mubr.f32.mxu0 0.0
      %1551 = vmatmul.mubr.f32.gmra.mrb[0].mxu0 %v1081
      %v1552 = vpop.f32.mrb[0].mxu0
      %v1553 = vadd.f32 0.0, %v1552
      %v1554 = vpop.f32.mrb[0].mxu0
      %1555 = vmatprep.mubr.f32.mxu0 0.0
      %1556 = vmatmul.mubr.f32.gmra.mrb[0].mxu0 %v1084
      %v1557 = vpop.f32.mrb[0].mxu0
      %v1558 = vadd.f32 0.0, %v1557
      %v1559 = vpop.f32.mrb[0].mxu0
      %1560 = vmatprep.mubr.f32.mxu0 0.0
      %1561 = vmatmul.mubr.f32.gmra.mrb[0].mxu0 %v1087
      %v1562 = vpop.f32.mrb[0].mxu0
      %v1563 = vadd.f32 0.0, %v1562
      %v1564 = vpop.f32.mrb[0].mxu0
      %1565 = vmatprep.mubr.f32.mxu0 0.0
      %1566 = vmatmul.mubr.f32.gmra.mrb[0].mxu0 %v1090
      %v1567 = vpop.f32.mrb[0].mxu0
      %v1568 = vadd.f32 0.0, %v1567
      %v1569 = vpop.f32.mrb[0].mxu0
      %1570 = vmatprep.mubr.f32.mxu0 0.0
      %1571 = vmatmul.mubr.f32.gmra.mrb[0].mxu0 %v1093
      %v1572 = vpop.f32.mrb[0].mxu0
      %v1573 = vadd.f32 0.0, %v1572
      %v1574 = vpop.f32.mrb[0].mxu0
      %1575 = vmatprep.mubr.f32.mxu0 0.0
      %1576 = vmatmul.mubr.f32.gmra.mrb[0].mxu0 %v1096
      %v1577 = vpop.f32.mrb[0].mxu0
      %v1578 = vadd.f32 0.0, %v1577
      %v1579 = vpop.f32.mrb[0].mxu0
      %1580 = vmatprep.mubr.f32.mxu0 0.0
      %1581 = vmatmul.mubr.f32.gmra.mrb[0].mxu0 %v1099
      %v1582 = vpop.f32.mrb[0].mxu0
      %v1583 = vadd.f32 0.0, %v1582
      %v1584 = vpop.f32.mrb[0].mxu0
      %1585 = vmatprep.mubr.f32.mxu0 0.0
      %1586 = vmatmul.mubr.f32.gmra.mrb[0].mxu0 %v1102
      %v1587 = vpop.f32.mrb[0].mxu0
      %v1588 = vadd.f32 0.0, %v1587
      %v1589 = vpop.f32.mrb[0].mxu0
      %1590 = vmatprep.mubr.f32.mxu0 0.0
      %1591 = vmatmul.mubr.f32.gmra.mrb[0].mxu0 %v1105
      %v1592 = vpop.f32.mrb[0].mxu0
      %v1593 = vadd.f32 0.0, %v1592
      %v1594 = vpop.f32.mrb[0].mxu0
      %1595 = vmatprep.mubr.f32.mxu0 0.0
      %1596 = vmatmul.mubr.f32.gmra.mrb[0].mxu0 %v1108
      %v1597 = vpop.f32.mrb[0].mxu0
      %v1598 = vadd.f32 0.0, %v1597
      %v1599 = vpop.f32.mrb[0].mxu0
      %1600 = vmatprep.mubr.f32.mxu0 0.0
      %1601 = vmatmul.mubr.f32.gmra.mrb[0].mxu0 %v1111
      %v1602 = vpop.f32.mrb[0].mxu0
      %v1603 = vadd.f32 0.0, %v1602
      %v1604 = vpop.f32.mrb[0].mxu0
      %1605 = vmatprep.mubr.f32.mxu0 0.0
      %1606 = vmatmul.mubr.f32.gmra.mrb[0].mxu0 %v1114
      %v1607 = vpop.f32.mrb[0].mxu0
      %v1608 = vadd.f32 0.0, %v1607
      %v1609 = vpop.f32.mrb[0].mxu0
      %1610 = vmatprep.mubr.f32.mxu0 0.0
      %1611 = vmatmul.mubr.f32.gmra.mrb[0].mxu0 %v1117
      %v1612 = vpop.f32.mrb[0].mxu0
      %v1613 = vadd.f32 0.0, %v1612
      %v1614 = vpop.f32.mrb[0].mxu0
      %1615 = vmatprep.mubr.f32.mxu0 0.0
      %1616 = vmatmul.mubr.f32.gmra.mrb[0].mxu0 %v1120
      %v1617 = vpop.f32.mrb[0].mxu0
      %v1618 = vadd.f32 0.0, %v1617
      %v1619 = vpop.f32.mrb[0].mxu0
      %1620 = vmatprep.mubr.f32.mxu0 0.0
      %1621 = vmatmul.mubr.f32.gmra.mrb[0].mxu0 %v1123
      %v1622 = vpop.f32.mrb[0].mxu0
      %v1623 = vadd.f32 0.0, %v1622
      %v1624 = vpop.f32.mrb[0].mxu0
      %1625 = vmatprep.mubr.f32.mxu0 0.0
      %1626 = vmatmul.mubr.f32.gmra.mrb[0].mxu0 %v1126
      %v1627 = vpop.f32.mrb[0].mxu0
      %v1628 = vadd.f32 0.0, %v1627
      %v1629 = vpop.f32.mrb[0].mxu0
      %1630 = vmatprep.mubr.f32.mxu0 0.0
      %1631 = vmatmul.mubr.f32.gmra.mrb[0].mxu0 %v1129
      %v1632 = vpop.f32.mrb[0].mxu0
      %v1633 = vadd.f32 0.0, %v1632
      %v1634 = vpop.f32.mrb[0].mxu0
      %1635 = vmatprep.mubr.f32.mxu0 0.0
      %1636 = vmatmul.mubr.f32.gmra.mrb[0].mxu0 %v1132
      %v1637 = vpop.f32.mrb[0].mxu0
      %v1638 = vadd.f32 0.0, %v1637
      %v1639 = vpop.f32.mrb[0].mxu0
      %1640 = vmatprep.mubr.f32.mxu0 0.0
      %1641 = vmatmul.mubr.f32.gmra.mrb[0].mxu0 %v1135
      %v1642 = vpop.f32.mrb[0].mxu0
      %v1643 = vadd.f32 0.0, %v1642
      %v1644 = vpop.f32.mrb[0].mxu0
      %1645 = vmatprep.mubr.f32.mxu0 0.0
      %1646 = vmatmul.mubr.f32.gmra.mrb[0].mxu0 %v1138
      %v1647 = vpop.f32.mrb[0].mxu0
      %v1648 = vadd.f32 0.0, %v1647
      %v1649 = vpop.f32.mrb[0].mxu0
      %1650 = vmatprep.mubr.f32.mxu0 0.0
      %1651 = vmatmul.mubr.f32.gmra.mrb[0].mxu0 %v1141
      %v1652 = vpop.f32.mrb[0].mxu0
      %v1653 = vadd.f32 0.0, %v1652
      %v1654 = vpop.f32.mrb[0].mxu0
      %1655 = vmatprep.mubr.f32.mxu0 0.0
      %1656 = vmatmul.mubr.f32.gmra.mrb[0].mxu0 %v1144
      %v1657 = vpop.f32.mrb[0].mxu0
      %v1658 = vadd.f32 0.0, %v1657
      %v1659 = vpop.f32.mrb[0].mxu0
      %1660 = vmatprep.mubr.f32.mxu0 0.0
      %1661 = vmatmul.mubr.f32.gmra.mrb[0].mxu0 %v1147
      %v1662 = vpop.f32.mrb[0].mxu0
      %v1663 = vadd.f32 0.0, %v1662
      %v1664 = vpop.f32.mrb[0].mxu0
      %1665 = vmatprep.mubr.f32.mxu0 0.0
      %1666 = vmatmul.mubr.f32.gmra.mrb[0].mxu0 %v1150
      %v1667 = vpop.f32.mrb[0].mxu0
      %v1668 = vadd.f32 0.0, %v1667
      %v1669 = vpop.f32.mrb[0].mxu0
      %1670 = vmatprep.mubr.f32.mxu0 0.0
      %1671 = vmatmul.mubr.f32.gmra.mrb[0].mxu0 %v1153
      %v1672 = vpop.f32.mrb[0].mxu0
      %v1673 = vadd.f32 0.0, %v1672
      %v1674 = vpop.f32.mrb[0].mxu0
      %1675 = vmatprep.mubr.f32.mxu0 0.0
      %1676 = vmatmul.mubr.f32.gmra.mrb[0].mxu0 %v1156
      %v1677 = vpop.f32.mrb[0].mxu0
      %v1678 = vadd.f32 0.0, %v1677
      %v1679 = vpop.f32.mrb[0].mxu0
      %1680 = vmatprep.mubr.f32.mxu0 0.0
      %1681 = vmatmul.mubr.f32.gmra.mrb[0].mxu0 %v1159
      %v1682 = vpop.f32.mrb[0].mxu0
      %v1683 = vadd.f32 0.0, %v1682
      %v1684 = vpop.f32.mrb[0].mxu0
      %1685 = vmatprep.mubr.f32.mxu0 0.0
      %1686 = vmatmul.mubr.f32.gmra.mrb[0].mxu0 %v1162
      %v1687 = vpop.f32.mrb[0].mxu0
      %v1688 = vadd.f32 0.0, %v1687
      %v1689 = vpop.f32.mrb[0].mxu0
      %1690 = vmatprep.mubr.f32.mxu0 0.0
      %1691 = vmatmul.mubr.f32.gmra.mrb[0].mxu0 %v1165
      %v1692 = vpop.f32.mrb[0].mxu0
      %v1693 = vadd.f32 0.0, %v1692
      %v1694 = vpop.f32.mrb[0].mxu0
      %1695 = vmatprep.mubr.f32.mxu0 0.0
      %1696 = vmatmul.mubr.f32.gmra.mrb[0].mxu0 %v1168
      %v1697 = vpop.f32.mrb[0].mxu0
      %v1698 = vadd.f32 0.0, %v1697
      %v1699 = vpop.f32.mrb[0].mxu0
      %1700 = vmatprep.mubr.f32.mxu0 0.0
      %1701 = vmatmul.mubr.f32.gmra.mrb[0].mxu0 %v1171
      %v1702 = vpop.f32.mrb[0].mxu0
      %v1703 = vadd.f32 0.0, %v1702
      %v1704 = vpop.f32.mrb[0].mxu0
      %1705 = vmatprep.mubr.f32.mxu0 0.0
      %1706 = vmatmul.mubr.f32.gmra.mrb[0].mxu0 %v1174
      %v1707 = vpop.f32.mrb[0].mxu0
      %v1708 = vadd.f32 0.0, %v1707
      %v1709 = vpop.f32.mrb[0].mxu0
      %1710 = vmatprep.mubr.f32.mxu0 0.0
      %1711 = vmatmul.mubr.f32.gmra.mrb[0].mxu0 %v1177
      %v1712 = vpop.f32.mrb[0].mxu0
      %v1713 = vadd.f32 0.0, %v1712
      %v1714 = vpop.f32.mrb[0].mxu0
      %1715 = vmatprep.mubr.f32.mxu0 0.0
      %1716 = vmatmul.mubr.f32.gmra.mrb[0].mxu0 %v1180
      %v1717 = vpop.f32.mrb[0].mxu0
      %v1718 = vadd.f32 0.0, %v1717
      %v1719 = vpop.f32.mrb[0].mxu0
      %1720 = vmatprep.mubr.f32.mxu0 0.0
      %1721 = vmatmul.mubr.f32.gmra.mrb[0].mxu0 %v1183
      %v1722 = vpop.f32.mrb[0].mxu0
      %v1723 = vadd.f32 0.0, %v1722
      %v1724 = vpop.f32.mrb[0].mxu0
      %1725 = vmatprep.mubr.f32.mxu0 0.0
      %1726 = vmatmul.mubr.f32.gmra.mrb[0].mxu0 %v1186
      %v1727 = vpop.f32.mrb[0].mxu0
      %v1728 = vadd.f32 0.0, %v1727
      %v1729 = vpop.f32.mrb[0].mxu0
      %1730 = vmatprep.mubr.f32.mxu0 0.0
      %1731 = vmatmul.mubr.f32.gmra.mrb[0].mxu0 %v1189
      %v1732 = vpop.f32.mrb[0].mxu0
      %v1733 = vadd.f32 0.0, %v1732
      %v1734 = vpop.f32.mrb[0].mxu0
      %1735 = vmatprep.mubr.f32.mxu0 0.0
      %1736 = vmatmul.mubr.f32.gmra.mrb[0].mxu0 %v1192
      %v1737 = vpop.f32.mrb[0].mxu0
      %v1738 = vadd.f32 0.0, %v1737
      %v1739 = vpop.f32.mrb[0].mxu0
      %1740 = vmatprep.mubr.f32.mxu0 0.0
      %1741 = vmatmul.mubr.f32.gmra.mrb[0].mxu0 %v1195
      %v1742 = vpop.f32.mrb[0].mxu0
      %v1743 = vadd.f32 0.0, %v1742
      %v1744 = vpop.f32.mrb[0].mxu0
      %1745 = vmatprep.mubr.f32.mxu0 0.0
      %1746 = vmatmul.mubr.f32.gmra.mrb[0].mxu0 %v1198
      %v1747 = vpop.f32.mrb[0].mxu0
      %v1748 = vadd.f32 0.0, %v1747
      %v1749 = vpop.f32.mrb[0].mxu0
      %1750 = vmatprep.mubr.f32.mxu0 0.0
      %1751 = vmatmul.mubr.f32.gmra.mrb[0].mxu0 %v1201
      %v1752 = vpop.f32.mrb[0].mxu0
      %v1753 = vadd.f32 0.0, %v1752
      %v1754 = vpop.f32.mrb[0].mxu0
      %1755 = vmatprep.mubr.f32.mxu0 0.0
      %1756 = vmatmul.mubr.f32.gmra.mrb[0].mxu0 %v1204
      %v1757 = vpop.f32.mrb[0].mxu0
      %v1758 = vadd.f32 0.0, %v1757
      %v1759 = vpop.f32.mrb[0].mxu0
      %1760 = vmatprep.mubr.f32.mxu0 0.0
      %1761 = vmatmul.mubr.f32.gmra.mrb[0].mxu0 %v1207
      %v1762 = vpop.f32.mrb[0].mxu0
      %v1763 = vadd.f32 0.0, %v1762
      %v1764 = vpop.f32.mrb[0].mxu0
      %1765 = vmatprep.mubr.f32.mxu0 0.0
      %1766 = vmatmul.mubr.f32.gmra.mrb[0].mxu0 %v1210
      %v1767 = vpop.f32.mrb[0].mxu0
      %v1768 = vadd.f32 0.0, %v1767
      %v1769 = vpop.f32.mrb[0].mxu0
      %1770 = vmatprep.mubr.f32.mxu0 0.0
      %1771 = vmatmul.mubr.f32.gmra.mrb[0].mxu0 %v1213
      %v1772 = vpop.f32.mrb[0].mxu0
      %v1773 = vadd.f32 0.0, %v1772
      %v1774 = vpop.f32.mrb[0].mxu0
      %1775 = vmatprep.mubr.f32.mxu0 0.0
      %1776 = vmatmul.mubr.f32.gmra.mrb[0].mxu0 %v1216
      %v1777 = vpop.f32.mrb[0].mxu0
      %v1778 = vadd.f32 0.0, %v1777
      %v1779 = vpop.f32.mrb[0].mxu0
      %1780 = vmatprep.mubr.f32.mxu0 0.0
      %1781 = vmatmul.mubr.f32.gmra.mrb[0].mxu0 %v1219
      %v1782 = vpop.f32.mrb[0].mxu0
      %v1783 = vadd.f32 0.0, %v1782
      %v1784 = vpop.f32.mrb[0].mxu0
      %1785 = vmatprep.mubr.f32.mxu0 0.0
      %1786 = vmatmul.mubr.f32.gmra.mrb[0].mxu0 %v1222
      %v1787 = vpop.f32.mrb[0].mxu0
      %v1788 = vadd.f32 0.0, %v1787
      %v1789 = vpop.f32.mrb[0].mxu0
      %1790 = vmatprep.mubr.f32.mxu0 0.0
      %1791 = vmatmul.mubr.f32.gmra.mrb[0].mxu0 %v1225
      %v1792 = vpop.f32.mrb[0].mxu0
      %v1793 = vadd.f32 0.0, %v1792
      %v1794 = vpop.f32.mrb[0].mxu0
      %1795 = vmatprep.mubr.f32.mxu0 0.0
      %1796 = vmatmul.mubr.f32.gmra.mrb[0].mxu0 %v1228
      %v1797 = vpop.f32.mrb[0].mxu0
      %v1798 = vadd.f32 0.0, %v1797
      %v1799 = vpop.f32.mrb[0].mxu0
      %1800 = vmatprep.mubr.f32.mxu0 0.0
      %1801 = vmatmul.mubr.f32.gmra.mrb[0].mxu0 %v1231
      %v1802 = vpop.f32.mrb[0].mxu0
      %v1803 = vadd.f32 0.0, %v1802
      %v1804 = vpop.f32.mrb[0].mxu0
      %1805 = vmatprep.mubr.f32.mxu0 0.0
      %1806 = vmatmul.mubr.f32.gmra.mrb[0].mxu0 %v1234
      %v1807 = vpop.f32.mrb[0].mxu0
      %v1808 = vadd.f32 0.0, %v1807
      %v1809 = vpop.f32.mrb[0].mxu0
      %1810 = vmatprep.mubr.f32.mxu0 0.0
      %1811 = vmatmul.mubr.f32.gmra.mrb[0].mxu0 %v1237
      %v1812 = vpop.f32.mrb[0].mxu0
      %v1813 = vadd.f32 0.0, %v1812
      %v1814 = vpop.f32.mrb[0].mxu0
      %1815 = vmatprep.mubr.f32.mxu0 0.0
      %1816 = vmatmul.mubr.f32.gmra.mrb[0].mxu0 %v1240
      %v1817 = vpop.f32.mrb[0].mxu0
      %v1818 = vadd.f32 0.0, %v1817
      %v1819 = vpop.f32.mrb[0].mxu0
      %1820 = vmatprep.mubr.f32.mxu0 0.0
      %1821 = vmatmul.mubr.f32.gmra.mrb[0].mxu0 %v1243
      %v1822 = vpop.f32.mrb[0].mxu0
      %v1823 = vadd.f32 0.0, %v1822
      %v1824 = vpop.f32.mrb[0].mxu0
      %1825 = vmatprep.mubr.f32.mxu0 0.0
      %1826 = vmatmul.mubr.f32.gmra.mrb[0].mxu0 %v1246
      %v1827 = vpop.f32.mrb[0].mxu0
      %v1828 = vadd.f32 0.0, %v1827
      %v1829 = vpop.f32.mrb[0].mxu0
      %1830 = vmatprep.mubr.f32.mxu0 0.0
      %1831 = vmatmul.mubr.f32.gmra.mrb[0].mxu0 %v1249
      %v1832 = vpop.f32.mrb[0].mxu0
      %v1833 = vadd.f32 0.0, %v1832
      %v1834 = vpop.f32.mrb[0].mxu0
      %1835 = vmatprep.mubr.f32.mxu0 0.0
      %1836 = vmatmul.mubr.f32.gmra.mrb[0].mxu0 %v1252
      %v1837 = vpop.f32.mrb[0].mxu0
      %v1838 = vadd.f32 0.0, %v1837
      %v1839 = vpop.f32.mrb[0].mxu0
      %1840 = vmatprep.mubr.f32.mxu0 0.0
      %1841 = vmatmul.mubr.f32.gmra.mrb[0].mxu0 %v1255
      %v1842 = vpop.f32.mrb[0].mxu0
      %v1843 = vadd.f32 0.0, %v1842
      %v1844 = vpop.f32.mrb[0].mxu0
      %1845 = vmatprep.mubr.f32.mxu0 0.0
      %1846 = vmatmul.mubr.f32.gmra.mrb[0].mxu0 %v1258
      %v1847 = vpop.f32.mrb[0].mxu0
      %v1848 = vadd.f32 0.0, %v1847
      %v1849 = vpop.f32.mrb[0].mxu0
      %1850 = vmatprep.mubr.f32.mxu0 0.0
      %1851 = vmatmul.mubr.f32.gmra.mrb[0].mxu0 %v1261
      %v1852 = vpop.f32.mrb[0].mxu0
      %v1853 = vadd.f32 0.0, %v1852
      %v1854 = vpop.f32.mrb[0].mxu0
      %1855 = vmatprep.mubr.f32.mxu0 0.0
      %1856 = vmatmul.mubr.f32.gmra.mrb[0].mxu0 %v1264
      %v1857 = vpop.f32.mrb[0].mxu0
      %v1858 = vadd.f32 0.0, %v1857
      %v1859 = vpop.f32.mrb[0].mxu0
      %1860 = vmatprep.mubr.f32.mxu0 0.0
      %1861 = vmatmul.mubr.f32.gmra.mrb[0].mxu0 %v1267
      %v1862 = vpop.f32.mrb[0].mxu0
      %v1863 = vadd.f32 0.0, %v1862
      %v1864 = vpop.f32.mrb[0].mxu0
      %1865 = vmatprep.mubr.f32.mxu0 0.0
      %1866 = vmatmul.mubr.f32.gmra.mrb[0].mxu0 %v1270
      %v1867 = vpop.f32.mrb[0].mxu0
      %v1868 = vadd.f32 0.0, %v1867
      %v1869 = vpop.f32.mrb[0].mxu0
      %1870 = vmatprep.mubr.f32.mxu0 0.0
      %1871 = vmatmul.mubr.f32.gmra.mrb[0].mxu0 %v1273
      %v1872 = vpop.f32.mrb[0].mxu0
      %v1873 = vadd.f32 0.0, %v1872
      %v1874 = vpop.f32.mrb[0].mxu0
      %1875 = vmatprep.mubr.f32.mxu0 0.0
      %1876 = vmatmul.mubr.f32.gmra.mrb[0].mxu0 %v1276
      %v1877 = vpop.f32.mrb[0].mxu0
      %v1878 = vadd.f32 0.0, %v1877
      %v1879 = vpop.f32.mrb[0].mxu0
      %1880 = vmatprep.mubr.f32.mxu0 0.0
      %1881 = vmatmul.mubr.f32.gmra.mrb[0].mxu0 %v1279
      %v1882 = vpop.f32.mrb[0].mxu0
      %v1883 = vadd.f32 0.0, %v1882
      %v1884 = vpop.f32.mrb[0].mxu0
      %1885 = vmatprep.mubr.f32.mxu0 0.0
      %1886 = vmatmul.mubr.f32.gmra.mrb[0].mxu0 %v1282
      %v1887 = vpop.f32.mrb[0].mxu0
      %v1888 = vadd.f32 0.0, %v1887
      %v1889 = vpop.f32.mrb[0].mxu0
      %1890 = vmatprep.mubr.f32.mxu0 0.0
      %1891 = vmatmul.mubr.f32.gmra.mrb[0].mxu0 %v1285
      %v1892 = vpop.f32.mrb[0].mxu0
      %v1893 = vadd.f32 0.0, %v1892
      %v1894 = vpop.f32.mrb[0].mxu0
      %1895 = vmatprep.mubr.f32.mxu0 0.0
      %1896 = vmatmul.mubr.f32.gmra.mrb[0].mxu0 %v1288
      %v1897 = vpop.f32.mrb[0].mxu0
      %v1898 = vadd.f32 0.0, %v1897
      %v1899 = vpop.f32.mrb[0].mxu0
      %1900 = vmatprep.mubr.f32.mxu0 0.0
      %1901 = vmatmul.mubr.f32.gmra.mrb[0].mxu0 %v1291
      %v1902 = vpop.f32.mrb[0].mxu0
      %v1903 = vadd.f32 0.0, %v1902
      %v1904 = vpop.f32.mrb[0].mxu0
      %1905 = vmatprep.mubr.f32.mxu0 0.0
      %1906 = vmatmul.mubr.f32.gmra.mrb[0].mxu0 %v1294
      %v1907 = vpop.f32.mrb[0].mxu0
      %v1908 = vadd.f32 0.0, %v1907
      %v1909 = vpop.f32.mrb[0].mxu0
      %1910 = vmatprep.mubr.f32.mxu0 0.0
      %1911 = vmatmul.mubr.f32.gmra.mrb[0].mxu0 %v1297
      %v1912 = vpop.f32.mrb[0].mxu0
      %v1913 = vadd.f32 0.0, %v1912
      %v1914 = vpop.f32.mrb[0].mxu0
      %1915 = vmatprep.mubr.f32.mxu0 0.0
      %1916 = vmatmul.mubr.f32.gmra.mrb[0].mxu0 %v1300
      %v1917 = vpop.f32.mrb[0].mxu0
      %v1918 = vadd.f32 0.0, %v1917
      %v1919 = vpop.f32.mrb[0].mxu0
      %1920 = vmatprep.mubr.f32.mxu0 0.0
      %1921 = vmatmul.mubr.f32.gmra.mrb[0].mxu0 %v1303
      %v1922 = vpop.f32.mrb[0].mxu0
      %v1923 = vadd.f32 0.0, %v1922
      %v1924 = vpop.f32.mrb[0].mxu0
      %1925 = vmatprep.mubr.f32.mxu0 0.0
      %1926 = vmatmul.mubr.f32.gmra.mrb[0].mxu0 %v1306
      %v1927 = vpop.f32.mrb[0].mxu0
      %v1928 = vadd.f32 0.0, %v1927
      %v1929 = vpop.f32.mrb[0].mxu0
      %1930 = vmatprep.mubr.f32.mxu0 0.0
      %1931 = vmatmul.mubr.f32.gmra.mrb[0].mxu0 %v1309
      %v1932 = vpop.f32.mrb[0].mxu0
      %v1933 = vadd.f32 0.0, %v1932
      %v1934 = vpop.f32.mrb[0].mxu0
      %1935 = vmatprep.mubr.f32.mxu0 0.0
      %1936 = vmatmul.mubr.f32.gmra.mrb[0].mxu0 %v1312
      %v1937 = vpop.f32.mrb[0].mxu0
      %v1938 = vadd.f32 0.0, %v1937
      %v1939 = vpop.f32.mrb[0].mxu0
      %1940 = vmatprep.mubr.f32.mxu0 0.0
      %1941 = vmatmul.mubr.f32.gmra.mrb[0].mxu0 %v1315
      %v1942 = vpop.f32.mrb[0].mxu0
      %v1943 = vadd.f32 0.0, %v1942
      %v1944 = vpop.f32.mrb[0].mxu0
      %1945 = vmatprep.mubr.f32.mxu0 0.0
      %1946 = vmatmul.mubr.f32.gmra.mrb[0].mxu0 %v1318
      %v1947 = vpop.f32.mrb[0].mxu0
      %v1948 = vadd.f32 0.0, %v1947
      %v1949 = vpop.f32.mrb[0].mxu0
      %1950 = vmatprep.mubr.f32.mxu0 0.0
      %1951 = vmatmul.mubr.f32.gmra.mrb[0].mxu0 %v1321
      %v1952 = vpop.f32.mrb[0].mxu0
      %v1953 = vadd.f32 0.0, %v1952
      %v1954 = vpop.f32.mrb[0].mxu0
      %1955 = vmatprep.mubr.f32.mxu0 0.0
      %1956 = vmatmul.mubr.f32.gmra.mrb[0].mxu0 %v1324
      %v1957 = vpop.f32.mrb[0].mxu0
      %v1958 = vadd.f32 0.0, %v1957
      %v1959 = vpop.f32.mrb[0].mxu0
      %1960 = vmatprep.mubr.f32.mxu0 0.0
      %1961 = vmatmul.mubr.f32.gmra.mrb[0].mxu0 %v1327
      %v1962 = vpop.f32.mrb[0].mxu0
      %v1963 = vadd.f32 0.0, %v1962
      %v1964 = vpop.f32.mrb[0].mxu0
      %1965 = vmatprep.mubr.f32.mxu0 0.0
      %1966 = vmatmul.mubr.f32.gmra.mrb[0].mxu0 %v1330
      %v1967 = vpop.f32.mrb[0].mxu0
      %v1968 = vadd.f32 0.0, %v1967
      %v1969 = vpop.f32.mrb[0].mxu0
      %1970 = vmatprep.mubr.f32.mxu0 0.0
      %1971 = vmatmul.mubr.f32.gmra.mrb[0].mxu0 %v1333
      %v1972 = vpop.f32.mrb[0].mxu0
      %v1973 = vadd.f32 0.0, %v1972
      %v1974 = vpop.f32.mrb[0].mxu0
      %1975 = vmatprep.mubr.f32.mxu0 0.0
      %1976 = vmatmul.mubr.f32.gmra.mrb[0].mxu0 %v1336
      %v1977 = vpop.f32.mrb[0].mxu0
      %v1978 = vadd.f32 0.0, %v1977
      %v1979 = vpop.f32.mrb[0].mxu0
      %1980 = vmatprep.mubr.f32.mxu0 0.0
      %1981 = vmatmul.mubr.f32.gmra.mrb[0].mxu0 %v1339
      %v1982 = vpop.f32.mrb[0].mxu0
      %v1983 = vadd.f32 0.0, %v1982
      %v1984 = vpop.f32.mrb[0].mxu0
      %1985 = vmatprep.mubr.f32.mxu0 0.0
      %1986 = vmatmul.mubr.f32.gmra.mrb[0].mxu0 %v1342
      %v1987 = vpop.f32.mrb[0].mxu0
      %v1988 = vadd.f32 0.0, %v1987
      %v1989 = vpop.f32.mrb[0].mxu0
      %1990 = vmatprep.mubr.f32.mxu0 0.0
      %1991 = vmatmul.mubr.f32.gmra.mrb[0].mxu0 %v1345
      %v1992 = vpop.f32.mrb[0].mxu0
      %v1993 = vadd.f32 0.0, %v1992
      %v1994 = vpop.f32.mrb[0].mxu0
      %1995 = vmatprep.mubr.f32.mxu0 0.0
      %1996 = vmatmul.mubr.f32.gmra.mrb[0].mxu0 %v1348
      %v1997 = vpop.f32.mrb[0].mxu0
      %v1998 = vadd.f32 0.0, %v1997
      %v1999 = vpop.f32.mrb[0].mxu0
      %2000 = vmatprep.mubr.f32.mxu0 0.0
      %2001 = vmatmul.mubr.f32.gmra.mrb[0].mxu0 %v1351
      %v2002 = vpop.f32.mrb[0].mxu0
      %v2003 = vadd.f32 0.0, %v2002
      %v2004 = vpop.f32.mrb[0].mxu0
      %2005 = vmatprep.mubr.f32.mxu0 0.0
      %2006 = vmatmul.mubr.f32.gmra.mrb[0].mxu0 %v1354
      %v2007 = vpop.f32.mrb[0].mxu0
      %v2008 = vadd.f32 0.0, %v2007
      %v2009 = vpop.f32.mrb[0].mxu0
      %2010 = vmatprep.mubr.f32.mxu0 0.0
      %2011 = vmatmul.mubr.f32.gmra.mrb[0].mxu0 %v1357
      %v2012 = vpop.f32.mrb[0].mxu0
      %v2013 = vadd.f32 0.0, %v2012
      %v2014 = vpop.f32.mrb[0].mxu0
      %2015 = vmatprep.mubr.f32.mxu0 0.0
      %2016 = vmatmul.mubr.f32.gmra.mrb[0].mxu0 %v1360
      %v2017 = vpop.f32.mrb[0].mxu0
      %v2018 = vadd.f32 0.0, %v2017
      %v2019 = vpop.f32.mrb[0].mxu0
      %2020 = vmatprep.mubr.f32.mxu0 0.0
      %2021 = vmatmul.mubr.f32.gmra.mrb[0].mxu0 %v1363
      %v2022 = vpop.f32.mrb[0].mxu0
      %v2023 = vadd.f32 0.0, %v2022
      %v2024 = vpop.f32.mrb[0].mxu0
      %2025 = vmatprep.mubr.f32.mxu0 0.0
      %2026 = vmatmul.mubr.f32.gmra.mrb[0].mxu0 %v1366
      %v2027 = vpop.f32.mrb[0].mxu0
      %v2028 = vadd.f32 0.0, %v2027
      %v2029 = vpop.f32.mrb[0].mxu0
      %2030 = vmatprep.mubr.f32.mxu0 0.0
      %2031 = vmatmul.mubr.f32.gmra.mrb[0].mxu0 %v1369
      %v2032 = vpop.f32.mrb[0].mxu0
      %v2033 = vadd.f32 0.0, %v2032
      %v2034 = vpop.f32.mrb[0].mxu0
      %2035 = vmatprep.mubr.f32.mxu0 0.0
      %2036 = vmatmul.mubr.f32.gmra.mrb[0].mxu0 %v1372
      %v2037 = vpop.f32.mrb[0].mxu0
      %v2038 = vadd.f32 0.0, %v2037
      %v2039 = vpop.f32.mrb[0].mxu0
      %2040 = vmatprep.mubr.f32.mxu0 0.0
      %2041 = vmatmul.mubr.f32.gmra.mrb[0].mxu0 %v1375
      %v2042 = vpop.f32.mrb[0].mxu0
      %v2043 = vadd.f32 0.0, %v2042
      %v2044 = vpop.f32.mrb[0].mxu0
      %2045 = vmatprep.mubr.f32.mxu0 0.0
      %2046 = vmatmul.mubr.f32.gmra.mrb[0].mxu0 %v1378
      %v2047 = vpop.f32.mrb[0].mxu0
      %v2048 = vadd.f32 0.0, %v2047
      %v2049 = vpop.f32.mrb[0].mxu0
      %2050 = vmatprep.mubr.f32.mxu0 0.0
      %2051 = vmatmul.mubr.f32.gmra.mrb[0].mxu0 %v1381
      %v2052 = vpop.f32.mrb[0].mxu0
      %v2053 = vadd.f32 0.0, %v2052
      %v2054 = vpop.f32.mrb[0].mxu0
      %2055 = vmatprep.mubr.f32.mxu0 0.0
      %2056 = vmatmul.mubr.f32.gmra.mrb[0].mxu0 %v1384
      %v2057 = vpop.f32.mrb[0].mxu0
      %v2058 = vadd.f32 0.0, %v2057
      %v2059 = vpop.f32.mrb[0].mxu0
      %2060 = vmatprep.mubr.f32.mxu0 0.0
      %2061 = vmatmul.mubr.f32.gmra.mrb[0].mxu0 %v1387
      %v2062 = vpop.f32.mrb[0].mxu0
      %v2063 = vadd.f32 0.0, %v2062
      %v2064 = vpop.f32.mrb[0].mxu0
      %2065 = vmatprep.mubr.f32.mxu0 0.0
      %2066 = vmatmul.mubr.f32.gmra.mrb[0].mxu0 %v1390
      %v2067 = vpop.f32.mrb[0].mxu0
      %v2068 = vadd.f32 0.0, %v2067
      %v2069 = vpop.f32.mrb[0].mxu0
      %2070 = vmatprep.mubr.f32.mxu0 0.0
      %2071 = vmatmul.mubr.f32.gmra.mrb[0].mxu0 %v1393
      %v2072 = vpop.f32.mrb[0].mxu0
      %v2073 = vadd.f32 0.0, %v2072
      %v2074 = vpop.f32.mrb[0].mxu0
      %2075 = vmatprep.mubr.f32.mxu0 0.0
      %2076 = vmatmul.mubr.f32.gmra.mrb[0].mxu0 %v1396
      %v2077 = vpop.f32.mrb[0].mxu0
      %v2078 = vadd.f32 0.0, %v2077
      %v2079 = vpop.f32.mrb[0].mxu0
      %2080 = vmatprep.mubr.f32.mxu0 0.0
      %2081 = vmatmul.mubr.f32.gmra.mrb[0].mxu0 %v1399
      %v2082 = vpop.f32.mrb[0].mxu0
      %v2083 = vadd.f32 0.0, %v2082
      %v2084 = vpop.f32.mrb[0].mxu0
      %2085 = vmatprep.mubr.f32.mxu0 0.0
      %2086 = vmatmul.mubr.f32.gmra.mrb[0].mxu0 %v1402
      %v2087 = vpop.f32.mrb[0].mxu0
      %v2088 = vadd.f32 0.0, %v2087
      %v2089 = vpop.f32.mrb[0].mxu0
      %2090 = vmatprep.mubr.f32.mxu0 0.0
      %2091 = vmatmul.mubr.f32.gmra.mrb[0].mxu0 %v1405
      %v2092 = vpop.f32.mrb[0].mxu0
      %v2093 = vadd.f32 0.0, %v2092
      %v2094 = vpop.f32.mrb[0].mxu0
      %2095 = vmatprep.mubr.f32.mxu0 0.0
      %2096 = vmatmul.mubr.f32.gmra.mrb[0].mxu0 %v1408
      %v2097 = vpop.f32.mrb[0].mxu0
      %v2098 = vadd.f32 0.0, %v2097
      %v2099 = vpop.f32.mrb[0].mxu0
      %2100 = vmatprep.mubr.f32.mxu0 0.0
      %2101 = vmatmul.mubr.f32.gmra.mrb[0].mxu0 %v1411
      %v2102 = vpop.f32.mrb[0].mxu0
      %v2103 = vadd.f32 0.0, %v2102
      %v2104 = vpop.f32.mrb[0].mxu0
      %2105 = vmatprep.mubr.f32.mxu0 0.0
      %2106 = vmatmul.mubr.f32.gmra.mrb[0].mxu0 %v1414
      %v2107 = vpop.f32.mrb[0].mxu0
      %v2108 = vadd.f32 0.0, %v2107
      %v2109 = vpop.f32.mrb[0].mxu0
      %2110 = vmatprep.mubr.f32.mxu0 0.0
      %2111 = vmatmul.mubr.f32.gmra.mrb[0].mxu0 %v1417
      %v2112 = vpop.f32.mrb[0].mxu0
      %v2113 = vadd.f32 0.0, %v2112
      %v2114 = vpop.f32.mrb[0].mxu0
      %2115 = vmatprep.mubr.f32.mxu0 0.0
      %2116 = vmatmul.mubr.f32.gmra.mrb[0].mxu0 %v1420
      %v2117 = vpop.f32.mrb[0].mxu0
      %v2118 = vadd.f32 0.0, %v2117
      %v2119 = vpop.f32.mrb[0].mxu0
      %2120 = vmatprep.mubr.f32.mxu0 0.0
      %2121 = vmatmul.mubr.f32.gmra.mrb[0].mxu0 %v1423
      %v2122 = vpop.f32.mrb[0].mxu0
      %v2123 = vadd.f32 0.0, %v2122
      %v2124 = vpop.f32.mrb[0].mxu0
      %2125 = vmatprep.mubr.f32.mxu0 0.0
      %2126 = vmatmul.mubr.f32.gmra.mrb[0].mxu0 %v1426
      %v2127 = vpop.f32.mrb[0].mxu0
      %v2128 = vadd.f32 0.0, %v2127
      %v2129 = vpop.f32.mrb[0].mxu0
      %2130 = vmatprep.mubr.f32.mxu0 0.0
      %2131 = vmatmul.mubr.f32.gmra.mrb[0].mxu0 %v1429
      %v2132 = vpop.f32.mrb[0].mxu0
      %v2133 = vadd.f32 0.0, %v2132
      %v2134 = vpop.f32.mrb[0].mxu0
      %2135 = vdwg.mxu0
      %v2136 = vrot.slane %v789, 4
      %v2137 = vadd.f32 %v789, %v2136
      %v2138 = vrot.slane %v2137, 2
      %v2139 = vadd.f32 %v2137, %v2138
      %v2140 = vrot.slane %v2139, 1
      %v2141 = vadd.f32 %v2139, %v2140
      %v2142 = vmul.f32 %v1498, 0.1
      %v2143 = vmul.f32 %v1503, 0.1
      %v2144 = vmul.f32 %v1508, 0.1
      %v2145 = vmul.f32 %v1513, 0.1
      %v2146 = vmul.f32 %v1518, 0.1
      %v2147 = vmul.f32 %v1523, 0.1
      %v2148 = vmul.f32 %v1528, 0.1
      %v2149 = vmul.f32 %v1533, 0.1
      %v2150 = vmul.f32 %v1538, 0.1
      %v2151 = vmul.f32 %v1543, 0.1
      %v2152 = vmul.f32 %v1548, 0.1
      %v2153 = vmul.f32 %v1553, 0.1
      %v2154 = vmul.f32 %v1558, 0.1
      %v2155 = vmul.f32 %v1563, 0.1
      %v2156 = vmul.f32 %v1568, 0.1
      %v2157 = vmul.f32 %v1573, 0.1
      %v2158 = vmul.f32 %v1578, 0.1
      %v2159 = vmul.f32 %v1583, 0.1
      %v2160 = vmul.f32 %v1588, 0.1
      %v2161 = vmul.f32 %v1593, 0.1
      %v2162 = vmul.f32 %v1598, 0.1
      %v2163 = vmul.f32 %v1603, 0.1
      %v2164 = vmul.f32 %v1608, 0.1
      %v2165 = vmul.f32 %v1613, 0.1
      %v2166 = vmul.f32 %v1618, 0.1
      %v2167 = vmul.f32 %v1623, 0.1
      %v2168 = vmul.f32 %v1628, 0.1
      %v2169 = vmul.f32 %v1633, 0.1
      %v2170 = vmul.f32 %v1638, 0.1
      %v2171 = vmul.f32 %v1643, 0.1
      %v2172 = vmul.f32 %v1648, 0.1
      %v2173 = vmul.f32 %v1653, 0.1
      %v2174 = vmul.f32 %v1658, 0.1
      %v2175 = vmul.f32 %v1663, 0.1
      %v2176 = vmul.f32 %v1668, 0.1
      %v2177 = vmul.f32 %v1673, 0.1
      %v2178 = vmul.f32 %v1678, 0.1
      %v2179 = vmul.f32 %v1683, 0.1
      %v2180 = vmul.f32 %v1688, 0.1
      %v2181 = vmul.f32 %v1693, 0.1
      %v2182 = vmul.f32 %v1698, 0.1
      %v2183 = vmul.f32 %v1703, 0.1
      %v2184 = vmul.f32 %v1708, 0.1
      %v2185 = vmul.f32 %v1713, 0.1
      %v2186 = vmul.f32 %v1718, 0.1
      %v2187 = vmul.f32 %v1723, 0.1
      %v2188 = vmul.f32 %v1728, 0.1
      %v2189 = vmul.f32 %v1733, 0.1
      %v2190 = vmul.f32 %v1738, 0.1
      %v2191 = vmul.f32 %v1743, 0.1
      %v2192 = vmul.f32 %v1748, 0.1
      %v2193 = vmul.f32 %v1753, 0.1
      %v2194 = vmul.f32 %v1758, 0.1
      %v2195 = vmul.f32 %v1763, 0.1
      %v2196 = vmul.f32 %v1768, 0.1
      %v2197 = vmul.f32 %v1773, 0.1
      %v2198 = vmul.f32 %v1778, 0.1
      %v2199 = vmul.f32 %v1783, 0.1
      %v2200 = vmul.f32 %v1788, 0.1
      %v2201 = vmul.f32 %v1793, 0.1
      %v2202 = vmul.f32 %v1798, 0.1
      %v2203 = vmul.f32 %v1803, 0.1
      %v2204 = vmul.f32 %v1808, 0.1
      %v2205 = vmul.f32 %v1813, 0.1
      %v2206 = vmul.f32 %v1818, 0.1
      %v2207 = vmul.f32 %v1823, 0.1
      %v2208 = vmul.f32 %v1828, 0.1
      %v2209 = vmul.f32 %v1833, 0.1
      %v2210 = vmul.f32 %v1838, 0.1
      %v2211 = vmul.f32 %v1843, 0.1
      %v2212 = vmul.f32 %v1848, 0.1
      %v2213 = vmul.f32 %v1853, 0.1
      %v2214 = vmul.f32 %v1858, 0.1
      %v2215 = vmul.f32 %v1863, 0.1
      %v2216 = vmul.f32 %v1868, 0.1
      %v2217 = vmul.f32 %v1873, 0.1
      %v2218 = vmul.f32 %v1878, 0.1
      %v2219 = vmul.f32 %v1883, 0.1
      %v2220 = vmul.f32 %v1888, 0.1
      %v2221 = vmul.f32 %v1893, 0.1
      %v2222 = vmul.f32 %v1898, 0.1
      %v2223 = vmul.f32 %v1903, 0.1
      %v2224 = vmul.f32 %v1908, 0.1
      %v2225 = vmul.f32 %v1913, 0.1
      %v2226 = vmul.f32 %v1918, 0.1
      %v2227 = vmul.f32 %v1923, 0.1
      %v2228 = vmul.f32 %v1928, 0.1
      %v2229 = vmul.f32 %v1933, 0.1
      %v2230 = vmul.f32 %v1938, 0.1
      %v2231 = vmul.f32 %v1943, 0.1
      %v2232 = vmul.f32 %v1948, 0.1
      %v2233 = vmul.f32 %v1953, 0.1
      %v2234 = vmul.f32 %v1958, 0.1
      %v2235 = vmul.f32 %v1963, 0.1
      %v2236 = vmul.f32 %v1968, 0.1
      %v2237 = vmul.f32 %v1973, 0.1
      %v2238 = vmul.f32 %v1978, 0.1
      %v2239 = vmul.f32 %v1983, 0.1
      %v2240 = vmul.f32 %v1988, 0.1
      %v2241 = vmul.f32 %v1993, 0.1
      %v2242 = vmul.f32 %v1998, 0.1
      %v2243 = vmul.f32 %v2003, 0.1
      %v2244 = vmul.f32 %v2008, 0.1
      %v2245 = vmul.f32 %v2013, 0.1
      %v2246 = vmul.f32 %v2018, 0.1
      %v2247 = vmul.f32 %v2023, 0.1
      %v2248 = vmul.f32 %v2028, 0.1
      %v2249 = vmul.f32 %v2033, 0.1
      %v2250 = vmul.f32 %v2038, 0.1
      %v2251 = vmul.f32 %v2043, 0.1
      %v2252 = vmul.f32 %v2048, 0.1
      %v2253 = vmul.f32 %v2053, 0.1
      %v2254 = vmul.f32 %v2058, 0.1
      %v2255 = vmul.f32 %v2063, 0.1
      %v2256 = vmul.f32 %v2068, 0.1
      %v2257 = vmul.f32 %v2073, 0.1
      %v2258 = vmul.f32 %v2078, 0.1
      %v2259 = vmul.f32 %v2083, 0.1
      %v2260 = vmul.f32 %v2088, 0.1
      %v2261 = vmul.f32 %v2093, 0.1
      %v2262 = vmul.f32 %v2098, 0.1
      %v2263 = vmul.f32 %v2103, 0.1
      %v2264 = vmul.f32 %v2108, 0.1
      %v2265 = vmul.f32 %v2113, 0.1
      %v2266 = vmul.f32 %v2118, 0.1
      %v2267 = vmul.f32 %v2123, 0.1
      %v2268 = vmul.f32 %v2128, 0.1
      %v2269 = vmul.f32 %v2133, 0.1
      %v2270 = vsub.f32 %v361, %v2142
      %v2271 = vsub.f32 %v362, %v2143
      %v2272 = vsub.f32 %v363, %v2144
      %v2273 = vsub.f32 %v364, %v2145
      %v2274 = vsub.f32 %v365, %v2146
      %v2275 = vsub.f32 %v366, %v2147
      %v2276 = vsub.f32 %v367, %v2148
      %v2277 = vsub.f32 %v368, %v2149
      %v2278 = vsub.f32 %v369, %v2150
      %v2279 = vsub.f32 %v370, %v2151
      %v2280 = vsub.f32 %v371, %v2152
      %v2281 = vsub.f32 %v372, %v2153
      %v2282 = vsub.f32 %v373, %v2154
      %v2283 = vsub.f32 %v374, %v2155
      %v2284 = vsub.f32 %v375, %v2156
      %v2285 = vsub.f32 %v376, %v2157
      %v2286 = vsub.f32 %v377, %v2158
      %v2287 = vsub.f32 %v378, %v2159
      %v2288 = vsub.f32 %v379, %v2160
      %v2289 = vsub.f32 %v380, %v2161
      %v2290 = vsub.f32 %v381, %v2162
      %v2291 = vsub.f32 %v382, %v2163
      %v2292 = vsub.f32 %v383, %v2164
      %v2293 = vsub.f32 %v384, %v2165
      %v2294 = vsub.f32 %v385, %v2166
      %v2295 = vsub.f32 %v386, %v2167
      %v2296 = vsub.f32 %v387, %v2168
      %v2297 = vsub.f32 %v388, %v2169
      %v2298 = vsub.f32 %v389, %v2170
      %v2299 = vsub.f32 %v390, %v2171
      %v2300 = vsub.f32 %v391, %v2172
      %v2301 = vsub.f32 %v392, %v2173
      %v2302 = vsub.f32 %v393, %v2174
      %v2303 = vsub.f32 %v394, %v2175
      %v2304 = vsub.f32 %v395, %v2176
      %v2305 = vsub.f32 %v396, %v2177
      %v2306 = vsub.f32 %v397, %v2178
      %v2307 = vsub.f32 %v398, %v2179
      %v2308 = vsub.f32 %v399, %v2180
      %v2309 = vsub.f32 %v400, %v2181
      %v2310 = vsub.f32 %v401, %v2182
      %v2311 = vsub.f32 %v402, %v2183
      %v2312 = vsub.f32 %v403, %v2184
      %v2313 = vsub.f32 %v404, %v2185
      %v2314 = vsub.f32 %v405, %v2186
      %v2315 = vsub.f32 %v406, %v2187
      %v2316 = vsub.f32 %v407, %v2188
      %v2317 = vsub.f32 %v408, %v2189
      %v2318 = vsub.f32 %v409, %v2190
      %v2319 = vsub.f32 %v410, %v2191
      %v2320 = vsub.f32 %v411, %v2192
      %v2321 = vsub.f32 %v412, %v2193
      %v2322 = vsub.f32 %v413, %v2194
      %v2323 = vsub.f32 %v414, %v2195
      %v2324 = vsub.f32 %v415, %v2196
      %v2325 = vsub.f32 %v416, %v2197
      %v2326 = vsub.f32 %v417, %v2198
      %v2327 = vsub.f32 %v418, %v2199
      %v2328 = vsub.f32 %v419, %v2200
      %v2329 = vsub.f32 %v420, %v2201
      %v2330 = vsub.f32 %v421, %v2202
      %v2331 = vsub.f32 %v422, %v2203
      %v2332 = vsub.f32 %v423, %v2204
      %v2333 = vsub.f32 %v424, %v2205
      %v2334 = vsub.f32 %v425, %v2206
      %v2335 = vsub.f32 %v426, %v2207
      %v2336 = vsub.f32 %v427, %v2208
      %v2337 = vsub.f32 %v428, %v2209
      %v2338 = vsub.f32 %v429, %v2210
      %v2339 = vsub.f32 %v430, %v2211
      %v2340 = vsub.f32 %v431, %v2212
      %v2341 = vsub.f32 %v432, %v2213
      %v2342 = vsub.f32 %v433, %v2214
      %v2343 = vsub.f32 %v434, %v2215
      %v2344 = vsub.f32 %v435, %v2216
      %v2345 = vsub.f32 %v436, %v2217
      %v2346 = vsub.f32 %v437, %v2218
      %v2347 = vsub.f32 %v438, %v2219
      %v2348 = vsub.f32 %v439, %v2220
      %v2349 = vsub.f32 %v440, %v2221
      %v2350 = vsub.f32 %v441, %v2222
      %v2351 = vsub.f32 %v442, %v2223
      %v2352 = vsub.f32 %v443, %v2224
      %v2353 = vsub.f32 %v444, %v2225
      %v2354 = vsub.f32 %v445, %v2226
      %v2355 = vsub.f32 %v446, %v2227
      %v2356 = vsub.f32 %v447, %v2228
      %v2357 = vsub.f32 %v448, %v2229
      %v2358 = vsub.f32 %v449, %v2230
      %v2359 = vsub.f32 %v450, %v2231
      %v2360 = vsub.f32 %v451, %v2232
      %v2361 = vsub.f32 %v452, %v2233
      %v2362 = vsub.f32 %v453, %v2234
      %v2363 = vsub.f32 %v454, %v2235
      %v2364 = vsub.f32 %v455, %v2236
      %v2365 = vsub.f32 %v456, %v2237
      %v2366 = vsub.f32 %v457, %v2238
      %v2367 = vsub.f32 %v458, %v2239
      %v2368 = vsub.f32 %v459, %v2240
      %v2369 = vsub.f32 %v460, %v2241
      %v2370 = vsub.f32 %v461, %v2242
      %v2371 = vsub.f32 %v462, %v2243
      %v2372 = vsub.f32 %v463, %v2244
      %v2373 = vsub.f32 %v464, %v2245
      %v2374 = vsub.f32 %v465, %v2246
      %v2375 = vsub.f32 %v466, %v2247
      %v2376 = vsub.f32 %v467, %v2248
      %v2377 = vsub.f32 %v468, %v2249
      %v2378 = vsub.f32 %v469, %v2250
      %v2379 = vsub.f32 %v470, %v2251
      %v2380 = vsub.f32 %v471, %v2252
      %v2381 = vsub.f32 %v472, %v2253
      %v2382 = vsub.f32 %v473, %v2254
      %v2383 = vsub.f32 %v474, %v2255
      %v2384 = vsub.f32 %v475, %v2256
      %v2385 = vsub.f32 %v476, %v2257
      %v2386 = vsub.f32 %v477, %v2258
      %v2387 = vsub.f32 %v478, %v2259
      %v2388 = vsub.f32 %v479, %v2260
      %v2389 = vsub.f32 %v480, %v2261
      %v2390 = vsub.f32 %v481, %v2262
      %v2391 = vsub.f32 %v482, %v2263
      %v2392 = vsub.f32 %v483, %v2264
      %v2393 = vsub.f32 %v484, %v2265
      %v2394 = vsub.f32 %v485, %v2266
      %v2395 = vsub.f32 %v486, %v2267
      %v2396 = vsub.f32 %v487, %v2268
      %v2397 = vsub.f32 %v488, %v2269
      %2398 = vst [vmem:[#allocation2] sm:$0xff] %v2270
      %2399 = vst [vmem:[#allocation2 + $0x8] sm:$0xff] %v2271
      %2400 = vst [vmem:[#allocation2 + $0x10] sm:$0xff] %v2272
      %2401 = vst [vmem:[#allocation2 + $0x18] sm:$0xff] %v2273
      %2402 = vst [vmem:[#allocation2 + $0x20] sm:$0xff] %v2274
      %2403 = vst [vmem:[#allocation2 + $0x28] sm:$0xff] %v2275
      %2404 = vst [vmem:[#allocation2 + $0x30] sm:$0xff] %v2276
      %2405 = vst [vmem:[#allocation2 + $0x38] sm:$0xff] %v2277
      %2406 = vst [vmem:[#allocation2 + $0x40] sm:$0xff] %v2278
      %2407 = vst [vmem:[#allocation2 + $0x48] sm:$0xff] %v2279
      %2408 = vst [vmem:[#allocation2 + $0x50] sm:$0xff] %v2280
      %2409 = vst [vmem:[#allocation2 + $0x58] sm:$0xff] %v2281
      %2410 = vst [vmem:[#allocation2 + $0x60] sm:$0xff] %v2282
      %2411 = vst [vmem:[#allocation2 + $0x68] sm:$0xff] %v2283
      %2412 = vst [vmem:[#allocation2 + $0x70] sm:$0xff] %v2284
      %2413 = vst [vmem:[#allocation2 + $0x78] sm:$0xff] %v2285
      %2414 = vst [vmem:[#allocation2 + $0x80] sm:$0xff] %v2286
      %2415 = vst [vmem:[#allocation2 + $0x88] sm:$0xff] %v2287
      %2416 = vst [vmem:[#allocation2 + $0x90] sm:$0xff] %v2288
      %2417 = vst [vmem:[#allocation2 + $0x98] sm:$0xff] %v2289
      %2418 = vst [vmem:[#allocation2 + $0xa0] sm:$0xff] %v2290
      %2419 = vst [vmem:[#allocation2 + $0xa8] sm:$0xff] %v2291
      %2420 = vst [vmem:[#allocation2 + $0xb0] sm:$0xff] %v2292
      %2421 = vst [vmem:[#allocation2 + $0xb8] sm:$0xff] %v2293
      %2422 = vst [vmem:[#allocation2 + $0xc0] sm:$0xff] %v2294
      %2423 = vst [vmem:[#allocation2 + $0xc8] sm:$0xff] %v2295
      %2424 = vst [vmem:[#allocation2 + $0xd0] sm:$0xff] %v2296
      %2425 = vst [vmem:[#allocation2 + $0xd8] sm:$0xff] %v2297
      %2426 = vst [vmem:[#allocation2 + $0xe0] sm:$0xff] %v2298
      %2427 = vst [vmem:[#allocation2 + $0xe8] sm:$0xff] %v2299
      %2428 = vst [vmem:[#allocation2 + $0xf0] sm:$0xff] %v2300
      %2429 = vst [vmem:[#allocation2 + $0xf8] sm:$0xff] %v2301
      %2430 = vst [vmem:[#allocation2 + $0x100] sm:$0xff] %v2302
      %2431 = vst [vmem:[#allocation2 + $0x108] sm:$0xff] %v2303
      %2432 = vst [vmem:[#allocation2 + $0x110] sm:$0xff] %v2304
      %2433 = vst [vmem:[#allocation2 + $0x118] sm:$0xff] %v2305
      %2434 = vst [vmem:[#allocation2 + $0x120] sm:$0xff] %v2306
      %2435 = vst [vmem:[#allocation2 + $0x128] sm:$0xff] %v2307
      %2436 = vst [vmem:[#allocation2 + $0x130] sm:$0xff] %v2308
      %2437 = vst [vmem:[#allocation2 + $0x138] sm:$0xff] %v2309
      %2438 = vst [vmem:[#allocation2 + $0x140] sm:$0xff] %v2310
      %2439 = vst [vmem:[#allocation2 + $0x148] sm:$0xff] %v2311
      %2440 = vst [vmem:[#allocation2 + $0x150] sm:$0xff] %v2312
      %2441 = vst [vmem:[#allocation2 + $0x158] sm:$0xff] %v2313
      %2442 = vst [vmem:[#allocation2 + $0x160] sm:$0xff] %v2314
      %2443 = vst [vmem:[#allocation2 + $0x168] sm:$0xff] %v2315
      %2444 = vst [vmem:[#allocation2 + $0x170] sm:$0xff] %v2316
      %2445 = vst [vmem:[#allocation2 + $0x178] sm:$0xff] %v2317
      %2446 = vst [vmem:[#allocation2 + $0x180] sm:$0xff] %v2318
      %2447 = vst [vmem:[#allocation2 + $0x188] sm:$0xff] %v2319
      %2448 = vst [vmem:[#allocation2 + $0x190] sm:$0xff] %v2320
      %2449 = vst [vmem:[#allocation2 + $0x198] sm:$0xff] %v2321
      %2450 = vst [vmem:[#allocation2 + $0x1a0] sm:$0xff] %v2322
      %2451 = vst [vmem:[#allocation2 + $0x1a8] sm:$0xff] %v2323
      %2452 = vst [vmem:[#allocation2 + $0x1b0] sm:$0xff] %v2324
      %2453 = vst [vmem:[#allocation2 + $0x1b8] sm:$0xff] %v2325
      %2454 = vst [vmem:[#allocation2 + $0x1c0] sm:$0xff] %v2326
      %2455 = vst [vmem:[#allocation2 + $0x1c8] sm:$0xff] %v2327
      %2456 = vst [vmem:[#allocation2 + $0x1d0] sm:$0xff] %v2328
      %2457 = vst [vmem:[#allocation2 + $0x1d8] sm:$0xff] %v2329
      %2458 = vst [vmem:[#allocation2 + $0x1e0] sm:$0xff] %v2330
      %2459 = vst [vmem:[#allocation2 + $0x1e8] sm:$0xff] %v2331
      %2460 = vst [vmem:[#allocation2 + $0x1f0] sm:$0xff] %v2332
      %2461 = vst [vmem:[#allocation2 + $0x1f8] sm:$0xff] %v2333
      %2462 = vst [vmem:[#allocation2 + $0x200] sm:$0xff] %v2334
      %2463 = vst [vmem:[#allocation2 + $0x208] sm:$0xff] %v2335
      %2464 = vst [vmem:[#allocation2 + $0x210] sm:$0xff] %v2336
      %2465 = vst [vmem:[#allocation2 + $0x218] sm:$0xff] %v2337
      %2466 = vst [vmem:[#allocation2 + $0x220] sm:$0xff] %v2338
      %2467 = vst [vmem:[#allocation2 + $0x228] sm:$0xff] %v2339
      %2468 = vst [vmem:[#allocation2 + $0x230] sm:$0xff] %v2340
      %2469 = vst [vmem:[#allocation2 + $0x238] sm:$0xff] %v2341
      %2470 = vst [vmem:[#allocation2 + $0x240] sm:$0xff] %v2342
      %2471 = vst [vmem:[#allocation2 + $0x248] sm:$0xff] %v2343
      %2472 = vst [vmem:[#allocation2 + $0x250] sm:$0xff] %v2344
      %2473 = vst [vmem:[#allocation2 + $0x258] sm:$0xff] %v2345
      %2474 = vst [vmem:[#allocation2 + $0x260] sm:$0xff] %v2346
      %2475 = vst [vmem:[#allocation2 + $0x268] sm:$0xff] %v2347
      %2476 = vst [vmem:[#allocation2 + $0x270] sm:$0xff] %v2348
      %2477 = vst [vmem:[#allocation2 + $0x278] sm:$0xff] %v2349
      %2478 = vst [vmem:[#allocation2 + $0x280] sm:$0xff] %v2350
      %2479 = vst [vmem:[#allocation2 + $0x288] sm:$0xff] %v2351
      %2480 = vst [vmem:[#allocation2 + $0x290] sm:$0xff] %v2352
      %2481 = vst [vmem:[#allocation2 + $0x298] sm:$0xff] %v2353
      %2482 = vst [vmem:[#allocation2 + $0x2a0] sm:$0xff] %v2354
      %2483 = vst [vmem:[#allocation2 + $0x2a8] sm:$0xff] %v2355
      %2484 = vst [vmem:[#allocation2 + $0x2b0] sm:$0xff] %v2356
      %2485 = vst [vmem:[#allocation2 + $0x2b8] sm:$0xff] %v2357
      %2486 = vst [vmem:[#allocation2 + $0x2c0] sm:$0xff] %v2358
      %2487 = vst [vmem:[#allocation2 + $0x2c8] sm:$0xff] %v2359
      %2488 = vst [vmem:[#allocation2 + $0x2d0] sm:$0xff] %v2360
      %2489 = vst [vmem:[#allocation2 + $0x2d8] sm:$0xff] %v2361
      %2490 = vst [vmem:[#allocation2 + $0x2e0] sm:$0xff] %v2362
      %2491 = vst [vmem:[#allocation2 + $0x2e8] sm:$0xff] %v2363
      %2492 = vst [vmem:[#allocation2 + $0x2f0] sm:$0xff] %v2364
      %2493 = vst [vmem:[#allocation2 + $0x2f8] sm:$0xff] %v2365
      %2494 = vst [vmem:[#allocation2 + $0x300] sm:$0xff] %v2366
      %2495 = vst [vmem:[#allocation2 + $0x308] sm:$0xff] %v2367
      %2496 = vst [vmem:[#allocation2 + $0x310] sm:$0xff] %v2368
      %2497 = vst [vmem:[#allocation2 + $0x318] sm:$0xff] %v2369
      %2498 = vst [vmem:[#allocation2 + $0x320] sm:$0xff] %v2370
      %2499 = vst [vmem:[#allocation2 + $0x328] sm:$0xff] %v2371
      %2500 = vst [vmem:[#allocation2 + $0x330] sm:$0xff] %v2372
      %2501 = vst [vmem:[#allocation2 + $0x338] sm:$0xff] %v2373
      %2502 = vst [vmem:[#allocation2 + $0x340] sm:$0xff] %v2374
      %2503 = vst [vmem:[#allocation2 + $0x348] sm:$0xff] %v2375
      %2504 = vst [vmem:[#allocation2 + $0x350] sm:$0xff] %v2376
      %2505 = vst [vmem:[#allocation2 + $0x358] sm:$0xff] %v2377
      %2506 = vst [vmem:[#allocation2 + $0x360] sm:$0xff] %v2378
      %2507 = vst [vmem:[#allocation2 + $0x368] sm:$0xff] %v2379
      %2508 = vst [vmem:[#allocation2 + $0x370] sm:$0xff] %v2380
      %2509 = vst [vmem:[#allocation2 + $0x378] sm:$0xff] %v2381
      %2510 = vst [vmem:[#allocation2 + $0x380] sm:$0xff] %v2382
      %2511 = vst [vmem:[#allocation2 + $0x388] sm:$0xff] %v2383
      %2512 = vst [vmem:[#allocation2 + $0x390] sm:$0xff] %v2384
      %2513 = vst [vmem:[#allocation2 + $0x398] sm:$0xff] %v2385
      %2514 = vst [vmem:[#allocation2 + $0x3a0] sm:$0xff] %v2386
      %2515 = vst [vmem:[#allocation2 + $0x3a8] sm:$0xff] %v2387
      %2516 = vst [vmem:[#allocation2 + $0x3b0] sm:$0xff] %v2388
      %2517 = vst [vmem:[#allocation2 + $0x3b8] sm:$0xff] %v2389
      %2518 = vst [vmem:[#allocation2 + $0x3c0] sm:$0xff] %v2390
      %2519 = vst [vmem:[#allocation2 + $0x3c8] sm:$0xff] %v2391
      %2520 = vst [vmem:[#allocation2 + $0x3d0] sm:$0xff] %v2392
      %2521 = vst [vmem:[#allocation2 + $0x3d8] sm:$0xff] %v2393
      %2522 = vst [vmem:[#allocation2 + $0x3e0] sm:$0xff] %v2394
      %2523 = vst [vmem:[#allocation2 + $0x3e8] sm:$0xff] %v2395
      %2524 = vst [vmem:[#allocation2 + $0x3f0] sm:$0xff] %v2396
      %2525 = vst [vmem:[#allocation2 + $0x3f8] sm:$0xff] %v2397
      %v2526 = vld [vmem:[#allocation3] sm:$0x1]
      %v2527 = vmul.f32 %v2141, 0.1
      %v2528 = vsub.f32 %v2526, %v2527
      %2529 = vst [vmem:[#allocation3] sm:$0x1] %v2528
    $region42: #{tpu_custom_call.1} parent=1 // loop_footer
      %s360 = sadd.s32 1, %s356
    $region43: #{tpu_custom_call.1} parent=1 // loop_footer_branch
      %355 = sbr.rel target = $region39
    $region44: #{tpu_custom_call.1} parent=1 // loop_exit
      _
    %v2530 = vld [vmem:[#allocation2] sm:$0xff]
    %v2531 = vld [vmem:[#allocation2 + $0x8] sm:$0xff]
    %v2532 = vld [vmem:[#allocation2 + $0x10] sm:$0xff]
    %v2533 = vld [vmem:[#allocation2 + $0x18] sm:$0xff]
    %v2534 = vld [vmem:[#allocation2 + $0x20] sm:$0xff]
    %v2535 = vld [vmem:[#allocation2 + $0x28] sm:$0xff]
    %v2536 = vld [vmem:[#allocation2 + $0x30] sm:$0xff]
    %v2537 = vld [vmem:[#allocation2 + $0x38] sm:$0xff]
    %v2538 = vld [vmem:[#allocation2 + $0x40] sm:$0xff]
    %v2539 = vld [vmem:[#allocation2 + $0x48] sm:$0xff]
    %v2540 = vld [vmem:[#allocation2 + $0x50] sm:$0xff]
    %v2541 = vld [vmem:[#allocation2 + $0x58] sm:$0xff]
    %v2542 = vld [vmem:[#allocation2 + $0x60] sm:$0xff]
    %v2543 = vld [vmem:[#allocation2 + $0x68] sm:$0xff]
    %v2544 = vld [vmem:[#allocation2 + $0x70] sm:$0xff]
    %v2545 = vld [vmem:[#allocation2 + $0x78] sm:$0xff]
    %v2546 = vld [vmem:[#allocation2 + $0x80] sm:$0xff]
    %v2547 = vld [vmem:[#allocation2 + $0x88] sm:$0xff]
    %v2548 = vld [vmem:[#allocation2 + $0x90] sm:$0xff]
    %v2549 = vld [vmem:[#allocation2 + $0x98] sm:$0xff]
    %v2550 = vld [vmem:[#allocation2 + $0xa0] sm:$0xff]
    %v2551 = vld [vmem:[#allocation2 + $0xa8] sm:$0xff]
    %v2552 = vld [vmem:[#allocation2 + $0xb0] sm:$0xff]
    %v2553 = vld [vmem:[#allocation2 + $0xb8] sm:$0xff]
    %v2554 = vld [vmem:[#allocation2 + $0xc0] sm:$0xff]
    %v2555 = vld [vmem:[#allocation2 + $0xc8] sm:$0xff]
    %v2556 = vld [vmem:[#allocation2 + $0xd0] sm:$0xff]
    %v2557 = vld [vmem:[#allocation2 + $0xd8] sm:$0xff]
    %v2558 = vld [vmem:[#allocation2 + $0xe0] sm:$0xff]
    %v2559 = vld [vmem:[#allocation2 + $0xe8] sm:$0xff]
    %v2560 = vld [vmem:[#allocation2 + $0xf0] sm:$0xff]
    %v2561 = vld [vmem:[#allocation2 + $0xf8] sm:$0xff]
    %v2562 = vld [vmem:[#allocation2 + $0x100] sm:$0xff]
    %v2563 = vld [vmem:[#allocation2 + $0x108] sm:$0xff]
    %v2564 = vld [vmem:[#allocation2 + $0x110] sm:$0xff]
    %v2565 = vld [vmem:[#allocation2 + $0x118] sm:$0xff]
    %v2566 = vld [vmem:[#allocation2 + $0x120] sm:$0xff]
    %v2567 = vld [vmem:[#allocation2 + $0x128] sm:$0xff]
    %v2568 = vld [vmem:[#allocation2 + $0x130] sm:$0xff]
    %v2569 = vld [vmem:[#allocation2 + $0x138] sm:$0xff]
    %v2570 = vld [vmem:[#allocation2 + $0x140] sm:$0xff]
    %v2571 = vld [vmem:[#allocation2 + $0x148] sm:$0xff]
    %v2572 = vld [vmem:[#allocation2 + $0x150] sm:$0xff]
    %v2573 = vld [vmem:[#allocation2 + $0x158] sm:$0xff]
    %v2574 = vld [vmem:[#allocation2 + $0x160] sm:$0xff]
    %v2575 = vld [vmem:[#allocation2 + $0x168] sm:$0xff]
    %v2576 = vld [vmem:[#allocation2 + $0x170] sm:$0xff]
    %v2577 = vld [vmem:[#allocation2 + $0x178] sm:$0xff]
    %v2578 = vld [vmem:[#allocation2 + $0x180] sm:$0xff]
    %v2579 = vld [vmem:[#allocation2 + $0x188] sm:$0xff]
    %v2580 = vld [vmem:[#allocation2 + $0x190] sm:$0xff]
    %v2581 = vld [vmem:[#allocation2 + $0x198] sm:$0xff]
    %v2582 = vld [vmem:[#allocation2 + $0x1a0] sm:$0xff]
    %v2583 = vld [vmem:[#allocation2 + $0x1a8] sm:$0xff]
    %v2584 = vld [vmem:[#allocation2 + $0x1b0] sm:$0xff]
    %v2585 = vld [vmem:[#allocation2 + $0x1b8] sm:$0xff]
    %v2586 = vld [vmem:[#allocation2 + $0x1c0] sm:$0xff]
    %v2587 = vld [vmem:[#allocation2 + $0x1c8] sm:$0xff]
    %v2588 = vld [vmem:[#allocation2 + $0x1d0] sm:$0xff]
    %v2589 = vld [vmem:[#allocation2 + $0x1d8] sm:$0xff]
    %v2590 = vld [vmem:[#allocation2 + $0x1e0] sm:$0xff]
    %v2591 = vld [vmem:[#allocation2 + $0x1e8] sm:$0xff]
    %v2592 = vld [vmem:[#allocation2 + $0x1f0] sm:$0xff]
    %v2593 = vld [vmem:[#allocation2 + $0x1f8] sm:$0xff]
    %v2594 = vld [vmem:[#allocation2 + $0x200] sm:$0xff]
    %v2595 = vld [vmem:[#allocation2 + $0x208] sm:$0xff]
    %v2596 = vld [vmem:[#allocation2 + $0x210] sm:$0xff]
    %v2597 = vld [vmem:[#allocation2 + $0x218] sm:$0xff]
    %v2598 = vld [vmem:[#allocation2 + $0x220] sm:$0xff]
    %v2599 = vld [vmem:[#allocation2 + $0x228] sm:$0xff]
    %v2600 = vld [vmem:[#allocation2 + $0x230] sm:$0xff]
    %v2601 = vld [vmem:[#allocation2 + $0x238] sm:$0xff]
    %v2602 = vld [vmem:[#allocation2 + $0x240] sm:$0xff]
    %v2603 = vld [vmem:[#allocation2 + $0x248] sm:$0xff]
    %v2604 = vld [vmem:[#allocation2 + $0x250] sm:$0xff]
    %v2605 = vld [vmem:[#allocation2 + $0x258] sm:$0xff]
    %v2606 = vld [vmem:[#allocation2 + $0x260] sm:$0xff]
    %v2607 = vld [vmem:[#allocation2 + $0x268] sm:$0xff]
    %v2608 = vld [vmem:[#allocation2 + $0x270] sm:$0xff]
    %v2609 = vld [vmem:[#allocation2 + $0x278] sm:$0xff]
    %v2610 = vld [vmem:[#allocation2 + $0x280] sm:$0xff]
    %v2611 = vld [vmem:[#allocation2 + $0x288] sm:$0xff]
    %v2612 = vld [vmem:[#allocation2 + $0x290] sm:$0xff]
    %v2613 = vld [vmem:[#allocation2 + $0x298] sm:$0xff]
    %v2614 = vld [vmem:[#allocation2 + $0x2a0] sm:$0xff]
    %v2615 = vld [vmem:[#allocation2 + $0x2a8] sm:$0xff]
    %v2616 = vld [vmem:[#allocation2 + $0x2b0] sm:$0xff]
    %v2617 = vld [vmem:[#allocation2 + $0x2b8] sm:$0xff]
    %v2618 = vld [vmem:[#allocation2 + $0x2c0] sm:$0xff]
    %v2619 = vld [vmem:[#allocation2 + $0x2c8] sm:$0xff]
    %v2620 = vld [vmem:[#allocation2 + $0x2d0] sm:$0xff]
    %v2621 = vld [vmem:[#allocation2 + $0x2d8] sm:$0xff]
    %v2622 = vld [vmem:[#allocation2 + $0x2e0] sm:$0xff]
    %v2623 = vld [vmem:[#allocation2 + $0x2e8] sm:$0xff]
    %v2624 = vld [vmem:[#allocation2 + $0x2f0] sm:$0xff]
    %v2625 = vld [vmem:[#allocation2 + $0x2f8] sm:$0xff]
    %v2626 = vld [vmem:[#allocation2 + $0x300] sm:$0xff]
    %v2627 = vld [vmem:[#allocation2 + $0x308] sm:$0xff]
    %v2628 = vld [vmem:[#allocation2 + $0x310] sm:$0xff]
    %v2629 = vld [vmem:[#allocation2 + $0x318] sm:$0xff]
    %v2630 = vld [vmem:[#allocation2 + $0x320] sm:$0xff]
    %v2631 = vld [vmem:[#allocation2 + $0x328] sm:$0xff]
    %v2632 = vld [vmem:[#allocation2 + $0x330] sm:$0xff]
    %v2633 = vld [vmem:[#allocation2 + $0x338] sm:$0xff]
    %v2634 = vld [vmem:[#allocation2 + $0x340] sm:$0xff]
    %v2635 = vld [vmem:[#allocation2 + $0x348] sm:$0xff]
    %v2636 = vld [vmem:[#allocation2 + $0x350] sm:$0xff]
    %v2637 = vld [vmem:[#allocation2 + $0x358] sm:$0xff]
    %v2638 = vld [vmem:[#allocation2 + $0x360] sm:$0xff]
    %v2639 = vld [vmem:[#allocation2 + $0x368] sm:$0xff]
    %v2640 = vld [vmem:[#allocation2 + $0x370] sm:$0xff]
    %v2641 = vld [vmem:[#allocation2 + $0x378] sm:$0xff]
    %v2642 = vld [vmem:[#allocation2 + $0x380] sm:$0xff]
    %v2643 = vld [vmem:[#allocation2 + $0x388] sm:$0xff]
    %v2644 = vld [vmem:[#allocation2 + $0x390] sm:$0xff]
    %v2645 = vld [vmem:[#allocation2 + $0x398] sm:$0xff]
    %v2646 = vld [vmem:[#allocation2 + $0x3a0] sm:$0xff]
    %v2647 = vld [vmem:[#allocation2 + $0x3a8] sm:$0xff]
    %v2648 = vld [vmem:[#allocation2 + $0x3b0] sm:$0xff]
    %v2649 = vld [vmem:[#allocation2 + $0x3b8] sm:$0xff]
    %v2650 = vld [vmem:[#allocation2 + $0x3c0] sm:$0xff]
    %v2651 = vld [vmem:[#allocation2 + $0x3c8] sm:$0xff]
    %v2652 = vld [vmem:[#allocation2 + $0x3d0] sm:$0xff]
    %v2653 = vld [vmem:[#allocation2 + $0x3d8] sm:$0xff]
    %v2654 = vld [vmem:[#allocation2 + $0x3e0] sm:$0xff]
    %v2655 = vld [vmem:[#allocation2 + $0x3e8] sm:$0xff]
    %v2656 = vld [vmem:[#allocation2 + $0x3f0] sm:$0xff]
    %v2657 = vld [vmem:[#allocation2 + $0x3f8] sm:$0xff]
    %v2658 = vld [vmem:[#allocation3] sm:$0x1]
    %v2660 = vlaneseq
    %v2661 = vshrl.u32 %v2660, 7
    %v2662 = vsub.s32 0, %v2661
    %v2663 = vrot.slane %v2658, %v2662
    %2665 = vmatprep.subr.mxu0 0.0
    %2666 = vmatpush1.msra.mxu0 %v2530
    %2667 = vmatprep.subr.mxu0 0.0
    %2668 = vmatpush1.msra.mxu0 %v2531
    %2669 = vmatprep.subr.mxu0 0.0
    %2670 = vmatpush1.msra.mxu0 %v2532
    %2671 = vmatprep.subr.mxu0 0.0
    %2672 = vmatpush1.msra.mxu0 %v2533
    %2673 = vmatprep.subr.mxu0 0.0
    %2674 = vmatpush1.msra.mxu0 %v2534
    %2675 = vmatprep.subr.mxu0 0.0
    %2676 = vmatpush1.msra.mxu0 %v2535
    %2677 = vmatprep.subr.mxu0 0.0
    %2678 = vmatpush1.msra.mxu0 %v2536
    %2679 = vmatprep.subr.mxu0 0.0
    %2680 = vmatpush1.msra.mxu0 %v2537
    %2681 = vmatprep.subr.mxu0 0.0
    %2682 = vmatpush1.msra.mxu0 %v2538
    %2683 = vmatprep.subr.mxu0 0.0
    %2684 = vmatpush1.msra.mxu0 %v2539
    %2685 = vmatprep.subr.mxu0 0.0
    %2686 = vmatpush1.msra.mxu0 %v2540
    %2687 = vmatprep.subr.mxu0 0.0
    %2688 = vmatpush1.msra.mxu0 %v2541
    %2689 = vmatprep.subr.mxu0 0.0
    %2690 = vmatpush1.msra.mxu0 %v2542
    %2691 = vmatprep.subr.mxu0 0.0
    %2692 = vmatpush1.msra.mxu0 %v2543
    %2693 = vmatprep.subr.mxu0 0.0
    %2694 = vmatpush1.msra.mxu0 %v2544
    %2695 = vmatprep.subr.mxu0 0.0
    %2696 = vmatpush1.msra.mxu0 %v2545
    %2697 = vmatprep.subr.mxu0 0.0
    %2698 = vmatpush1.msra.mxu0 %v2546
    %2699 = vmatprep.subr.mxu0 0.0
    %2700 = vmatpush1.msra.mxu0 %v2547
    %2701 = vmatprep.subr.mxu0 0.0
    %2702 = vmatpush1.msra.mxu0 %v2548
    %2703 = vmatprep.subr.mxu0 0.0
    %2704 = vmatpush1.msra.mxu0 %v2549
    %2705 = vmatprep.subr.mxu0 0.0
    %2706 = vmatpush1.msra.mxu0 %v2550
    %2707 = vmatprep.subr.mxu0 0.0
    %2708 = vmatpush1.msra.mxu0 %v2551
    %2709 = vmatprep.subr.mxu0 0.0
    %2710 = vmatpush1.msra.mxu0 %v2552
    %2711 = vmatprep.subr.mxu0 0.0
    %2712 = vmatpush1.msra.mxu0 %v2553
    %2713 = vmatprep.subr.mxu0 0.0
    %2714 = vmatpush1.msra.mxu0 %v2554
    %2715 = vmatprep.subr.mxu0 0.0
    %2716 = vmatpush1.msra.mxu0 %v2555
    %2717 = vmatprep.subr.mxu0 0.0
    %2718 = vmatpush1.msra.mxu0 %v2556
    %2719 = vmatprep.subr.mxu0 0.0
    %2720 = vmatpush1.msra.mxu0 %v2557
    %2721 = vmatprep.subr.mxu0 0.0
    %2722 = vmatpush1.msra.mxu0 %v2558
    %2723 = vmatprep.subr.mxu0 0.0
    %2724 = vmatpush1.msra.mxu0 %v2559
    %2725 = vmatprep.subr.mxu0 0.0
    %2726 = vmatpush1.msra.mxu0 %v2560
    %2727 = vmatprep.subr.mxu0 0.0
    %2728 = vmatpush1.msra.mxu0 %v2561
    %2729 = vmatprep.mubr.f32.mxu0 %v331
    %2730 = vmatmul.mubr.f32.gmra.mrb[0].mxu0 %v330
    %v2731 = vpop.f32.mrb[0].mxu0
    %v2732 = vadd.f32 %v2663, %v2731
    %v2733 = vpop.f32.mrb[0].mxu0
    %2734 = vdwg.mxu0
    %2735 = vmatprep.subr.mxu0 0.0
    %2736 = vmatpush1.msra.mxu0 %v2562
    %2737 = vmatprep.subr.mxu0 0.0
    %2738 = vmatpush1.msra.mxu0 %v2563
    %2739 = vmatprep.subr.mxu0 0.0
    %2740 = vmatpush1.msra.mxu0 %v2564
    %2741 = vmatprep.subr.mxu0 0.0
    %2742 = vmatpush1.msra.mxu0 %v2565
    %2743 = vmatprep.subr.mxu0 0.0
    %2744 = vmatpush1.msra.mxu0 %v2566
    %2745 = vmatprep.subr.mxu0 0.0
    %2746 = vmatpush1.msra.mxu0 %v2567
    %2747 = vmatprep.subr.mxu0 0.0
    %2748 = vmatpush1.msra.mxu0 %v2568
    %2749 = vmatprep.subr.mxu0 0.0
    %2750 = vmatpush1.msra.mxu0 %v2569
    %2751 = vmatprep.subr.mxu0 0.0
    %2752 = vmatpush1.msra.mxu0 %v2570
    %2753 = vmatprep.subr.mxu0 0.0
    %2754 = vmatpush1.msra.mxu0 %v2571
    %2755 = vmatprep.subr.mxu0 0.0
    %2756 = vmatpush1.msra.mxu0 %v2572
    %2757 = vmatprep.subr.mxu0 0.0
    %2758 = vmatpush1.msra.mxu0 %v2573
    %2759 = vmatprep.subr.mxu0 0.0
    %2760 = vmatpush1.msra.mxu0 %v2574
    %2761 = vmatprep.subr.mxu0 0.0
    %2762 = vmatpush1.msra.mxu0 %v2575
    %2763 = vmatprep.subr.mxu0 0.0
    %2764 = vmatpush1.msra.mxu0 %v2576
    %2765 = vmatprep.subr.mxu0 0.0
    %2766 = vmatpush1.msra.mxu0 %v2577
    %2767 = vmatprep.subr.mxu0 0.0
    %2768 = vmatpush1.msra.mxu0 %v2578
    %2769 = vmatprep.subr.mxu0 0.0
    %2770 = vmatpush1.msra.mxu0 %v2579
    %2771 = vmatprep.subr.mxu0 0.0
    %2772 = vmatpush1.msra.mxu0 %v2580
    %2773 = vmatprep.subr.mxu0 0.0
    %2774 = vmatpush1.msra.mxu0 %v2581
    %2775 = vmatprep.subr.mxu0 0.0
    %2776 = vmatpush1.msra.mxu0 %v2582
    %2777 = vmatprep.subr.mxu0 0.0
    %2778 = vmatpush1.msra.mxu0 %v2583
    %2779 = vmatprep.subr.mxu0 0.0
    %2780 = vmatpush1.msra.mxu0 %v2584
    %2781 = vmatprep.subr.mxu0 0.0
    %2782 = vmatpush1.msra.mxu0 %v2585
    %2783 = vmatprep.subr.mxu0 0.0
    %2784 = vmatpush1.msra.mxu0 %v2586
    %2785 = vmatprep.subr.mxu0 0.0
    %2786 = vmatpush1.msra.mxu0 %v2587
    %2787 = vmatprep.subr.mxu0 0.0
    %2788 = vmatpush1.msra.mxu0 %v2588
    %2789 = vmatprep.subr.mxu0 0.0
    %2790 = vmatpush1.msra.mxu0 %v2589
    %2791 = vmatprep.subr.mxu0 0.0
    %2792 = vmatpush1.msra.mxu0 %v2590
    %2793 = vmatprep.subr.mxu0 0.0
    %2794 = vmatpush1.msra.mxu0 %v2591
    %2795 = vmatprep.subr.mxu0 0.0
    %2796 = vmatpush1.msra.mxu0 %v2592
    %2797 = vmatprep.subr.mxu0 0.0
    %2798 = vmatpush1.msra.mxu0 %v2593
    %2799 = vmatprep.mubr.f32.mxu0 %v333
    %2800 = vmatmul.mubr.f32.gmra.mrb[0].mxu0 %v332
    %v2801 = vpop.f32.mrb[0].mxu0
    %v2802 = vadd.f32 %v2732, %v2801
    %v2803 = vpop.f32.mrb[0].mxu0
    %2804 = vdwg.mxu0
    %2805 = vmatprep.subr.mxu0 0.0
    %2806 = vmatpush1.msra.mxu0 %v2594
    %2807 = vmatprep.subr.mxu0 0.0
    %2808 = vmatpush1.msra.mxu0 %v2595
    %2809 = vmatprep.subr.mxu0 0.0
    %2810 = vmatpush1.msra.mxu0 %v2596
    %2811 = vmatprep.subr.mxu0 0.0
    %2812 = vmatpush1.msra.mxu0 %v2597
    %2813 = vmatprep.subr.mxu0 0.0
    %2814 = vmatpush1.msra.mxu0 %v2598
    %2815 = vmatprep.subr.mxu0 0.0
    %2816 = vmatpush1.msra.mxu0 %v2599
    %2817 = vmatprep.subr.mxu0 0.0
    %2818 = vmatpush1.msra.mxu0 %v2600
    %2819 = vmatprep.subr.mxu0 0.0
    %2820 = vmatpush1.msra.mxu0 %v2601
    %2821 = vmatprep.subr.mxu0 0.0
    %2822 = vmatpush1.msra.mxu0 %v2602
    %2823 = vmatprep.subr.mxu0 0.0
    %2824 = vmatpush1.msra.mxu0 %v2603
    %2825 = vmatprep.subr.mxu0 0.0
    %2826 = vmatpush1.msra.mxu0 %v2604
    %2827 = vmatprep.subr.mxu0 0.0
    %2828 = vmatpush1.msra.mxu0 %v2605
    %2829 = vmatprep.subr.mxu0 0.0
    %2830 = vmatpush1.msra.mxu0 %v2606
    %2831 = vmatprep.subr.mxu0 0.0
    %2832 = vmatpush1.msra.mxu0 %v2607
    %2833 = vmatprep.subr.mxu0 0.0
    %2834 = vmatpush1.msra.mxu0 %v2608
    %2835 = vmatprep.subr.mxu0 0.0
    %2836 = vmatpush1.msra.mxu0 %v2609
    %2837 = vmatprep.subr.mxu0 0.0
    %2838 = vmatpush1.msra.mxu0 %v2610
    %2839 = vmatprep.subr.mxu0 0.0
    %2840 = vmatpush1.msra.mxu0 %v2611
    %2841 = vmatprep.subr.mxu0 0.0
    %2842 = vmatpush1.msra.mxu0 %v2612
    %2843 = vmatprep.subr.mxu0 0.0
    %2844 = vmatpush1.msra.mxu0 %v2613
    %2845 = vmatprep.subr.mxu0 0.0
    %2846 = vmatpush1.msra.mxu0 %v2614
    %2847 = vmatprep.subr.mxu0 0.0
    %2848 = vmatpush1.msra.mxu0 %v2615
    %2849 = vmatprep.subr.mxu0 0.0
    %2850 = vmatpush1.msra.mxu0 %v2616
    %2851 = vmatprep.subr.mxu0 0.0
    %2852 = vmatpush1.msra.mxu0 %v2617
    %2853 = vmatprep.subr.mxu0 0.0
    %2854 = vmatpush1.msra.mxu0 %v2618
    %2855 = vmatprep.subr.mxu0 0.0
    %2856 = vmatpush1.msra.mxu0 %v2619
    %2857 = vmatprep.subr.mxu0 0.0
    %2858 = vmatpush1.msra.mxu0 %v2620
    %2859 = vmatprep.subr.mxu0 0.0
    %2860 = vmatpush1.msra.mxu0 %v2621
    %2861 = vmatprep.subr.mxu0 0.0
    %2862 = vmatpush1.msra.mxu0 %v2622
    %2863 = vmatprep.subr.mxu0 0.0
    %2864 = vmatpush1.msra.mxu0 %v2623
    %2865 = vmatprep.subr.mxu0 0.0
    %2866 = vmatpush1.msra.mxu0 %v2624
    %2867 = vmatprep.subr.mxu0 0.0
    %2868 = vmatpush1.msra.mxu0 %v2625
    %2869 = vmatprep.mubr.f32.mxu0 %v335
    %2870 = vmatmul.mubr.f32.gmra.mrb[0].mxu0 %v334
    %v2871 = vpop.f32.mrb[0].mxu0
    %v2872 = vadd.f32 %v2802, %v2871
    %v2873 = vpop.f32.mrb[0].mxu0
    %2874 = vdwg.mxu0
    %2875 = vmatprep.subr.mxu0 0.0
    %2876 = vmatpush1.msra.mxu0 %v2626
    %2877 = vmatprep.subr.mxu0 0.0
    %2878 = vmatpush1.msra.mxu0 %v2627
    %2879 = vmatprep.subr.mxu0 0.0
    %2880 = vmatpush1.msra.mxu0 %v2628
    %2881 = vmatprep.subr.mxu0 0.0
    %2882 = vmatpush1.msra.mxu0 %v2629
    %2883 = vmatprep.subr.mxu0 0.0
    %2884 = vmatpush1.msra.mxu0 %v2630
    %2885 = vmatprep.subr.mxu0 0.0
    %2886 = vmatpush1.msra.mxu0 %v2631
    %2887 = vmatprep.subr.mxu0 0.0
    %2888 = vmatpush1.msra.mxu0 %v2632
    %2889 = vmatprep.subr.mxu0 0.0
    %2890 = vmatpush1.msra.mxu0 %v2633
    %2891 = vmatprep.subr.mxu0 0.0
    %2892 = vmatpush1.msra.mxu0 %v2634
    %2893 = vmatprep.subr.mxu0 0.0
    %2894 = vmatpush1.msra.mxu0 %v2635
    %2895 = vmatprep.subr.mxu0 0.0
    %2896 = vmatpush1.msra.mxu0 %v2636
    %2897 = vmatprep.subr.mxu0 0.0
    %2898 = vmatpush1.msra.mxu0 %v2637
    %2899 = vmatprep.subr.mxu0 0.0
    %2900 = vmatpush1.msra.mxu0 %v2638
    %2901 = vmatprep.subr.mxu0 0.0
    %2902 = vmatpush1.msra.mxu0 %v2639
    %2903 = vmatprep.subr.mxu0 0.0
    %2904 = vmatpush1.msra.mxu0 %v2640
    %2905 = vmatprep.subr.mxu0 0.0
    %2906 = vmatpush1.msra.mxu0 %v2641
    %2907 = vmatprep.subr.mxu0 0.0
    %2908 = vmatpush1.msra.mxu0 %v2642
    %2909 = vmatprep.subr.mxu0 0.0
    %2910 = vmatpush1.msra.mxu0 %v2643
    %2911 = vmatprep.subr.mxu0 0.0
    %2912 = vmatpush1.msra.mxu0 %v2644
    %2913 = vmatprep.subr.mxu0 0.0
    %2914 = vmatpush1.msra.mxu0 %v2645
    %2915 = vmatprep.subr.mxu0 0.0
    %2916 = vmatpush1.msra.mxu0 %v2646
    %2917 = vmatprep.subr.mxu0 0.0
    %2918 = vmatpush1.msra.mxu0 %v2647
    %2919 = vmatprep.subr.mxu0 0.0
    %2920 = vmatpush1.msra.mxu0 %v2648
    %2921 = vmatprep.subr.mxu0 0.0
    %2922 = vmatpush1.msra.mxu0 %v2649
    %2923 = vmatprep.subr.mxu0 0.0
    %2924 = vmatpush1.msra.mxu0 %v2650
    %2925 = vmatprep.subr.mxu0 0.0
    %2926 = vmatpush1.msra.mxu0 %v2651
    %2927 = vmatprep.subr.mxu0 0.0
    %2928 = vmatpush1.msra.mxu0 %v2652
    %2929 = vmatprep.subr.mxu0 0.0
    %2930 = vmatpush1.msra.mxu0 %v2653
    %2931 = vmatprep.subr.mxu0 0.0
    %2932 = vmatpush1.msra.mxu0 %v2654
    %2933 = vmatprep.subr.mxu0 0.0
    %2934 = vmatpush1.msra.mxu0 %v2655
    %2935 = vmatprep.subr.mxu0 0.0
    %2936 = vmatpush1.msra.mxu0 %v2656
    %2937 = vmatprep.subr.mxu0 0.0
    %2938 = vmatpush1.msra.mxu0 %v2657
    %2939 = vmatprep.mubr.f32.mxu0 %v337
    %2940 = vmatmul.mubr.f32.gmra.mrb[0].mxu0 %v336
    %v2941 = vpop.f32.mrb[0].mxu0
    %v2942 = vadd.f32 %v2872, %v2941
    %v2943 = vpop.f32.mrb[0].mxu0
    %2944 = vdwg.mxu0
    %v2945 = vsel %vm340, 1, 0
    %vm2946 = vcmp.eq.s32.totalorder %v2945, 1
    %v2947 = vsel %vm2946, %v2942, -1e+30
    %2948 = vmax.xlane.f32.xlu0 %v2947
    %v2949 = vpop.xlane.xlu0 %2948
    %v2950 = vsub.f32 %v2947, %v2949
    %v2951 = vmul.f32 %v2950, 1.442695
    %v2952 = vpow.pop %v2951
    %2953 = vadd.xlane.f32.xlu0 %v2952
    %v2954 = vpop.xlane.xlu0 %2953
    %v2955 = vrcp.pop %v2954
    %v2956 = vmul.f32 %v2952, %v2955
    %v2957 = vsub.f32 %v2956, %v354
    %v2958 = vmul.f32 %v2957, 0.03125
    %2959 = vxpose.xlu0.b32.start [1/16] %v330, 128
    %2960 = vxpose.xlu0.b32.cont [2/16] 0.0, 128
    %2961 = vxpose.xlu0.b32.cont [3/16] 0.0, 128
    %2962 = vxpose.xlu0.b32.cont [4/16] 0.0, 128
    %2963 = vxpose.xlu0.b32.cont [5/16] 0.0, 128
    %2964 = vxpose.xlu0.b32.cont [6/16] 0.0, 128
    %2965 = vxpose.xlu0.b32.cont [7/16] 0.0, 128
    %2966 = vxpose.xlu0.b32.cont [8/16] 0.0, 128
    %2967 = vxpose.xlu0.b32.cont [9/16] 0.0, 128
    %2968 = vxpose.xlu0.b32.cont [10/16] 0.0, 128
    %2969 = vxpose.xlu0.b32.cont [11/16] 0.0, 128
    %2970 = vxpose.xlu0.b32.cont [12/16] 0.0, 128
    %2971 = vxpose.xlu0.b32.cont [13/16] 0.0, 128
    %2972 = vxpose.xlu0.b32.cont [14/16] 0.0, 128
    %2973 = vxpose.xlu0.b32.cont [15/16] 0.0, 128
    %2974 = vxpose.xlu0.b32.end [16/16] 0.0, 128
    %v2975 = vpop.trf.xlu0
    %v2976 = vpop.trf.xlu0
    %v2977 = vpop.trf.xlu0
    %v2978 = vpop.trf.xlu0
    %v2979 = vpop.trf.xlu0
    %v2980 = vpop.trf.xlu0
    %v2981 = vpop.trf.xlu0
    %v2982 = vpop.trf.xlu0
    %v2983 = vpop.trf.xlu0
    %v2984 = vpop.trf.xlu0
    %v2985 = vpop.trf.xlu0
    %v2986 = vpop.trf.xlu0
    %v2987 = vpop.trf.xlu0
    %v2988 = vpop.trf.xlu0
    %v2989 = vpop.trf.xlu0
    %v2990 = vpop.trf.xlu0
    %2991 = vxpose.xlu0.b32.start [1/16] %v331, 128
    %2992 = vxpose.xlu0.b32.cont [2/16] 0.0, 128
    %2993 = vxpose.xlu0.b32.cont [3/16] 0.0, 128
    %2994 = vxpose.xlu0.b32.cont [4/16] 0.0, 128
    %2995 = vxpose.xlu0.b32.cont [5/16] 0.0, 128
    %2996 = vxpose.xlu0.b32.cont [6/16] 0.0, 128
    %2997 = vxpose.xlu0.b32.cont [7/16] 0.0, 128
    %2998 = vxpose.xlu0.b32.cont [8/16] 0.0, 128
    %2999 = vxpose.xlu0.b32.cont [9/16] 0.0, 128
    %3000 = vxpose.xlu0.b32.cont [10/16] 0.0, 128
    %3001 = vxpose.xlu0.b32.cont [11/16] 0.0, 128
    %3002 = vxpose.xlu0.b32.cont [12/16] 0.0, 128
    %3003 = vxpose.xlu0.b32.cont [13/16] 0.0, 128
    %3004 = vxpose.xlu0.b32.cont [14/16] 0.0, 128
    %3005 = vxpose.xlu0.b32.cont [15/16] 0.0, 128
    %3006 = vxpose.xlu0.b32.end [16/16] 0.0, 128
    %v3007 = vpop.trf.xlu0
    %v3008 = vpop.trf.xlu0
    %v3009 = vpop.trf.xlu0
    %v3010 = vpop.trf.xlu0
    %v3011 = vpop.trf.xlu0
    %v3012 = vpop.trf.xlu0
    %v3013 = vpop.trf.xlu0
    %v3014 = vpop.trf.xlu0
    %v3015 = vpop.trf.xlu0
    %v3016 = vpop.trf.xlu0
    %v3017 = vpop.trf.xlu0
    %v3018 = vpop.trf.xlu0
    %v3019 = vpop.trf.xlu0
    %v3020 = vpop.trf.xlu0
    %v3021 = vpop.trf.xlu0
    %v3022 = vpop.trf.xlu0
    %3023 = vxpose.xlu0.b32.start [1/16] %v332, 128
    %3024 = vxpose.xlu0.b32.cont [2/16] 0.0, 128
    %3025 = vxpose.xlu0.b32.cont [3/16] 0.0, 128
    %3026 = vxpose.xlu0.b32.cont [4/16] 0.0, 128
    %3027 = vxpose.xlu0.b32.cont [5/16] 0.0, 128
    %3028 = vxpose.xlu0.b32.cont [6/16] 0.0, 128
    %3029 = vxpose.xlu0.b32.cont [7/16] 0.0, 128
    %3030 = vxpose.xlu0.b32.cont [8/16] 0.0, 128
    %3031 = vxpose.xlu0.b32.cont [9/16] 0.0, 128
    %3032 = vxpose.xlu0.b32.cont [10/16] 0.0, 128
    %3033 = vxpose.xlu0.b32.cont [11/16] 0.0, 128
    %3034 = vxpose.xlu0.b32.cont [12/16] 0.0, 128
    %3035 = vxpose.xlu0.b32.cont [13/16] 0.0, 128
    %3036 = vxpose.xlu0.b32.cont [14/16] 0.0, 128
    %3037 = vxpose.xlu0.b32.cont [15/16] 0.0, 128
    %3038 = vxpose.xlu0.b32.end [16/16] 0.0, 128
    %v3039 = vpop.trf.xlu0
    %v3040 = vpop.trf.xlu0
    %v3041 = vpop.trf.xlu0
    %v3042 = vpop.trf.xlu0
    %v3043 = vpop.trf.xlu0
    %v3044 = vpop.trf.xlu0
    %v3045 = vpop.trf.xlu0
    %v3046 = vpop.trf.xlu0
    %v3047 = vpop.trf.xlu0
    %v3048 = vpop.trf.xlu0
    %v3049 = vpop.trf.xlu0
    %v3050 = vpop.trf.xlu0
    %v3051 = vpop.trf.xlu0
    %v3052 = vpop.trf.xlu0
    %v3053 = vpop.trf.xlu0
    %v3054 = vpop.trf.xlu0
    %3055 = vxpose.xlu0.b32.start [1/16] %v333, 128
    %3056 = vxpose.xlu0.b32.cont [2/16] 0.0, 128
    %3057 = vxpose.xlu0.b32.cont [3/16] 0.0, 128
    %3058 = vxpose.xlu0.b32.cont [4/16] 0.0, 128
    %3059 = vxpose.xlu0.b32.cont [5/16] 0.0, 128
    %3060 = vxpose.xlu0.b32.cont [6/16] 0.0, 128
    %3061 = vxpose.xlu0.b32.cont [7/16] 0.0, 128
    %3062 = vxpose.xlu0.b32.cont [8/16] 0.0, 128
    %3063 = vxpose.xlu0.b32.cont [9/16] 0.0, 128
    %3064 = vxpose.xlu0.b32.cont [10/16] 0.0, 128
    %3065 = vxpose.xlu0.b32.cont [11/16] 0.0, 128
    %3066 = vxpose.xlu0.b32.cont [12/16] 0.0, 128
    %3067 = vxpose.xlu0.b32.cont [13/16] 0.0, 128
    %3068 = vxpose.xlu0.b32.cont [14/16] 0.0, 128
    %3069 = vxpose.xlu0.b32.cont [15/16] 0.0, 128
    %3070 = vxpose.xlu0.b32.end [16/16] 0.0, 128
    %v3071 = vpop.trf.xlu0
    %v3072 = vpop.trf.xlu0
    %v3073 = vpop.trf.xlu0
    %v3074 = vpop.trf.xlu0
    %v3075 = vpop.trf.xlu0
    %v3076 = vpop.trf.xlu0
    %v3077 = vpop.trf.xlu0
    %v3078 = vpop.trf.xlu0
    %v3079 = vpop.trf.xlu0
    %v3080 = vpop.trf.xlu0
    %v3081 = vpop.trf.xlu0
    %v3082 = vpop.trf.xlu0
    %v3083 = vpop.trf.xlu0
    %v3084 = vpop.trf.xlu0
    %v3085 = vpop.trf.xlu0
    %v3086 = vpop.trf.xlu0
    %3087 = vxpose.xlu0.b32.start [1/16] %v334, 128
    %3088 = vxpose.xlu0.b32.cont [2/16] 0.0, 128
    %3089 = vxpose.xlu0.b32.cont [3/16] 0.0, 128
    %3090 = vxpose.xlu0.b32.cont [4/16] 0.0, 128
    %3091 = vxpose.xlu0.b32.cont [5/16] 0.0, 128
    %3092 = vxpose.xlu0.b32.cont [6/16] 0.0, 128
    %3093 = vxpose.xlu0.b32.cont [7/16] 0.0, 128
    %3094 = vxpose.xlu0.b32.cont [8/16] 0.0, 128
    %3095 = vxpose.xlu0.b32.cont [9/16] 0.0, 128
    %3096 = vxpose.xlu0.b32.cont [10/16] 0.0, 128
    %3097 = vxpose.xlu0.b32.cont [11/16] 0.0, 128
    %3098 = vxpose.xlu0.b32.cont [12/16] 0.0, 128
    %3099 = vxpose.xlu0.b32.cont [13/16] 0.0, 128
    %3100 = vxpose.xlu0.b32.cont [14/16] 0.0, 128
    %3101 = vxpose.xlu0.b32.cont [15/16] 0.0, 128
    %3102 = vxpose.xlu0.b32.end [16/16] 0.0, 128
    %v3103 = vpop.trf.xlu0
    %v3104 = vpop.trf.xlu0
    %v3105 = vpop.trf.xlu0
    %v3106 = vpop.trf.xlu0
    %v3107 = vpop.trf.xlu0
    %v3108 = vpop.trf.xlu0
    %v3109 = vpop.trf.xlu0
    %v3110 = vpop.trf.xlu0
    %v3111 = vpop.trf.xlu0
    %v3112 = vpop.trf.xlu0
    %v3113 = vpop.trf.xlu0
    %v3114 = vpop.trf.xlu0
    %v3115 = vpop.trf.xlu0
    %v3116 = vpop.trf.xlu0
    %v3117 = vpop.trf.xlu0
    %v3118 = vpop.trf.xlu0
    %3119 = vxpose.xlu0.b32.start [1/16] %v335, 128
    %3120 = vxpose.xlu0.b32.cont [2/16] 0.0, 128
    %3121 = vxpose.xlu0.b32.cont [3/16] 0.0, 128
    %3122 = vxpose.xlu0.b32.cont [4/16] 0.0, 128
    %3123 = vxpose.xlu0.b32.cont [5/16] 0.0, 128
    %3124 = vxpose.xlu0.b32.cont [6/16] 0.0, 128
    %3125 = vxpose.xlu0.b32.cont [7/16] 0.0, 128
    %3126 = vxpose.xlu0.b32.cont [8/16] 0.0, 128
    %3127 = vxpose.xlu0.b32.cont [9/16] 0.0, 128
    %3128 = vxpose.xlu0.b32.cont [10/16] 0.0, 128
    %3129 = vxpose.xlu0.b32.cont [11/16] 0.0, 128
    %3130 = vxpose.xlu0.b32.cont [12/16] 0.0, 128
    %3131 = vxpose.xlu0.b32.cont [13/16] 0.0, 128
    %3132 = vxpose.xlu0.b32.cont [14/16] 0.0, 128
    %3133 = vxpose.xlu0.b32.cont [15/16] 0.0, 128
    %3134 = vxpose.xlu0.b32.end [16/16] 0.0, 128
    %v3135 = vpop.trf.xlu0
    %v3136 = vpop.trf.xlu0
    %v3137 = vpop.trf.xlu0
    %v3138 = vpop.trf.xlu0
    %v3139 = vpop.trf.xlu0
    %v3140 = vpop.trf.xlu0
    %v3141 = vpop.trf.xlu0
    %v3142 = vpop.trf.xlu0
    %v3143 = vpop.trf.xlu0
    %v3144 = vpop.trf.xlu0
    %v3145 = vpop.trf.xlu0
    %v3146 = vpop.trf.xlu0
    %v3147 = vpop.trf.xlu0
    %v3148 = vpop.trf.xlu0
    %v3149 = vpop.trf.xlu0
    %v3150 = vpop.trf.xlu0
    %3151 = vxpose.xlu0.b32.start [1/16] %v336, 128
    %3152 = vxpose.xlu0.b32.cont [2/16] 0.0, 128
    %3153 = vxpose.xlu0.b32.cont [3/16] 0.0, 128
    %3154 = vxpose.xlu0.b32.cont [4/16] 0.0, 128
    %3155 = vxpose.xlu0.b32.cont [5/16] 0.0, 128
    %3156 = vxpose.xlu0.b32.cont [6/16] 0.0, 128
    %3157 = vxpose.xlu0.b32.cont [7/16] 0.0, 128
    %3158 = vxpose.xlu0.b32.cont [8/16] 0.0, 128
    %3159 = vxpose.xlu0.b32.cont [9/16] 0.0, 128
    %3160 = vxpose.xlu0.b32.cont [10/16] 0.0, 128
    %3161 = vxpose.xlu0.b32.cont [11/16] 0.0, 128
    %3162 = vxpose.xlu0.b32.cont [12/16] 0.0, 128
    %3163 = vxpose.xlu0.b32.cont [13/16] 0.0, 128
    %3164 = vxpose.xlu0.b32.cont [14/16] 0.0, 128
    %3165 = vxpose.xlu0.b32.cont [15/16] 0.0, 128
    %3166 = vxpose.xlu0.b32.end [16/16] 0.0, 128
    %v3167 = vpop.trf.xlu0
    %v3168 = vpop.trf.xlu0
    %v3169 = vpop.trf.xlu0
    %v3170 = vpop.trf.xlu0
    %v3171 = vpop.trf.xlu0
    %v3172 = vpop.trf.xlu0
    %v3173 = vpop.trf.xlu0
    %v3174 = vpop.trf.xlu0
    %v3175 = vpop.trf.xlu0
    %v3176 = vpop.trf.xlu0
    %v3177 = vpop.trf.xlu0
    %v3178 = vpop.trf.xlu0
    %v3179 = vpop.trf.xlu0
    %v3180 = vpop.trf.xlu0
    %v3181 = vpop.trf.xlu0
    %v3182 = vpop.trf.xlu0
    %3183 = vxpose.xlu0.b32.start [1/16] %v337, 128
    %3184 = vxpose.xlu0.b32.cont [2/16] 0.0, 128
    %3185 = vxpose.xlu0.b32.cont [3/16] 0.0, 128
    %3186 = vxpose.xlu0.b32.cont [4/16] 0.0, 128
    %3187 = vxpose.xlu0.b32.cont [5/16] 0.0, 128
    %3188 = vxpose.xlu0.b32.cont [6/16] 0.0, 128
    %3189 = vxpose.xlu0.b32.cont [7/16] 0.0, 128
    %3190 = vxpose.xlu0.b32.cont [8/16] 0.0, 128
    %3191 = vxpose.xlu0.b32.cont [9/16] 0.0, 128
    %3192 = vxpose.xlu0.b32.cont [10/16] 0.0, 128
    %3193 = vxpose.xlu0.b32.cont [11/16] 0.0, 128
    %3194 = vxpose.xlu0.b32.cont [12/16] 0.0, 128
    %3195 = vxpose.xlu0.b32.cont [13/16] 0.0, 128
    %3196 = vxpose.xlu0.b32.cont [14/16] 0.0, 128
    %3197 = vxpose.xlu0.b32.cont [15/16] 0.0, 128
    %3198 = vxpose.xlu0.b32.end [16/16] 0.0, 128
    %v3199 = vpop.trf.xlu0
    %v3200 = vpop.trf.xlu0
    %v3201 = vpop.trf.xlu0
    %v3202 = vpop.trf.xlu0
    %v3203 = vpop.trf.xlu0
    %v3204 = vpop.trf.xlu0
    %v3205 = vpop.trf.xlu0
    %v3206 = vpop.trf.xlu0
    %v3207 = vpop.trf.xlu0
    %v3208 = vpop.trf.xlu0
    %v3209 = vpop.trf.xlu0
    %v3210 = vpop.trf.xlu0
    %v3211 = vpop.trf.xlu0
    %v3212 = vpop.trf.xlu0
    %v3213 = vpop.trf.xlu0
    %v3214 = vpop.trf.xlu0
    %vm3215 = vcmask 64512
    %v3217 = vsel %vm3215, %v2975, 0
    %v3220 = vsel %vm3215, %v2976, 0
    %v3223 = vsel %vm3215, %v2977, 0
    %v3226 = vsel %vm3215, %v2978, 0
    %v3229 = vsel %vm3215, %v2979, 0
    %v3232 = vsel %vm3215, %v2980, 0
    %v3235 = vsel %vm3215, %v2981, 0
    %v3238 = vsel %vm3215, %v2982, 0
    %v3241 = vsel %vm3215, %v2983, 0
    %v3244 = vsel %vm3215, %v2984, 0
    %v3247 = vsel %vm3215, %v2985, 0
    %v3250 = vsel %vm3215, %v2986, 0
    %v3253 = vsel %vm3215, %v2987, 0
    %v3256 = vsel %vm3215, %v2988, 0
    %v3259 = vsel %vm3215, %v2989, 0
    %v3262 = vsel %vm3215, %v2990, 0
    %v3265 = vsel %vm3215, %v3007, 0
    %v3268 = vsel %vm3215, %v3008, 0
    %v3271 = vsel %vm3215, %v3009, 0
    %v3274 = vsel %vm3215, %v3010, 0
    %v3277 = vsel %vm3215, %v3011, 0
    %v3280 = vsel %vm3215, %v3012, 0
    %v3283 = vsel %vm3215, %v3013, 0
    %v3286 = vsel %vm3215, %v3014, 0
    %v3289 = vsel %vm3215, %v3015, 0
    %v3292 = vsel %vm3215, %v3016, 0
    %v3295 = vsel %vm3215, %v3017, 0
    %v3298 = vsel %vm3215, %v3018, 0
    %v3301 = vsel %vm3215, %v3019, 0
    %v3304 = vsel %vm3215, %v3020, 0
    %v3307 = vsel %vm3215, %v3021, 0
    %v3310 = vsel %vm3215, %v3022, 0
    %v3313 = vsel %vm3215, %v3039, 0
    %v3316 = vsel %vm3215, %v3040, 0
    %v3319 = vsel %vm3215, %v3041, 0
    %v3322 = vsel %vm3215, %v3042, 0
    %v3325 = vsel %vm3215, %v3043, 0
    %v3328 = vsel %vm3215, %v3044, 0
    %v3331 = vsel %vm3215, %v3045, 0
    %v3334 = vsel %vm3215, %v3046, 0
    %v3337 = vsel %vm3215, %v3047, 0
    %v3340 = vsel %vm3215, %v3048, 0
    %v3343 = vsel %vm3215, %v3049, 0
    %v3346 = vsel %vm3215, %v3050, 0
    %v3349 = vsel %vm3215, %v3051, 0
    %v3352 = vsel %vm3215, %v3052, 0
    %v3355 = vsel %vm3215, %v3053, 0
    %v3358 = vsel %vm3215, %v3054, 0
    %v3361 = vsel %vm3215, %v3071, 0
    %v3364 = vsel %vm3215, %v3072, 0
    %v3367 = vsel %vm3215, %v3073, 0
    %v3370 = vsel %vm3215, %v3074, 0
    %v3373 = vsel %vm3215, %v3075, 0
    %v3376 = vsel %vm3215, %v3076, 0
    %v3379 = vsel %vm3215, %v3077, 0
    %v3382 = vsel %vm3215, %v3078, 0
    %v3385 = vsel %vm3215, %v3079, 0
    %v3388 = vsel %vm3215, %v3080, 0
    %v3391 = vsel %vm3215, %v3081, 0
    %v3394 = vsel %vm3215, %v3082, 0
    %v3397 = vsel %vm3215, %v3083, 0
    %v3400 = vsel %vm3215, %v3084, 0
    %v3403 = vsel %vm3215, %v3085, 0
    %v3406 = vsel %vm3215, %v3086, 0
    %v3409 = vsel %vm3215, %v3103, 0
    %v3412 = vsel %vm3215, %v3104, 0
    %v3415 = vsel %vm3215, %v3105, 0
    %v3418 = vsel %vm3215, %v3106, 0
    %v3421 = vsel %vm3215, %v3107, 0
    %v3424 = vsel %vm3215, %v3108, 0
    %v3427 = vsel %vm3215, %v3109, 0
    %v3430 = vsel %vm3215, %v3110, 0
    %v3433 = vsel %vm3215, %v3111, 0
    %v3436 = vsel %vm3215, %v3112, 0
    %v3439 = vsel %vm3215, %v3113, 0
    %v3442 = vsel %vm3215, %v3114, 0
    %v3445 = vsel %vm3215, %v3115, 0
    %v3448 = vsel %vm3215, %v3116, 0
    %v3451 = vsel %vm3215, %v3117, 0
    %v3454 = vsel %vm3215, %v3118, 0
    %v3457 = vsel %vm3215, %v3135, 0
    %v3460 = vsel %vm3215, %v3136, 0
    %v3463 = vsel %vm3215, %v3137, 0
    %v3466 = vsel %vm3215, %v3138, 0
    %v3469 = vsel %vm3215, %v3139, 0
    %v3472 = vsel %vm3215, %v3140, 0
    %v3475 = vsel %vm3215, %v3141, 0
    %v3478 = vsel %vm3215, %v3142, 0
    %v3481 = vsel %vm3215, %v3143, 0
    %v3484 = vsel %vm3215, %v3144, 0
    %v3487 = vsel %vm3215, %v3145, 0
    %v3490 = vsel %vm3215, %v3146, 0
    %v3493 = vsel %vm3215, %v3147, 0
    %v3496 = vsel %vm3215, %v3148, 0
    %v3499 = vsel %vm3215, %v3149, 0
    %v3502 = vsel %vm3215, %v3150, 0
    %v3505 = vsel %vm3215, %v3167, 0
    %v3508 = vsel %vm3215, %v3168, 0
    %v3511 = vsel %vm3215, %v3169, 0
    %v3514 = vsel %vm3215, %v3170, 0
    %v3517 = vsel %vm3215, %v3171, 0
    %v3520 = vsel %vm3215, %v3172, 0
    %v3523 = vsel %vm3215, %v3173, 0
    %v3526 = vsel %vm3215, %v3174, 0
    %v3529 = vsel %vm3215, %v3175, 0
    %v3532 = vsel %vm3215, %v3176, 0
    %v3535 = vsel %vm3215, %v3177, 0
    %v3538 = vsel %vm3215, %v3178, 0
    %v3541 = vsel %vm3215, %v3179, 0
    %v3544 = vsel %vm3215, %v3180, 0
    %v3547 = vsel %vm3215, %v3181, 0
    %v3550 = vsel %vm3215, %v3182, 0
    %v3553 = vsel %vm3215, %v3199, 0
    %v3556 = vsel %vm3215, %v3200, 0
    %v3559 = vsel %vm3215, %v3201, 0
    %v3562 = vsel %vm3215, %v3202, 0
    %v3565 = vsel %vm3215, %v3203, 0
    %v3568 = vsel %vm3215, %v3204, 0
    %v3571 = vsel %vm3215, %v3205, 0
    %v3574 = vsel %vm3215, %v3206, 0
    %v3577 = vsel %vm3215, %v3207, 0
    %v3580 = vsel %vm3215, %v3208, 0
    %v3583 = vsel %vm3215, %v3209, 0
    %v3586 = vsel %vm3215, %v3210, 0
    %v3589 = vsel %vm3215, %v3211, 0
    %v3592 = vsel %vm3215, %v3212, 0
    %v3595 = vsel %vm3215, %v3213, 0
    %v3598 = vsel %vm3215, %v3214, 0
    %3600 = vmatprep.subr.mxu0 0.0
    %3601 = vmatpush1.msra.mxu0 %v2958
    %3602 = vmatprep.subr.mxu0 0.0
    %3603 = vmatpush1.msra.mxu0 0.0
    %3604 = vmatprep.subr.mxu0 0.0
    %3605 = vmatpush1.msra.mxu0 0.0
    %3606 = vmatprep.subr.mxu0 0.0
    %3607 = vmatpush1.msra.mxu0 0.0
    %3608 = vmatprep.subr.mxu0 0.0
    %3609 = vmatpush1.msra.mxu0 0.0
    %3610 = vmatprep.subr.mxu0 0.0
    %3611 = vmatpush1.msra.mxu0 0.0
    %3612 = vmatprep.subr.mxu0 0.0
    %3613 = vmatpush1.msra.mxu0 0.0
    %3614 = vmatprep.subr.mxu0 0.0
    %3615 = vmatpush1.msra.mxu0 0.0
    %3616 = vmatprep.subr.mxu0 0.0
    %3617 = vmatpush1.msra.mxu0 0.0
    %3618 = vmatprep.subr.mxu0 0.0
    %3619 = vmatpush1.msra.mxu0 0.0
    %3620 = vmatprep.subr.mxu0 0.0
    %3621 = vmatpush1.msra.mxu0 0.0
    %3622 = vmatprep.subr.mxu0 0.0
    %3623 = vmatpush1.msra.mxu0 0.0
    %3624 = vmatprep.subr.mxu0 0.0
    %3625 = vmatpush1.msra.mxu0 0.0
    %3626 = vmatprep.subr.mxu0 0.0
    %3627 = vmatpush1.msra.mxu0 0.0
    %3628 = vmatprep.subr.mxu0 0.0
    %3629 = vmatpush1.msra.mxu0 0.0
    %3630 = vmatprep.subr.mxu0 0.0
    %3631 = vmatpush1.msra.mxu0 0.0
    %3632 = vmatprep.subr.mxu0 0.0
    %3633 = vmatpush1.msra.mxu0 0.0
    %3634 = vmatprep.subr.mxu0 0.0
    %3635 = vmatpush1.msra.mxu0 0.0
    %3636 = vmatprep.subr.mxu0 0.0
    %3637 = vmatpush1.msra.mxu0 0.0
    %3638 = vmatprep.subr.mxu0 0.0
    %3639 = vmatpush1.msra.mxu0 0.0
    %3640 = vmatprep.subr.mxu0 0.0
    %3641 = vmatpush1.msra.mxu0 0.0
    %3642 = vmatprep.subr.mxu0 0.0
    %3643 = vmatpush1.msra.mxu0 0.0
    %3644 = vmatprep.subr.mxu0 0.0
    %3645 = vmatpush1.msra.mxu0 0.0
    %3646 = vmatprep.subr.mxu0 0.0
    %3647 = vmatpush1.msra.mxu0 0.0
    %3648 = vmatprep.subr.mxu0 0.0
    %3649 = vmatpush1.msra.mxu0 0.0
    %3650 = vmatprep.subr.mxu0 0.0
    %3651 = vmatpush1.msra.mxu0 0.0
    %3652 = vmatprep.subr.mxu0 0.0
    %3653 = vmatpush1.msra.mxu0 0.0
    %3654 = vmatprep.subr.mxu0 0.0
    %3655 = vmatpush1.msra.mxu0 0.0
    %3656 = vmatprep.subr.mxu0 0.0
    %3657 = vmatpush1.msra.mxu0 0.0
    %3658 = vmatprep.subr.mxu0 0.0
    %3659 = vmatpush1.msra.mxu0 0.0
    %3660 = vmatprep.subr.mxu0 0.0
    %3661 = vmatpush1.msra.mxu0 0.0
    %3662 = vmatprep.subr.mxu0 0.0
    %3663 = vmatpush1.msra.mxu0 0.0
    %3664 = vmatprep.mubr.f32.mxu0 0.0
    %3665 = vmatmul.mubr.f32.gmra.mrb[0].mxu0 %v3217
    %v3666 = vpop.f32.mrb[0].mxu0
    %v3667 = vadd.f32 0.0, %v3666
    %v3668 = vpop.f32.mrb[0].mxu0
    %3669 = vmatprep.mubr.f32.mxu0 0.0
    %3670 = vmatmul.mubr.f32.gmra.mrb[0].mxu0 %v3220
    %v3671 = vpop.f32.mrb[0].mxu0
    %v3672 = vadd.f32 0.0, %v3671
    %v3673 = vpop.f32.mrb[0].mxu0
    %3674 = vmatprep.mubr.f32.mxu0 0.0
    %3675 = vmatmul.mubr.f32.gmra.mrb[0].mxu0 %v3223
    %v3676 = vpop.f32.mrb[0].mxu0
    %v3677 = vadd.f32 0.0, %v3676
    %v3678 = vpop.f32.mrb[0].mxu0
    %3679 = vmatprep.mubr.f32.mxu0 0.0
    %3680 = vmatmul.mubr.f32.gmra.mrb[0].mxu0 %v3226
    %v3681 = vpop.f32.mrb[0].mxu0
    %v3682 = vadd.f32 0.0, %v3681
    %v3683 = vpop.f32.mrb[0].mxu0
    %3684 = vmatprep.mubr.f32.mxu0 0.0
    %3685 = vmatmul.mubr.f32.gmra.mrb[0].mxu0 %v3229
    %v3686 = vpop.f32.mrb[0].mxu0
    %v3687 = vadd.f32 0.0, %v3686
    %v3688 = vpop.f32.mrb[0].mxu0
    %3689 = vmatprep.mubr.f32.mxu0 0.0
    %3690 = vmatmul.mubr.f32.gmra.mrb[0].mxu0 %v3232
    %v3691 = vpop.f32.mrb[0].mxu0
    %v3692 = vadd.f32 0.0, %v3691
    %v3693 = vpop.f32.mrb[0].mxu0
    %3694 = vmatprep.mubr.f32.mxu0 0.0
    %3695 = vmatmul.mubr.f32.gmra.mrb[0].mxu0 %v3235
    %v3696 = vpop.f32.mrb[0].mxu0
    %v3697 = vadd.f32 0.0, %v3696
    %v3698 = vpop.f32.mrb[0].mxu0
    %3699 = vmatprep.mubr.f32.mxu0 0.0
    %3700 = vmatmul.mubr.f32.gmra.mrb[0].mxu0 %v3238
    %v3701 = vpop.f32.mrb[0].mxu0
    %v3702 = vadd.f32 0.0, %v3701
    %v3703 = vpop.f32.mrb[0].mxu0
    %3704 = vmatprep.mubr.f32.mxu0 0.0
    %3705 = vmatmul.mubr.f32.gmra.mrb[0].mxu0 %v3241
    %v3706 = vpop.f32.mrb[0].mxu0
    %v3707 = vadd.f32 0.0, %v3706
    %v3708 = vpop.f32.mrb[0].mxu0
    %3709 = vmatprep.mubr.f32.mxu0 0.0
    %3710 = vmatmul.mubr.f32.gmra.mrb[0].mxu0 %v3244
    %v3711 = vpop.f32.mrb[0].mxu0
    %v3712 = vadd.f32 0.0, %v3711
    %v3713 = vpop.f32.mrb[0].mxu0
    %3714 = vmatprep.mubr.f32.mxu0 0.0
    %3715 = vmatmul.mubr.f32.gmra.mrb[0].mxu0 %v3247
    %v3716 = vpop.f32.mrb[0].mxu0
    %v3717 = vadd.f32 0.0, %v3716
    %v3718 = vpop.f32.mrb[0].mxu0
    %3719 = vmatprep.mubr.f32.mxu0 0.0
    %3720 = vmatmul.mubr.f32.gmra.mrb[0].mxu0 %v3250
    %v3721 = vpop.f32.mrb[0].mxu0
    %v3722 = vadd.f32 0.0, %v3721
    %v3723 = vpop.f32.mrb[0].mxu0
    %3724 = vmatprep.mubr.f32.mxu0 0.0
    %3725 = vmatmul.mubr.f32.gmra.mrb[0].mxu0 %v3253
    %v3726 = vpop.f32.mrb[0].mxu0
    %v3727 = vadd.f32 0.0, %v3726
    %v3728 = vpop.f32.mrb[0].mxu0
    %3729 = vmatprep.mubr.f32.mxu0 0.0
    %3730 = vmatmul.mubr.f32.gmra.mrb[0].mxu0 %v3256
    %v3731 = vpop.f32.mrb[0].mxu0
    %v3732 = vadd.f32 0.0, %v3731
    %v3733 = vpop.f32.mrb[0].mxu0
    %3734 = vmatprep.mubr.f32.mxu0 0.0
    %3735 = vmatmul.mubr.f32.gmra.mrb[0].mxu0 %v3259
    %v3736 = vpop.f32.mrb[0].mxu0
    %v3737 = vadd.f32 0.0, %v3736
    %v3738 = vpop.f32.mrb[0].mxu0
    %3739 = vmatprep.mubr.f32.mxu0 0.0
    %3740 = vmatmul.mubr.f32.gmra.mrb[0].mxu0 %v3262
    %v3741 = vpop.f32.mrb[0].mxu0
    %v3742 = vadd.f32 0.0, %v3741
    %v3743 = vpop.f32.mrb[0].mxu0
    %3744 = vmatprep.mubr.f32.mxu0 0.0
    %3745 = vmatmul.mubr.f32.gmra.mrb[0].mxu0 %v3265
    %v3746 = vpop.f32.mrb[0].mxu0
    %v3747 = vadd.f32 0.0, %v3746
    %v3748 = vpop.f32.mrb[0].mxu0
    %3749 = vmatprep.mubr.f32.mxu0 0.0
    %3750 = vmatmul.mubr.f32.gmra.mrb[0].mxu0 %v3268
    %v3751 = vpop.f32.mrb[0].mxu0
    %v3752 = vadd.f32 0.0, %v3751
    %v3753 = vpop.f32.mrb[0].mxu0
    %3754 = vmatprep.mubr.f32.mxu0 0.0
    %3755 = vmatmul.mubr.f32.gmra.mrb[0].mxu0 %v3271
    %v3756 = vpop.f32.mrb[0].mxu0
    %v3757 = vadd.f32 0.0, %v3756
    %v3758 = vpop.f32.mrb[0].mxu0
    %3759 = vmatprep.mubr.f32.mxu0 0.0
    %3760 = vmatmul.mubr.f32.gmra.mrb[0].mxu0 %v3274
    %v3761 = vpop.f32.mrb[0].mxu0
    %v3762 = vadd.f32 0.0, %v3761
    %v3763 = vpop.f32.mrb[0].mxu0
    %3764 = vmatprep.mubr.f32.mxu0 0.0
    %3765 = vmatmul.mubr.f32.gmra.mrb[0].mxu0 %v3277
    %v3766 = vpop.f32.mrb[0].mxu0
    %v3767 = vadd.f32 0.0, %v3766
    %v3768 = vpop.f32.mrb[0].mxu0
    %3769 = vmatprep.mubr.f32.mxu0 0.0
    %3770 = vmatmul.mubr.f32.gmra.mrb[0].mxu0 %v3280
    %v3771 = vpop.f32.mrb[0].mxu0
    %v3772 = vadd.f32 0.0, %v3771
    %v3773 = vpop.f32.mrb[0].mxu0
    %3774 = vmatprep.mubr.f32.mxu0 0.0
    %3775 = vmatmul.mubr.f32.gmra.mrb[0].mxu0 %v3283
    %v3776 = vpop.f32.mrb[0].mxu0
    %v3777 = vadd.f32 0.0, %v3776
    %v3778 = vpop.f32.mrb[0].mxu0
    %3779 = vmatprep.mubr.f32.mxu0 0.0
    %3780 = vmatmul.mubr.f32.gmra.mrb[0].mxu0 %v3286
    %v3781 = vpop.f32.mrb[0].mxu0
    %v3782 = vadd.f32 0.0, %v3781
    %v3783 = vpop.f32.mrb[0].mxu0
    %3784 = vmatprep.mubr.f32.mxu0 0.0
    %3785 = vmatmul.mubr.f32.gmra.mrb[0].mxu0 %v3289
    %v3786 = vpop.f32.mrb[0].mxu0
    %v3787 = vadd.f32 0.0, %v3786
    %v3788 = vpop.f32.mrb[0].mxu0
    %3789 = vmatprep.mubr.f32.mxu0 0.0
    %3790 = vmatmul.mubr.f32.gmra.mrb[0].mxu0 %v3292
    %v3791 = vpop.f32.mrb[0].mxu0
    %v3792 = vadd.f32 0.0, %v3791
    %v3793 = vpop.f32.mrb[0].mxu0
    %3794 = vmatprep.mubr.f32.mxu0 0.0
    %3795 = vmatmul.mubr.f32.gmra.mrb[0].mxu0 %v3295
    %v3796 = vpop.f32.mrb[0].mxu0
    %v3797 = vadd.f32 0.0, %v3796
    %v3798 = vpop.f32.mrb[0].mxu0
    %3799 = vmatprep.mubr.f32.mxu0 0.0
    %3800 = vmatmul.mubr.f32.gmra.mrb[0].mxu0 %v3298
    %v3801 = vpop.f32.mrb[0].mxu0
    %v3802 = vadd.f32 0.0, %v3801
    %v3803 = vpop.f32.mrb[0].mxu0
    %3804 = vmatprep.mubr.f32.mxu0 0.0
    %3805 = vmatmul.mubr.f32.gmra.mrb[0].mxu0 %v3301
    %v3806 = vpop.f32.mrb[0].mxu0
    %v3807 = vadd.f32 0.0, %v3806
    %v3808 = vpop.f32.mrb[0].mxu0
    %3809 = vmatprep.mubr.f32.mxu0 0.0
    %3810 = vmatmul.mubr.f32.gmra.mrb[0].mxu0 %v3304
    %v3811 = vpop.f32.mrb[0].mxu0
    %v3812 = vadd.f32 0.0, %v3811
    %v3813 = vpop.f32.mrb[0].mxu0
    %3814 = vmatprep.mubr.f32.mxu0 0.0
    %3815 = vmatmul.mubr.f32.gmra.mrb[0].mxu0 %v3307
    %v3816 = vpop.f32.mrb[0].mxu0
    %v3817 = vadd.f32 0.0, %v3816
    %v3818 = vpop.f32.mrb[0].mxu0
    %3819 = vmatprep.mubr.f32.mxu0 0.0
    %3820 = vmatmul.mubr.f32.gmra.mrb[0].mxu0 %v3310
    %v3821 = vpop.f32.mrb[0].mxu0
    %v3822 = vadd.f32 0.0, %v3821
    %v3823 = vpop.f32.mrb[0].mxu0
    %3824 = vmatprep.mubr.f32.mxu0 0.0
    %3825 = vmatmul.mubr.f32.gmra.mrb[0].mxu0 %v3313
    %v3826 = vpop.f32.mrb[0].mxu0
    %v3827 = vadd.f32 0.0, %v3826
    %v3828 = vpop.f32.mrb[0].mxu0
    %3829 = vmatprep.mubr.f32.mxu0 0.0
    %3830 = vmatmul.mubr.f32.gmra.mrb[0].mxu0 %v3316
    %v3831 = vpop.f32.mrb[0].mxu0
    %v3832 = vadd.f32 0.0, %v3831
    %v3833 = vpop.f32.mrb[0].mxu0
    %3834 = vmatprep.mubr.f32.mxu0 0.0
    %3835 = vmatmul.mubr.f32.gmra.mrb[0].mxu0 %v3319
    %v3836 = vpop.f32.mrb[0].mxu0
    %v3837 = vadd.f32 0.0, %v3836
    %v3838 = vpop.f32.mrb[0].mxu0
    %3839 = vmatprep.mubr.f32.mxu0 0.0
    %3840 = vmatmul.mubr.f32.gmra.mrb[0].mxu0 %v3322
    %v3841 = vpop.f32.mrb[0].mxu0
    %v3842 = vadd.f32 0.0, %v3841
    %v3843 = vpop.f32.mrb[0].mxu0
    %3844 = vmatprep.mubr.f32.mxu0 0.0
    %3845 = vmatmul.mubr.f32.gmra.mrb[0].mxu0 %v3325
    %v3846 = vpop.f32.mrb[0].mxu0
    %v3847 = vadd.f32 0.0, %v3846
    %v3848 = vpop.f32.mrb[0].mxu0
    %3849 = vmatprep.mubr.f32.mxu0 0.0
    %3850 = vmatmul.mubr.f32.gmra.mrb[0].mxu0 %v3328
    %v3851 = vpop.f32.mrb[0].mxu0
    %v3852 = vadd.f32 0.0, %v3851
    %v3853 = vpop.f32.mrb[0].mxu0
    %3854 = vmatprep.mubr.f32.mxu0 0.0
    %3855 = vmatmul.mubr.f32.gmra.mrb[0].mxu0 %v3331
    %v3856 = vpop.f32.mrb[0].mxu0
    %v3857 = vadd.f32 0.0, %v3856
    %v3858 = vpop.f32.mrb[0].mxu0
    %3859 = vmatprep.mubr.f32.mxu0 0.0
    %3860 = vmatmul.mubr.f32.gmra.mrb[0].mxu0 %v3334
    %v3861 = vpop.f32.mrb[0].mxu0
    %v3862 = vadd.f32 0.0, %v3861
    %v3863 = vpop.f32.mrb[0].mxu0
    %3864 = vmatprep.mubr.f32.mxu0 0.0
    %3865 = vmatmul.mubr.f32.gmra.mrb[0].mxu0 %v3337
    %v3866 = vpop.f32.mrb[0].mxu0
    %v3867 = vadd.f32 0.0, %v3866
    %v3868 = vpop.f32.mrb[0].mxu0
    %3869 = vmatprep.mubr.f32.mxu0 0.0
    %3870 = vmatmul.mubr.f32.gmra.mrb[0].mxu0 %v3340
    %v3871 = vpop.f32.mrb[0].mxu0
    %v3872 = vadd.f32 0.0, %v3871
    %v3873 = vpop.f32.mrb[0].mxu0
    %3874 = vmatprep.mubr.f32.mxu0 0.0
    %3875 = vmatmul.mubr.f32.gmra.mrb[0].mxu0 %v3343
    %v3876 = vpop.f32.mrb[0].mxu0
    %v3877 = vadd.f32 0.0, %v3876
    %v3878 = vpop.f32.mrb[0].mxu0
    %3879 = vmatprep.mubr.f32.mxu0 0.0
    %3880 = vmatmul.mubr.f32.gmra.mrb[0].mxu0 %v3346
    %v3881 = vpop.f32.mrb[0].mxu0
    %v3882 = vadd.f32 0.0, %v3881
    %v3883 = vpop.f32.mrb[0].mxu0
    %3884 = vmatprep.mubr.f32.mxu0 0.0
    %3885 = vmatmul.mubr.f32.gmra.mrb[0].mxu0 %v3349
    %v3886 = vpop.f32.mrb[0].mxu0
    %v3887 = vadd.f32 0.0, %v3886
    %v3888 = vpop.f32.mrb[0].mxu0
    %3889 = vmatprep.mubr.f32.mxu0 0.0
    %3890 = vmatmul.mubr.f32.gmra.mrb[0].mxu0 %v3352
    %v3891 = vpop.f32.mrb[0].mxu0
    %v3892 = vadd.f32 0.0, %v3891
    %v3893 = vpop.f32.mrb[0].mxu0
    %3894 = vmatprep.mubr.f32.mxu0 0.0
    %3895 = vmatmul.mubr.f32.gmra.mrb[0].mxu0 %v3355
    %v3896 = vpop.f32.mrb[0].mxu0
    %v3897 = vadd.f32 0.0, %v3896
    %v3898 = vpop.f32.mrb[0].mxu0
    %3899 = vmatprep.mubr.f32.mxu0 0.0
    %3900 = vmatmul.mubr.f32.gmra.mrb[0].mxu0 %v3358
    %v3901 = vpop.f32.mrb[0].mxu0
    %v3902 = vadd.f32 0.0, %v3901
    %v3903 = vpop.f32.mrb[0].mxu0
    %3904 = vmatprep.mubr.f32.mxu0 0.0
    %3905 = vmatmul.mubr.f32.gmra.mrb[0].mxu0 %v3361
    %v3906 = vpop.f32.mrb[0].mxu0
    %v3907 = vadd.f32 0.0, %v3906
    %v3908 = vpop.f32.mrb[0].mxu0
    %3909 = vmatprep.mubr.f32.mxu0 0.0
    %3910 = vmatmul.mubr.f32.gmra.mrb[0].mxu0 %v3364
    %v3911 = vpop.f32.mrb[0].mxu0
    %v3912 = vadd.f32 0.0, %v3911
    %v3913 = vpop.f32.mrb[0].mxu0
    %3914 = vmatprep.mubr.f32.mxu0 0.0
    %3915 = vmatmul.mubr.f32.gmra.mrb[0].mxu0 %v3367
    %v3916 = vpop.f32.mrb[0].mxu0
    %v3917 = vadd.f32 0.0, %v3916
    %v3918 = vpop.f32.mrb[0].mxu0
    %3919 = vmatprep.mubr.f32.mxu0 0.0
    %3920 = vmatmul.mubr.f32.gmra.mrb[0].mxu0 %v3370
    %v3921 = vpop.f32.mrb[0].mxu0
    %v3922 = vadd.f32 0.0, %v3921
    %v3923 = vpop.f32.mrb[0].mxu0
    %3924 = vmatprep.mubr.f32.mxu0 0.0
    %3925 = vmatmul.mubr.f32.gmra.mrb[0].mxu0 %v3373
    %v3926 = vpop.f32.mrb[0].mxu0
    %v3927 = vadd.f32 0.0, %v3926
    %v3928 = vpop.f32.mrb[0].mxu0
    %3929 = vmatprep.mubr.f32.mxu0 0.0
    %3930 = vmatmul.mubr.f32.gmra.mrb[0].mxu0 %v3376
    %v3931 = vpop.f32.mrb[0].mxu0
    %v3932 = vadd.f32 0.0, %v3931
    %v3933 = vpop.f32.mrb[0].mxu0
    %3934 = vmatprep.mubr.f32.mxu0 0.0
    %3935 = vmatmul.mubr.f32.gmra.mrb[0].mxu0 %v3379
    %v3936 = vpop.f32.mrb[0].mxu0
    %v3937 = vadd.f32 0.0, %v3936
    %v3938 = vpop.f32.mrb[0].mxu0
    %3939 = vmatprep.mubr.f32.mxu0 0.0
    %3940 = vmatmul.mubr.f32.gmra.mrb[0].mxu0 %v3382
    %v3941 = vpop.f32.mrb[0].mxu0
    %v3942 = vadd.f32 0.0, %v3941
    %v3943 = vpop.f32.mrb[0].mxu0
    %3944 = vmatprep.mubr.f32.mxu0 0.0
    %3945 = vmatmul.mubr.f32.gmra.mrb[0].mxu0 %v3385
    %v3946 = vpop.f32.mrb[0].mxu0
    %v3947 = vadd.f32 0.0, %v3946
    %v3948 = vpop.f32.mrb[0].mxu0
    %3949 = vmatprep.mubr.f32.mxu0 0.0
    %3950 = vmatmul.mubr.f32.gmra.mrb[0].mxu0 %v3388
    %v3951 = vpop.f32.mrb[0].mxu0
    %v3952 = vadd.f32 0.0, %v3951
    %v3953 = vpop.f32.mrb[0].mxu0
    %3954 = vmatprep.mubr.f32.mxu0 0.0
    %3955 = vmatmul.mubr.f32.gmra.mrb[0].mxu0 %v3391
    %v3956 = vpop.f32.mrb[0].mxu0
    %v3957 = vadd.f32 0.0, %v3956
    %v3958 = vpop.f32.mrb[0].mxu0
    %3959 = vmatprep.mubr.f32.mxu0 0.0
    %3960 = vmatmul.mubr.f32.gmra.mrb[0].mxu0 %v3394
    %v3961 = vpop.f32.mrb[0].mxu0
    %v3962 = vadd.f32 0.0, %v3961
    %v3963 = vpop.f32.mrb[0].mxu0
    %3964 = vmatprep.mubr.f32.mxu0 0.0
    %3965 = vmatmul.mubr.f32.gmra.mrb[0].mxu0 %v3397
    %v3966 = vpop.f32.mrb[0].mxu0
    %v3967 = vadd.f32 0.0, %v3966
    %v3968 = vpop.f32.mrb[0].mxu0
    %3969 = vmatprep.mubr.f32.mxu0 0.0
    %3970 = vmatmul.mubr.f32.gmra.mrb[0].mxu0 %v3400
    %v3971 = vpop.f32.mrb[0].mxu0
    %v3972 = vadd.f32 0.0, %v3971
    %v3973 = vpop.f32.mrb[0].mxu0
    %3974 = vmatprep.mubr.f32.mxu0 0.0
    %3975 = vmatmul.mubr.f32.gmra.mrb[0].mxu0 %v3403
    %v3976 = vpop.f32.mrb[0].mxu0
    %v3977 = vadd.f32 0.0, %v3976
    %v3978 = vpop.f32.mrb[0].mxu0
    %3979 = vmatprep.mubr.f32.mxu0 0.0
    %3980 = vmatmul.mubr.f32.gmra.mrb[0].mxu0 %v3406
    %v3981 = vpop.f32.mrb[0].mxu0
    %v3982 = vadd.f32 0.0, %v3981
    %v3983 = vpop.f32.mrb[0].mxu0
    %3984 = vmatprep.mubr.f32.mxu0 0.0
    %3985 = vmatmul.mubr.f32.gmra.mrb[0].mxu0 %v3409
    %v3986 = vpop.f32.mrb[0].mxu0
    %v3987 = vadd.f32 0.0, %v3986
    %v3988 = vpop.f32.mrb[0].mxu0
    %3989 = vmatprep.mubr.f32.mxu0 0.0
    %3990 = vmatmul.mubr.f32.gmra.mrb[0].mxu0 %v3412
    %v3991 = vpop.f32.mrb[0].mxu0
    %v3992 = vadd.f32 0.0, %v3991
    %v3993 = vpop.f32.mrb[0].mxu0
    %3994 = vmatprep.mubr.f32.mxu0 0.0
    %3995 = vmatmul.mubr.f32.gmra.mrb[0].mxu0 %v3415
    %v3996 = vpop.f32.mrb[0].mxu0
    %v3997 = vadd.f32 0.0, %v3996
    %v3998 = vpop.f32.mrb[0].mxu0
    %3999 = vmatprep.mubr.f32.mxu0 0.0
    %4000 = vmatmul.mubr.f32.gmra.mrb[0].mxu0 %v3418
    %v4001 = vpop.f32.mrb[0].mxu0
    %v4002 = vadd.f32 0.0, %v4001
    %v4003 = vpop.f32.mrb[0].mxu0
    %4004 = vmatprep.mubr.f32.mxu0 0.0
    %4005 = vmatmul.mubr.f32.gmra.mrb[0].mxu0 %v3421
    %v4006 = vpop.f32.mrb[0].mxu0
    %v4007 = vadd.f32 0.0, %v4006
    %v4008 = vpop.f32.mrb[0].mxu0
    %4009 = vmatprep.mubr.f32.mxu0 0.0
    %4010 = vmatmul.mubr.f32.gmra.mrb[0].mxu0 %v3424
    %v4011 = vpop.f32.mrb[0].mxu0
    %v4012 = vadd.f32 0.0, %v4011
    %v4013 = vpop.f32.mrb[0].mxu0
    %4014 = vmatprep.mubr.f32.mxu0 0.0
    %4015 = vmatmul.mubr.f32.gmra.mrb[0].mxu0 %v3427
    %v4016 = vpop.f32.mrb[0].mxu0
    %v4017 = vadd.f32 0.0, %v4016
    %v4018 = vpop.f32.mrb[0].mxu0
    %4019 = vmatprep.mubr.f32.mxu0 0.0
    %4020 = vmatmul.mubr.f32.gmra.mrb[0].mxu0 %v3430
    %v4021 = vpop.f32.mrb[0].mxu0
    %v4022 = vadd.f32 0.0, %v4021
    %v4023 = vpop.f32.mrb[0].mxu0
    %4024 = vmatprep.mubr.f32.mxu0 0.0
    %4025 = vmatmul.mubr.f32.gmra.mrb[0].mxu0 %v3433
    %v4026 = vpop.f32.mrb[0].mxu0
    %v4027 = vadd.f32 0.0, %v4026
    %v4028 = vpop.f32.mrb[0].mxu0
    %4029 = vmatprep.mubr.f32.mxu0 0.0
    %4030 = vmatmul.mubr.f32.gmra.mrb[0].mxu0 %v3436
    %v4031 = vpop.f32.mrb[0].mxu0
    %v4032 = vadd.f32 0.0, %v4031
    %v4033 = vpop.f32.mrb[0].mxu0
    %4034 = vmatprep.mubr.f32.mxu0 0.0
    %4035 = vmatmul.mubr.f32.gmra.mrb[0].mxu0 %v3439
    %v4036 = vpop.f32.mrb[0].mxu0
    %v4037 = vadd.f32 0.0, %v4036
    %v4038 = vpop.f32.mrb[0].mxu0
    %4039 = vmatprep.mubr.f32.mxu0 0.0
    %4040 = vmatmul.mubr.f32.gmra.mrb[0].mxu0 %v3442
    %v4041 = vpop.f32.mrb[0].mxu0
    %v4042 = vadd.f32 0.0, %v4041
    %v4043 = vpop.f32.mrb[0].mxu0
    %4044 = vmatprep.mubr.f32.mxu0 0.0
    %4045 = vmatmul.mubr.f32.gmra.mrb[0].mxu0 %v3445
    %v4046 = vpop.f32.mrb[0].mxu0
    %v4047 = vadd.f32 0.0, %v4046
    %v4048 = vpop.f32.mrb[0].mxu0
    %4049 = vmatprep.mubr.f32.mxu0 0.0
    %4050 = vmatmul.mubr.f32.gmra.mrb[0].mxu0 %v3448
    %v4051 = vpop.f32.mrb[0].mxu0
    %v4052 = vadd.f32 0.0, %v4051
    %v4053 = vpop.f32.mrb[0].mxu0
    %4054 = vmatprep.mubr.f32.mxu0 0.0
    %4055 = vmatmul.mubr.f32.gmra.mrb[0].mxu0 %v3451
    %v4056 = vpop.f32.mrb[0].mxu0
    %v4057 = vadd.f32 0.0, %v4056
    %v4058 = vpop.f32.mrb[0].mxu0
    %4059 = vmatprep.mubr.f32.mxu0 0.0
    %4060 = vmatmul.mubr.f32.gmra.mrb[0].mxu0 %v3454
    %v4061 = vpop.f32.mrb[0].mxu0
    %v4062 = vadd.f32 0.0, %v4061
    %v4063 = vpop.f32.mrb[0].mxu0
    %4064 = vmatprep.mubr.f32.mxu0 0.0
    %4065 = vmatmul.mubr.f32.gmra.mrb[0].mxu0 %v3457
    %v4066 = vpop.f32.mrb[0].mxu0
    %v4067 = vadd.f32 0.0, %v4066
    %v4068 = vpop.f32.mrb[0].mxu0
    %4069 = vmatprep.mubr.f32.mxu0 0.0
    %4070 = vmatmul.mubr.f32.gmra.mrb[0].mxu0 %v3460
    %v4071 = vpop.f32.mrb[0].mxu0
    %v4072 = vadd.f32 0.0, %v4071
    %v4073 = vpop.f32.mrb[0].mxu0
    %4074 = vmatprep.mubr.f32.mxu0 0.0
    %4075 = vmatmul.mubr.f32.gmra.mrb[0].mxu0 %v3463
    %v4076 = vpop.f32.mrb[0].mxu0
    %v4077 = vadd.f32 0.0, %v4076
    %v4078 = vpop.f32.mrb[0].mxu0
    %4079 = vmatprep.mubr.f32.mxu0 0.0
    %4080 = vmatmul.mubr.f32.gmra.mrb[0].mxu0 %v3466
    %v4081 = vpop.f32.mrb[0].mxu0
    %v4082 = vadd.f32 0.0, %v4081
    %v4083 = vpop.f32.mrb[0].mxu0
    %4084 = vmatprep.mubr.f32.mxu0 0.0
    %4085 = vmatmul.mubr.f32.gmra.mrb[0].mxu0 %v3469
    %v4086 = vpop.f32.mrb[0].mxu0
    %v4087 = vadd.f32 0.0, %v4086
    %v4088 = vpop.f32.mrb[0].mxu0
    %4089 = vmatprep.mubr.f32.mxu0 0.0
    %4090 = vmatmul.mubr.f32.gmra.mrb[0].mxu0 %v3472
    %v4091 = vpop.f32.mrb[0].mxu0
    %v4092 = vadd.f32 0.0, %v4091
    %v4093 = vpop.f32.mrb[0].mxu0
    %4094 = vmatprep.mubr.f32.mxu0 0.0
    %4095 = vmatmul.mubr.f32.gmra.mrb[0].mxu0 %v3475
    %v4096 = vpop.f32.mrb[0].mxu0
    %v4097 = vadd.f32 0.0, %v4096
    %v4098 = vpop.f32.mrb[0].mxu0
    %4099 = vmatprep.mubr.f32.mxu0 0.0
    %4100 = vmatmul.mubr.f32.gmra.mrb[0].mxu0 %v3478
    %v4101 = vpop.f32.mrb[0].mxu0
    %v4102 = vadd.f32 0.0, %v4101
    %v4103 = vpop.f32.mrb[0].mxu0
    %4104 = vmatprep.mubr.f32.mxu0 0.0
    %4105 = vmatmul.mubr.f32.gmra.mrb[0].mxu0 %v3481
    %v4106 = vpop.f32.mrb[0].mxu0
    %v4107 = vadd.f32 0.0, %v4106
    %v4108 = vpop.f32.mrb[0].mxu0
    %4109 = vmatprep.mubr.f32.mxu0 0.0
    %4110 = vmatmul.mubr.f32.gmra.mrb[0].mxu0 %v3484
    %v4111 = vpop.f32.mrb[0].mxu0
    %v4112 = vadd.f32 0.0, %v4111
    %v4113 = vpop.f32.mrb[0].mxu0
    %4114 = vmatprep.mubr.f32.mxu0 0.0
    %4115 = vmatmul.mubr.f32.gmra.mrb[0].mxu0 %v3487
    %v4116 = vpop.f32.mrb[0].mxu0
    %v4117 = vadd.f32 0.0, %v4116
    %v4118 = vpop.f32.mrb[0].mxu0
    %4119 = vmatprep.mubr.f32.mxu0 0.0
    %4120 = vmatmul.mubr.f32.gmra.mrb[0].mxu0 %v3490
    %v4121 = vpop.f32.mrb[0].mxu0
    %v4122 = vadd.f32 0.0, %v4121
    %v4123 = vpop.f32.mrb[0].mxu0
    %4124 = vmatprep.mubr.f32.mxu0 0.0
    %4125 = vmatmul.mubr.f32.gmra.mrb[0].mxu0 %v3493
    %v4126 = vpop.f32.mrb[0].mxu0
    %v4127 = vadd.f32 0.0, %v4126
    %v4128 = vpop.f32.mrb[0].mxu0
    %4129 = vmatprep.mubr.f32.mxu0 0.0
    %4130 = vmatmul.mubr.f32.gmra.mrb[0].mxu0 %v3496
    %v4131 = vpop.f32.mrb[0].mxu0
    %v4132 = vadd.f32 0.0, %v4131
    %v4133 = vpop.f32.mrb[0].mxu0
    %4134 = vmatprep.mubr.f32.mxu0 0.0
    %4135 = vmatmul.mubr.f32.gmra.mrb[0].mxu0 %v3499
    %v4136 = vpop.f32.mrb[0].mxu0
    %v4137 = vadd.f32 0.0, %v4136
    %v4138 = vpop.f32.mrb[0].mxu0
    %4139 = vmatprep.mubr.f32.mxu0 0.0
    %4140 = vmatmul.mubr.f32.gmra.mrb[0].mxu0 %v3502
    %v4141 = vpop.f32.mrb[0].mxu0
    %v4142 = vadd.f32 0.0, %v4141
    %v4143 = vpop.f32.mrb[0].mxu0
    %4144 = vmatprep.mubr.f32.mxu0 0.0
    %4145 = vmatmul.mubr.f32.gmra.mrb[0].mxu0 %v3505
    %v4146 = vpop.f32.mrb[0].mxu0
    %v4147 = vadd.f32 0.0, %v4146
    %v4148 = vpop.f32.mrb[0].mxu0
    %4149 = vmatprep.mubr.f32.mxu0 0.0
    %4150 = vmatmul.mubr.f32.gmra.mrb[0].mxu0 %v3508
    %v4151 = vpop.f32.mrb[0].mxu0
    %v4152 = vadd.f32 0.0, %v4151
    %v4153 = vpop.f32.mrb[0].mxu0
    %4154 = vmatprep.mubr.f32.mxu0 0.0
    %4155 = vmatmul.mubr.f32.gmra.mrb[0].mxu0 %v3511
    %v4156 = vpop.f32.mrb[0].mxu0
    %v4157 = vadd.f32 0.0, %v4156
    %v4158 = vpop.f32.mrb[0].mxu0
    %4159 = vmatprep.mubr.f32.mxu0 0.0
    %4160 = vmatmul.mubr.f32.gmra.mrb[0].mxu0 %v3514
    %v4161 = vpop.f32.mrb[0].mxu0
    %v4162 = vadd.f32 0.0, %v4161
    %v4163 = vpop.f32.mrb[0].mxu0
    %4164 = vmatprep.mubr.f32.mxu0 0.0
    %4165 = vmatmul.mubr.f32.gmra.mrb[0].mxu0 %v3517
    %v4166 = vpop.f32.mrb[0].mxu0
    %v4167 = vadd.f32 0.0, %v4166
    %v4168 = vpop.f32.mrb[0].mxu0
    %4169 = vmatprep.mubr.f32.mxu0 0.0
    %4170 = vmatmul.mubr.f32.gmra.mrb[0].mxu0 %v3520
    %v4171 = vpop.f32.mrb[0].mxu0
    %v4172 = vadd.f32 0.0, %v4171
    %v4173 = vpop.f32.mrb[0].mxu0
    %4174 = vmatprep.mubr.f32.mxu0 0.0
    %4175 = vmatmul.mubr.f32.gmra.mrb[0].mxu0 %v3523
    %v4176 = vpop.f32.mrb[0].mxu0
    %v4177 = vadd.f32 0.0, %v4176
    %v4178 = vpop.f32.mrb[0].mxu0
    %4179 = vmatprep.mubr.f32.mxu0 0.0
    %4180 = vmatmul.mubr.f32.gmra.mrb[0].mxu0 %v3526
    %v4181 = vpop.f32.mrb[0].mxu0
    %v4182 = vadd.f32 0.0, %v4181
    %v4183 = vpop.f32.mrb[0].mxu0
    %4184 = vmatprep.mubr.f32.mxu0 0.0
    %4185 = vmatmul.mubr.f32.gmra.mrb[0].mxu0 %v3529
    %v4186 = vpop.f32.mrb[0].mxu0
    %v4187 = vadd.f32 0.0, %v4186
    %v4188 = vpop.f32.mrb[0].mxu0
    %4189 = vmatprep.mubr.f32.mxu0 0.0
    %4190 = vmatmul.mubr.f32.gmra.mrb[0].mxu0 %v3532
    %v4191 = vpop.f32.mrb[0].mxu0
    %v4192 = vadd.f32 0.0, %v4191
    %v4193 = vpop.f32.mrb[0].mxu0
    %4194 = vmatprep.mubr.f32.mxu0 0.0
    %4195 = vmatmul.mubr.f32.gmra.mrb[0].mxu0 %v3535
    %v4196 = vpop.f32.mrb[0].mxu0
    %v4197 = vadd.f32 0.0, %v4196
    %v4198 = vpop.f32.mrb[0].mxu0
    %4199 = vmatprep.mubr.f32.mxu0 0.0
    %4200 = vmatmul.mubr.f32.gmra.mrb[0].mxu0 %v3538
    %v4201 = vpop.f32.mrb[0].mxu0
    %v4202 = vadd.f32 0.0, %v4201
    %v4203 = vpop.f32.mrb[0].mxu0
    %4204 = vmatprep.mubr.f32.mxu0 0.0
    %4205 = vmatmul.mubr.f32.gmra.mrb[0].mxu0 %v3541
    %v4206 = vpop.f32.mrb[0].mxu0
    %v4207 = vadd.f32 0.0, %v4206
    %v4208 = vpop.f32.mrb[0].mxu0
    %4209 = vmatprep.mubr.f32.mxu0 0.0
    %4210 = vmatmul.mubr.f32.gmra.mrb[0].mxu0 %v3544
    %v4211 = vpop.f32.mrb[0].mxu0
    %v4212 = vadd.f32 0.0, %v4211
    %v4213 = vpop.f32.mrb[0].mxu0
    %4214 = vmatprep.mubr.f32.mxu0 0.0
    %4215 = vmatmul.mubr.f32.gmra.mrb[0].mxu0 %v3547
    %v4216 = vpop.f32.mrb[0].mxu0
    %v4217 = vadd.f32 0.0, %v4216
    %v4218 = vpop.f32.mrb[0].mxu0
    %4219 = vmatprep.mubr.f32.mxu0 0.0
    %4220 = vmatmul.mubr.f32.gmra.mrb[0].mxu0 %v3550
    %v4221 = vpop.f32.mrb[0].mxu0
    %v4222 = vadd.f32 0.0, %v4221
    %v4223 = vpop.f32.mrb[0].mxu0
    %4224 = vmatprep.mubr.f32.mxu0 0.0
    %4225 = vmatmul.mubr.f32.gmra.mrb[0].mxu0 %v3553
    %v4226 = vpop.f32.mrb[0].mxu0
    %v4227 = vadd.f32 0.0, %v4226
    %v4228 = vpop.f32.mrb[0].mxu0
    %4229 = vmatprep.mubr.f32.mxu0 0.0
    %4230 = vmatmul.mubr.f32.gmra.mrb[0].mxu0 %v3556
    %v4231 = vpop.f32.mrb[0].mxu0
    %v4232 = vadd.f32 0.0, %v4231
    %v4233 = vpop.f32.mrb[0].mxu0
    %4234 = vmatprep.mubr.f32.mxu0 0.0
    %4235 = vmatmul.mubr.f32.gmra.mrb[0].mxu0 %v3559
    %v4236 = vpop.f32.mrb[0].mxu0
    %v4237 = vadd.f32 0.0, %v4236
    %v4238 = vpop.f32.mrb[0].mxu0
    %4239 = vmatprep.mubr.f32.mxu0 0.0
    %4240 = vmatmul.mubr.f32.gmra.mrb[0].mxu0 %v3562
    %v4241 = vpop.f32.mrb[0].mxu0
    %v4242 = vadd.f32 0.0, %v4241
    %v4243 = vpop.f32.mrb[0].mxu0
    %4244 = vmatprep.mubr.f32.mxu0 0.0
    %4245 = vmatmul.mubr.f32.gmra.mrb[0].mxu0 %v3565
    %v4246 = vpop.f32.mrb[0].mxu0
    %v4247 = vadd.f32 0.0, %v4246
    %v4248 = vpop.f32.mrb[0].mxu0
    %4249 = vmatprep.mubr.f32.mxu0 0.0
    %4250 = vmatmul.mubr.f32.gmra.mrb[0].mxu0 %v3568
    %v4251 = vpop.f32.mrb[0].mxu0
    %v4252 = vadd.f32 0.0, %v4251
    %v4253 = vpop.f32.mrb[0].mxu0
    %4254 = vmatprep.mubr.f32.mxu0 0.0
    %4255 = vmatmul.mubr.f32.gmra.mrb[0].mxu0 %v3571
    %v4256 = vpop.f32.mrb[0].mxu0
    %v4257 = vadd.f32 0.0, %v4256
    %v4258 = vpop.f32.mrb[0].mxu0
    %4259 = vmatprep.mubr.f32.mxu0 0.0
    %4260 = vmatmul.mubr.f32.gmra.mrb[0].mxu0 %v3574
    %v4261 = vpop.f32.mrb[0].mxu0
    %v4262 = vadd.f32 0.0, %v4261
    %v4263 = vpop.f32.mrb[0].mxu0
    %4264 = vmatprep.mubr.f32.mxu0 0.0
    %4265 = vmatmul.mubr.f32.gmra.mrb[0].mxu0 %v3577
    %v4266 = vpop.f32.mrb[0].mxu0
    %v4267 = vadd.f32 0.0, %v4266
    %v4268 = vpop.f32.mrb[0].mxu0
    %4269 = vmatprep.mubr.f32.mxu0 0.0
    %4270 = vmatmul.mubr.f32.gmra.mrb[0].mxu0 %v3580
    %v4271 = vpop.f32.mrb[0].mxu0
    %v4272 = vadd.f32 0.0, %v4271
    %v4273 = vpop.f32.mrb[0].mxu0
    %4274 = vmatprep.mubr.f32.mxu0 0.0
    %4275 = vmatmul.mubr.f32.gmra.mrb[0].mxu0 %v3583
    %v4276 = vpop.f32.mrb[0].mxu0
    %v4277 = vadd.f32 0.0, %v4276
    %v4278 = vpop.f32.mrb[0].mxu0
    %4279 = vmatprep.mubr.f32.mxu0 0.0
    %4280 = vmatmul.mubr.f32.gmra.mrb[0].mxu0 %v3586
    %v4281 = vpop.f32.mrb[0].mxu0
    %v4282 = vadd.f32 0.0, %v4281
    %v4283 = vpop.f32.mrb[0].mxu0
    %4284 = vmatprep.mubr.f32.mxu0 0.0
    %4285 = vmatmul.mubr.f32.gmra.mrb[0].mxu0 %v3589
    %v4286 = vpop.f32.mrb[0].mxu0
    %v4287 = vadd.f32 0.0, %v4286
    %v4288 = vpop.f32.mrb[0].mxu0
    %4289 = vmatprep.mubr.f32.mxu0 0.0
    %4290 = vmatmul.mubr.f32.gmra.mrb[0].mxu0 %v3592
    %v4291 = vpop.f32.mrb[0].mxu0
    %v4292 = vadd.f32 0.0, %v4291
    %v4293 = vpop.f32.mrb[0].mxu0
    %4294 = vmatprep.mubr.f32.mxu0 0.0
    %4295 = vmatmul.mubr.f32.gmra.mrb[0].mxu0 %v3595
    %v4296 = vpop.f32.mrb[0].mxu0
    %v4297 = vadd.f32 0.0, %v4296
    %v4298 = vpop.f32.mrb[0].mxu0
    %4299 = vmatprep.mubr.f32.mxu0 0.0
    %4300 = vmatmul.mubr.f32.gmra.mrb[0].mxu0 %v3598
    %v4301 = vpop.f32.mrb[0].mxu0
    %v4302 = vadd.f32 0.0, %v4301
    %v4303 = vpop.f32.mrb[0].mxu0
    %4304 = vdwg.mxu0
    %v4305 = vrot.slane %v2958, 4
    %v4306 = vadd.f32 %v2958, %v4305
    %v4307 = vrot.slane %v4306, 2
    %v4308 = vadd.f32 %v4306, %v4307
    %v4309 = vrot.slane %v4308, 1
    %v4310 = vadd.f32 %v4308, %v4309
    %4311 = vst [vmem:[#allocation10] sm:$0xff] %v3667
    %4312 = vst [vmem:[#allocation10 + $0x8] sm:$0xff] %v3672
    %4313 = vst [vmem:[#allocation10 + $0x10] sm:$0xff] %v3677
    %4314 = vst [vmem:[#allocation10 + $0x18] sm:$0xff] %v3682
    %4315 = vst [vmem:[#allocation10 + $0x20] sm:$0xff] %v3687
    %4316 = vst [vmem:[#allocation10 + $0x28] sm:$0xff] %v3692
    %4317 = vst [vmem:[#allocation10 + $0x30] sm:$0xff] %v3697
    %4318 = vst [vmem:[#allocation10 + $0x38] sm:$0xff] %v3702
    %4319 = vst [vmem:[#allocation10 + $0x40] sm:$0xff] %v3707
    %4320 = vst [vmem:[#allocation10 + $0x48] sm:$0xff] %v3712
    %4321 = vst [vmem:[#allocation10 + $0x50] sm:$0xff] %v3717
    %4322 = vst [vmem:[#allocation10 + $0x58] sm:$0xff] %v3722
    %4323 = vst [vmem:[#allocation10 + $0x60] sm:$0xff] %v3727
    %4324 = vst [vmem:[#allocation10 + $0x68] sm:$0xff] %v3732
    %4325 = vst [vmem:[#allocation10 + $0x70] sm:$0xff] %v3737
    %4326 = vst [vmem:[#allocation10 + $0x78] sm:$0xff] %v3742
    %4327 = vst [vmem:[#allocation10 + $0x80] sm:$0xff] %v3747
    %4328 = vst [vmem:[#allocation10 + $0x88] sm:$0xff] %v3752
    %4329 = vst [vmem:[#allocation10 + $0x90] sm:$0xff] %v3757
    %4330 = vst [vmem:[#allocation10 + $0x98] sm:$0xff] %v3762
    %4331 = vst [vmem:[#allocation10 + $0xa0] sm:$0xff] %v3767
    %4332 = vst [vmem:[#allocation10 + $0xa8] sm:$0xff] %v3772
    %4333 = vst [vmem:[#allocation10 + $0xb0] sm:$0xff] %v3777
    %4334 = vst [vmem:[#allocation10 + $0xb8] sm:$0xff] %v3782
    %4335 = vst [vmem:[#allocation10 + $0xc0] sm:$0xff] %v3787
    %4336 = vst [vmem:[#allocation10 + $0xc8] sm:$0xff] %v3792
    %4337 = vst [vmem:[#allocation10 + $0xd0] sm:$0xff] %v3797
    %4338 = vst [vmem:[#allocation10 + $0xd8] sm:$0xff] %v3802
    %4339 = vst [vmem:[#allocation10 + $0xe0] sm:$0xff] %v3807
    %4340 = vst [vmem:[#allocation10 + $0xe8] sm:$0xff] %v3812
    %4341 = vst [vmem:[#allocation10 + $0xf0] sm:$0xff] %v3817
    %4342 = vst [vmem:[#allocation10 + $0xf8] sm:$0xff] %v3822
    %4343 = vst [vmem:[#allocation10 + $0x100] sm:$0xff] %v3827
    %4344 = vst [vmem:[#allocation10 + $0x108] sm:$0xff] %v3832
    %4345 = vst [vmem:[#allocation10 + $0x110] sm:$0xff] %v3837
    %4346 = vst [vmem:[#allocation10 + $0x118] sm:$0xff] %v3842
    %4347 = vst [vmem:[#allocation10 + $0x120] sm:$0xff] %v3847
    %4348 = vst [vmem:[#allocation10 + $0x128] sm:$0xff] %v3852
    %4349 = vst [vmem:[#allocation10 + $0x130] sm:$0xff] %v3857
    %4350 = vst [vmem:[#allocation10 + $0x138] sm:$0xff] %v3862
    %4351 = vst [vmem:[#allocation10 + $0x140] sm:$0xff] %v3867
    %4352 = vst [vmem:[#allocation10 + $0x148] sm:$0xff] %v3872
    %4353 = vst [vmem:[#allocation10 + $0x150] sm:$0xff] %v3877
    %4354 = vst [vmem:[#allocation10 + $0x158] sm:$0xff] %v3882
    %4355 = vst [vmem:[#allocation10 + $0x160] sm:$0xff] %v3887
    %4356 = vst [vmem:[#allocation10 + $0x168] sm:$0xff] %v3892
    %4357 = vst [vmem:[#allocation10 + $0x170] sm:$0xff] %v3897
    %4358 = vst [vmem:[#allocation10 + $0x178] sm:$0xff] %v3902
    %4359 = vst [vmem:[#allocation10 + $0x180] sm:$0xff] %v3907
    %4360 = vst [vmem:[#allocation10 + $0x188] sm:$0xff] %v3912
    %4361 = vst [vmem:[#allocation10 + $0x190] sm:$0xff] %v3917
    %4362 = vst [vmem:[#allocation10 + $0x198] sm:$0xff] %v3922
    %4363 = vst [vmem:[#allocation10 + $0x1a0] sm:$0xff] %v3927
    %4364 = vst [vmem:[#allocation10 + $0x1a8] sm:$0xff] %v3932
    %4365 = vst [vmem:[#allocation10 + $0x1b0] sm:$0xff] %v3937
    %4366 = vst [vmem:[#allocation10 + $0x1b8] sm:$0xff] %v3942
    %4367 = vst [vmem:[#allocation10 + $0x1c0] sm:$0xff] %v3947
    %4368 = vst [vmem:[#allocation10 + $0x1c8] sm:$0xff] %v3952
    %4369 = vst [vmem:[#allocation10 + $0x1d0] sm:$0xff] %v3957
    %4370 = vst [vmem:[#allocation10 + $0x1d8] sm:$0xff] %v3962
    %4371 = vst [vmem:[#allocation10 + $0x1e0] sm:$0xff] %v3967
    %4372 = vst [vmem:[#allocation10 + $0x1e8] sm:$0xff] %v3972
    %4373 = vst [vmem:[#allocation10 + $0x1f0] sm:$0xff] %v3977
    %4374 = vst [vmem:[#allocation10 + $0x1f8] sm:$0xff] %v3982
    %4375 = vst [vmem:[#allocation10 + $0x200] sm:$0xff] %v3987
    %4376 = vst [vmem:[#allocation10 + $0x208] sm:$0xff] %v3992
    %4377 = vst [vmem:[#allocation10 + $0x210] sm:$0xff] %v3997
    %4378 = vst [vmem:[#allocation10 + $0x218] sm:$0xff] %v4002
    %4379 = vst [vmem:[#allocation10 + $0x220] sm:$0xff] %v4007
    %4380 = vst [vmem:[#allocation10 + $0x228] sm:$0xff] %v4012
    %4381 = vst [vmem:[#allocation10 + $0x230] sm:$0xff] %v4017
    %4382 = vst [vmem:[#allocation10 + $0x238] sm:$0xff] %v4022
    %4383 = vst [vmem:[#allocation10 + $0x240] sm:$0xff] %v4027
    %4384 = vst [vmem:[#allocation10 + $0x248] sm:$0xff] %v4032
    %4385 = vst [vmem:[#allocation10 + $0x250] sm:$0xff] %v4037
    %4386 = vst [vmem:[#allocation10 + $0x258] sm:$0xff] %v4042
    %4387 = vst [vmem:[#allocation10 + $0x260] sm:$0xff] %v4047
    %4388 = vst [vmem:[#allocation10 + $0x268] sm:$0xff] %v4052
    %4389 = vst [vmem:[#allocation10 + $0x270] sm:$0xff] %v4057
    %4390 = vst [vmem:[#allocation10 + $0x278] sm:$0xff] %v4062
    %4391 = vst [vmem:[#allocation10 + $0x280] sm:$0xff] %v4067
    %4392 = vst [vmem:[#allocation10 + $0x288] sm:$0xff] %v4072
    %4393 = vst [vmem:[#allocation10 + $0x290] sm:$0xff] %v4077
    %4394 = vst [vmem:[#allocation10 + $0x298] sm:$0xff] %v4082
    %4395 = vst [vmem:[#allocation10 + $0x2a0] sm:$0xff] %v4087
    %4396 = vst [vmem:[#allocation10 + $0x2a8] sm:$0xff] %v4092
    %4397 = vst [vmem:[#allocation10 + $0x2b0] sm:$0xff] %v4097
    %4398 = vst [vmem:[#allocation10 + $0x2b8] sm:$0xff] %v4102
    %4399 = vst [vmem:[#allocation10 + $0x2c0] sm:$0xff] %v4107
    %4400 = vst [vmem:[#allocation10 + $0x2c8] sm:$0xff] %v4112
    %4401 = vst [vmem:[#allocation10 + $0x2d0] sm:$0xff] %v4117
    %4402 = vst [vmem:[#allocation10 + $0x2d8] sm:$0xff] %v4122
    %4403 = vst [vmem:[#allocation10 + $0x2e0] sm:$0xff] %v4127
    %4404 = vst [vmem:[#allocation10 + $0x2e8] sm:$0xff] %v4132
    %4405 = vst [vmem:[#allocation10 + $0x2f0] sm:$0xff] %v4137
    %4406 = vst [vmem:[#allocation10 + $0x2f8] sm:$0xff] %v4142
    %4407 = vst [vmem:[#allocation10 + $0x300] sm:$0xff] %v4147
    %4408 = vst [vmem:[#allocation10 + $0x308] sm:$0xff] %v4152
    %4409 = vst [vmem:[#allocation10 + $0x310] sm:$0xff] %v4157
    %4410 = vst [vmem:[#allocation10 + $0x318] sm:$0xff] %v4162
    %4411 = vst [vmem:[#allocation10 + $0x320] sm:$0xff] %v4167
    %4412 = vst [vmem:[#allocation10 + $0x328] sm:$0xff] %v4172
    %4413 = vst [vmem:[#allocation10 + $0x330] sm:$0xff] %v4177
    %4414 = vst [vmem:[#allocation10 + $0x338] sm:$0xff] %v4182
    %4415 = vst [vmem:[#allocation10 + $0x340] sm:$0xff] %v4187
    %4416 = vst [vmem:[#allocation10 + $0x348] sm:$0xff] %v4192
    %4417 = vst [vmem:[#allocation10 + $0x350] sm:$0xff] %v4197
    %4418 = vst [vmem:[#allocation10 + $0x358] sm:$0xff] %v4202
    %4419 = vst [vmem:[#allocation10 + $0x360] sm:$0xff] %v4207
    %4420 = vst [vmem:[#allocation10 + $0x368] sm:$0xff] %v4212
    %4421 = vst [vmem:[#allocation10 + $0x370] sm:$0xff] %v4217
    %4422 = vst [vmem:[#allocation10 + $0x378] sm:$0xff] %v4222
    %4423 = vst [vmem:[#allocation10 + $0x380] sm:$0xff] %v4227
    %4424 = vst [vmem:[#allocation10 + $0x388] sm:$0xff] %v4232
    %4425 = vst [vmem:[#allocation10 + $0x390] sm:$0xff] %v4237
    %4426 = vst [vmem:[#allocation10 + $0x398] sm:$0xff] %v4242
    %4427 = vst [vmem:[#allocation10 + $0x3a0] sm:$0xff] %v4247
    %4428 = vst [vmem:[#allocation10 + $0x3a8] sm:$0xff] %v4252
    %4429 = vst [vmem:[#allocation10 + $0x3b0] sm:$0xff] %v4257
    %4430 = vst [vmem:[#allocation10 + $0x3b8] sm:$0xff] %v4262
    %4431 = vst [vmem:[#allocation10 + $0x3c0] sm:$0xff] %v4267
    %4432 = vst [vmem:[#allocation10 + $0x3c8] sm:$0xff] %v4272
    %4433 = vst [vmem:[#allocation10 + $0x3d0] sm:$0xff] %v4277
    %4434 = vst [vmem:[#allocation10 + $0x3d8] sm:$0xff] %v4282
    %4435 = vst [vmem:[#allocation10 + $0x3e0] sm:$0xff] %v4287
    %4436 = vst [vmem:[#allocation10 + $0x3e8] sm:$0xff] %v4292
    %4437 = vst [vmem:[#allocation10 + $0x3f0] sm:$0xff] %v4297
    %4438 = vst [vmem:[#allocation10 + $0x3f8] sm:$0xff] %v4302
    %4439 = vst [vmem:[#allocation11] sm:$0x1] %v4310
    // Predicated region
    $region45: #{tpu_custom_call.1} parent=1 // pred_check
      _
    $region46: #{tpu_custom_call.1} parent=1 // pred_check_branch
      %4441 = sbr.rel (0) target = $region48
    $region47: #{tpu_custom_call.1} parent=1 // pred_region
      %s4443 = ssub.s32 16384, 16384
      %4444 = vsyncadd [#allocation6], %s4443
      %s4445 = sshll.u32 [#allocation10], 4
      %s4446 = int_to_ptr.vmem [resolvable:$true] %s4445
      %4451 = dma.vmem_to_hbm [thread:$0]  %s4446, 16384, %s6, [#allocation6], 128, 128, 8
    $region48: #{tpu_custom_call.1} parent=1 // pred_fallthru
      _
    // Predicated region
    $region49: #{tpu_custom_call.1} parent=1 // pred_check
      _
    $region50: #{tpu_custom_call.1} parent=1 // pred_check_branch
      %4453 = sbr.rel (0) target = $region52
    $region51: #{tpu_custom_call.1} parent=1 // pred_region
      %s4455 = ssub.s32 16, 16
      %4456 = vsyncadd [#allocation12], %s4455
      %s4458 = sshll.u32 [#allocation11], 4
      %s4459 = int_to_ptr.vmem [resolvable:$true] %s4458
      %4461 = dma.vmem_to_hbm [thread:$0]  %s4459, 16, %s7, [#allocation12]
    $region52: #{tpu_custom_call.1} parent=1 // pred_fallthru
      _
    // Predicated region
    $region53: #{tpu_custom_call.1} parent=1 // pred_check
      _
    $region54: #{tpu_custom_call.1} parent=1 // pred_check_branch
      %4463 = sbr.rel (0) target = $region56
    $region55: #{tpu_custom_call.1} parent=1 // pred_region
      %4464 = dma.done [#allocation6], 16384
    $region56: #{tpu_custom_call.1} parent=1 // pred_fallthru
      _
    // Predicated region
    $region57: #{tpu_custom_call.1} parent=1 // pred_check
      _
    $region58: #{tpu_custom_call.1} parent=1 // pred_check_branch
      %4466 = sbr.rel (0) target = $region60
    $region59: #{tpu_custom_call.1} parent=1 // pred_region
      %4467 = dma.done [#allocation12], 16
    $region60: #{tpu_custom_call.1} parent=1 // pred_fallthru
      _
    %4468 = vsyncpa [#allocation5], 1
    %4469 = vsyncpa [#allocation8], 1
    %4470 = vsyncpa [#allocation6], 1
    %4471 = vsyncpa [#allocation12], 1

</llo_original>
